<compile_context>
chip_gen: v5e
topology: v5e:2x2
jax: 0.10.0
libtpu: 0.0.40
codegen_flags: <defaults>
</compile_context>

<pallas_src>
import functools

import numpy as np
import jax
import jax.numpy as jnp
from jax.experimental import pallas as pl
from jax.experimental.pallas import tpu as pltpu


# ---------------------------------------------------------------------------
# Fused kernel: 1x1 conv -> ABN -> bilinear upsample -> 3x3 conv -> ABN
# One grid step = one batch element; everything stays in VMEM.
# ---------------------------------------------------------------------------
def _up_hd_fused_kernel(x_ref, w1_ref, shift1_ref, rh_ref, rw_ref,
                        w3_ref, shift3_ref, o_ref, patches_ref, *, slope):
    f32 = jnp.float32
    bf16 = jnp.bfloat16

    cin, m = x_ref.shape                 # x is NCHW-flat per batch: (Cin, Hin*Win)
    cout = w1_ref.shape[0]
    hout, hin = rh_ref.shape
    wout, win = rw_ref.shape

    # ---- 1x1 conv (BN scale folded into weights) + shift + leaky_relu ------
    # channel-major matmul: (Cout, Cin) @ (Cin, Hin*Win) -> (Cout, Hin*Win)
    y1 = jnp.dot(w1_ref[...].astype(bf16), x_ref[...].astype(bf16),
                 preferred_element_type=f32)
    y1 = y1 + shift1_ref[...]                       # (Cout, 1) broadcast over lanes
    y1 = jnp.where(y1 >= 0, y1, slope * y1)

    # -> channel-minor (Hin, Win, C) for the separable upsample (tiny transpose, XLU)
    y1 = y1.T.reshape(hin, win, cout)

    # ---- bilinear upsample, align_corners=True, as two separable contractions
    # (kept in f32; these tensors never touch HBM any more)
    a = jnp.einsum('Hh,hwc->Hwc', rh_ref[...], y1,
                   preferred_element_type=f32)       # (Hout, Win, C)
    u = jnp.einsum('Ww,Hwc->HWc', rw_ref[...], a,
                   preferred_element_type=f32)       # (Hout, Wout, C)

    # ---- 3x3 conv (padding=1, no bias) as ONE K=9*C matmul -----------------
    # Build the 9-tap im2col operand in a VMEM scratch; the untouched zeros of the
    # scratch provide the 1-pixel zero halo (no jnp.pad, no HBM round trip).
    patches_ref[...] = jnp.zeros(patches_ref.shape, f32)
    for dy in range(3):
        for dx in range(3):
            k = dy * 3 + dx
            oy, ox = dy - 1, dx - 1
            dh0, dh1 = max(0, -oy), min(hout, hout - oy)
            dw0, dw1 = max(0, -ox), min(wout, wout - ox)
            sh0, sh1 = dh0 + oy, dh1 + oy
            sw0, sw1 = dw0 + ox, dw1 + ox
            patches_ref[dh0:dh1, dw0:dw1, k * cout:(k + 1) * cout] = (
                u[sh0:sh1, sw0:sw1, :])

    big = patches_ref[...].reshape(hout * wout, 9 * cout)      # leading-dim merge only
    y3 = jnp.dot(big.astype(bf16), w3_ref[...].astype(bf16),
                 preferred_element_type=f32)                   # (H*W, Cout)
    y3 = y3 + shift3_ref[...]
    y3 = jnp.where(y3 >= 0, y3, slope * y3)

    # ---- write NCHW directly; last dim Hout*Wout is lane-dense (>=128) -----
    o_ref[...] = y3.T                                          # (Cout, Hout*Wout)


# ---------------------------------------------------------------------------
# Host-side helpers
# ---------------------------------------------------------------------------
def fold_bn(gamma, beta, mean, var, eps=1e-5):
    scale = gamma / jnp.sqrt(var + eps)
    shift = beta - mean * scale
    return scale, shift


def interp_matrix(out_size, in_size):
    """Bilinear interpolation matrix (align_corners=True), numpy float32."""
    if in_size == 1:
        return np.ones((out_size, 1), np.float32)
    if out_size == 1:
        m = np.zeros((1, in_size), np.float32)
        m[0, 0] = 1.0   # PyTorch align_corners=True with out_size==1 samples src index 0
        return m
    src = np.arange(out_size, dtype=np.float64) * (in_size - 1) / (out_size - 1)
    lo = np.clip(np.floor(src).astype(np.int64), 0, in_size - 2)
    frac = (src - lo).astype(np.float32)
    m = np.zeros((out_size, in_size), np.float32)
    m[np.arange(out_size), lo] = 1.0 - frac
    m[np.arange(out_size), lo + 1] = frac
    return m


# ---------------------------------------------------------------------------
# up_HD forward
# ---------------------------------------------------------------------------
def up_hd_forward(x_nchw, y_nchw, params, *, eps=1e-5, slope=0.01):
    """x: (N, in_ch, Hx, Wx), y: (N, *, h, w) -> (N, out_ch, h, w), float32 NCHW."""
    N, Cin, Hx, Wx = x_nchw.shape
    h, w = int(y_nchw.shape[2]), int(y_nchw.shape[3])
    Cout = params['w1'].shape[0]

    # ---- fold inference-mode ABN into the conv weights (host side, tiny) ----
    s1, t1 = fold_bn(params['g1'], params['b1_bn'], params['m1'], params['v1'], eps)
    w1f = params['w1'].reshape(Cout, Cin) * s1[:, None]              # (Cout, Cin)
    shift1 = (s1 * params['b1'] + t1).reshape(Cout, 1)               # conv bias folded in

    s3, t3 = fold_bn(params['g3'], params['b3_bn'], params['m3'], params['v3'], eps)
    # (Cout, Cin=Cout, 3, 3) -> (3, 3, Cin, Cout) -> (9*Cin, Cout), BN scale folded per out-ch
    w3cat = (jnp.transpose(params['w3'], (2, 3, 1, 0)).reshape(9 * Cout, Cout)
             * s3[None, :])
    shift3 = t3.reshape(1, Cout)

    rh = jnp.asarray(interp_matrix(h, Hx))                           # (h, Hx)
    rw = jnp.asarray(interp_matrix(w, Wx))                           # (w, Wx)

    x_flat = x_nchw.reshape(N, Cin, Hx * Wx)                         # NCHW kept; free reshape
    HW = h * w

    kernel = functools.partial(_up_hd_fused_kernel, slope=slope)
    out = pl.pallas_call(
        kernel,
        out_shape=jax.ShapeDtypeStruct((N, Cout, HW), jnp.float32),
        grid=(N,),
        in_specs=[
            pl.BlockSpec((None, Cin, Hx * Wx), lambda n: (n, 0, 0)),  # x (one batch element)
            pl.BlockSpec((Cout, Cin), lambda n: (0, 0)),              # folded 1x1 weight
            pl.BlockSpec((Cout, 1), lambda n: (0, 0)),                # folded bias + BN shift
            pl.BlockSpec((h, Hx), lambda n: (0, 0)),                  # Rh interpolation matrix
            pl.BlockSpec((w, Wx), lambda n: (0, 0)),                  # Rw interpolation matrix
            pl.BlockSpec((9 * Cout, Cout), lambda n: (0, 0)),         # folded 3x3 weight (9C, C)
            pl.BlockSpec((1, Cout), lambda n: (0, 0)),                # folded BN shift (conv3)
        ],
        out_specs=pl.BlockSpec((None, Cout, HW), lambda n: (n, 0, 0)),
        scratch_shapes=[pltpu.VMEM((h, w, 9 * Cout), jnp.float32)],   # im2col + halo scratch
        compiler_params=pltpu.CompilerParams(
            dimension_semantics=("parallel",),      # batch axis -> both TCs on v7x
            vmem_limit_bytes=32 * 1024 * 1024,
        ),
    )(x_flat, w1f, shift1, rh, rw, w3cat, shift3)

    return out.reshape(N, Cout, h, w)                                 # free reshape (NCHW)


# ---------------------------------------------------------------------------
if __name__ == "__main__":
    key = jax.random.PRNGKey(0)
    in_ch, out_ch = 4, 8
    N, Hx, Wx = 2, 8, 8          # input x spatial size
    h, w = 16, 16                # target size taken from y

    ks = jax.random.split(key, 8)
    params = dict(
        # conv1: nn.Conv2d(in_ch, out_ch, kernel_size=1)  (bias=True)
        w1=0.1 * jax.random.normal(ks[0], (out_ch, in_ch, 1, 1), jnp.float32),
        b1=0.1 * jax.random.normal(ks[1], (out_ch,), jnp.float32),
        g1=1.0 + 0.1 * jax.random.normal(ks[2], (out_ch,), jnp.float32),
        b1_bn=0.1 * jax.random.normal(ks[3], (out_ch,), jnp.float32),
        m1=jnp.zeros((out_ch,), jnp.float32),
        v1=jnp.ones((out_ch,), jnp.float32),
        # conv3: conv3x3(out_ch, out_ch) (bias=False)
        w3=0.1 * jax.random.normal(ks[4], (out_ch, out_ch, 3, 3), jnp.float32),
        g3=1.0 + 0.1 * jax.random.normal(ks[5], (out_ch,), jnp.float32),
        b3_bn=0.1 * jax.random.normal(ks[6], (out_ch,), jnp.float32),
        m3=jnp.zeros((out_ch,), jnp.float32),
        v3=jnp.ones((out_ch,), jnp.float32),
    )

    kx, ky = jax.random.split(ks[7])
    x = jax.random.normal(kx, (N, in_ch, Hx, Wx), jnp.float32)
    y = jax.random.normal(ky, (N, 5, h, w), jnp.float32)   # only its (h, w) is used

    out = up_hd_forward(x, y, params)
    out = jax.block_until_ready(out)

    assert out.shape == (N, out_ch, h, w), out.shape
    assert bool(jnp.all(jnp.isfinite(out)))
    print("KERNEL_OK")
</pallas_src>

<mosaic_0001>
module attributes {stable_mosaic.version = 11 : i64} {
  func.func @_up_hd_fused_kernel(%arg0: i32, %arg1: memref<1x4x64xf32, #tpu.memory_space<vmem>>, %arg2: memref<8x4xf32, #tpu.memory_space<vmem>>, %arg3: memref<8x1xf32, #tpu.memory_space<vmem>>, %arg4: memref<16x8xf32, #tpu.memory_space<vmem>>, %arg5: memref<16x8xf32, #tpu.memory_space<vmem>>, %arg6: memref<72x8xf32, #tpu.memory_space<vmem>>, %arg7: memref<1x8xf32, #tpu.memory_space<vmem>>, %arg8: memref<1x8x256xf32, #tpu.memory_space<vmem>>, %arg9: memref<16x16x72xf32, #tpu.memory_space<vmem>>) attributes {dimension_semantics = [#tpu.dimension_semantics<parallel>], iteration_bounds = array<i64: 2>, scalar_prefetch = 0 : i64, scratch_operands = 1 : i64, tpu.core_type = #tpu.core_type<tc>, window_params = [{transform_indices = @transform_0, window_bounds = array<i64: 1, 4, 64>}, {pipeline_mode = #tpu.pipeline_mode<synchronous>, transform_indices = @transform_1, window_bounds = array<i64: 8, 4>}, {pipeline_mode = #tpu.pipeline_mode<synchronous>, transform_indices = @transform_2, window_bounds = array<i64: 8, 1>}, {pipeline_mode = #tpu.pipeline_mode<synchronous>, transform_indices = @transform_3, window_bounds = array<i64: 16, 8>}, {pipeline_mode = #tpu.pipeline_mode<synchronous>, transform_indices = @transform_4, window_bounds = array<i64: 16, 8>}, {pipeline_mode = #tpu.pipeline_mode<synchronous>, transform_indices = @transform_5, window_bounds = array<i64: 72, 8>}, {pipeline_mode = #tpu.pipeline_mode<synchronous>, transform_indices = @transform_6, window_bounds = array<i64: 1, 8>}, {transform_indices = @transform_7, window_bounds = array<i64: 1, 8, 256>}]} {
    %c0 = arith.constant 0 : index
    %c0_0 = arith.constant 0 : index
    %0 = vector.load %arg2[%c0, %c0_0] : memref<8x4xf32, #tpu.memory_space<vmem>>, vector<8x4xf32>
    %1 = arith.truncf %0 : vector<8x4xf32> to vector<8x4xbf16>
    %c0_1 = arith.constant 0 : index
    %c0_2 = arith.constant 0 : index
    %c0_3 = arith.constant 0 : index
    %2 = vector.load %arg1[%c0_1, %c0_2, %c0_3] : memref<1x4x64xf32, #tpu.memory_space<vmem>>, vector<1x4x64xf32>
    %3 = vector.shape_cast %2 : vector<1x4x64xf32> to vector<4x64xf32>
    %4 = arith.truncf %3 : vector<4x64xf32> to vector<4x64xbf16>
    %cst = arith.constant dense<0.000000e+00> : vector<8x64xf32>
    %5 = tpu.matmul %1, %4, %cst {dimension_numbers = #tpu.dot_dimension_numbers<[1], [0], [0], [1], [0, 0, 1, 1], [], []>} : vector<8x4xbf16>, vector<4x64xbf16>, vector<8x64xf32> -> vector<8x64xf32>
    %c0_4 = arith.constant 0 : index
    %c0_5 = arith.constant 0 : index
    %6 = vector.load %arg3[%c0_4, %c0_5] : memref<8x1xf32, #tpu.memory_space<vmem>>, vector<8x1xf32>
    %7 = vector.broadcast %6 : vector<8x1xf32> to vector<8x64xf32>
    %8 = arith.addf %5, %7 : vector<8x64xf32>
    %cst_6 = arith.constant 0.000000e+00 : f32
    %9 = vector.broadcast %cst_6 : f32 to vector<8x64xf32>
    %10 = arith.cmpf oge, %8, %9 : vector<8x64xf32>
    %cst_7 = arith.constant 0.00999999977 : f32
    %11 = vector.broadcast %cst_7 : f32 to vector<8x64xf32>
    %12 = arith.mulf %11, %8 : vector<8x64xf32>
    %13 = arith.select %10, %8, %12 : vector<8x64xi1>, vector<8x64xf32>
    %14 = tpu.transpose %13, [1, 0] : vector<8x64xf32> -> vector<64x8xf32>
    %15 = vector.shape_cast %14 : vector<64x8xf32> to vector<8x8x8xf32>
    %c0_8 = arith.constant 0 : index
    %c0_9 = arith.constant 0 : index
    %16 = vector.load %arg4[%c0_8, %c0_9] : memref<16x8xf32, #tpu.memory_space<vmem>>, vector<16x8xf32>
    "tpu.trace_start"() <{level = 10 : i32, message = "Hh,hwc->Hwc"}> : () -> ()
    %cst_10 = arith.constant dense<0.000000e+00> : vector<16x8x8xf32>
    %17 = tpu.matmul %16, %15, %cst_10 {dimension_numbers = #tpu.dot_dimension_numbers<[1], [0], [0], [1, 2], [0, 0, 1, 1, 1, 2], [], []>} : vector<16x8xf32>, vector<8x8x8xf32>, vector<16x8x8xf32> -> vector<16x8x8xf32>
    "tpu.trace_stop"() : () -> ()
    %c0_11 = arith.constant 0 : index
    %c0_12 = arith.constant 0 : index
    %18 = vector.load %arg5[%c0_11, %c0_12] : memref<16x8xf32, #tpu.memory_space<vmem>>, vector<16x8xf32>
    "tpu.trace_start"() <{level = 10 : i32, message = "Ww,Hwc->HWc"}> : () -> ()
    %cst_13 = arith.constant dense<0.000000e+00> : vector<16x8x16xf32>
    %19 = tpu.matmul %17, %18, %cst_13 {dimension_numbers = #tpu.dot_dimension_numbers<[1], [1], [0, 2], [0], [0, 0, 0, 2, 1, 0], [], []>} : vector<16x8x8xf32>, vector<16x8xf32>, vector<16x8x16xf32> -> vector<16x8x16xf32>
    %20 = tpu.transpose %19, [0, 2, 1] : vector<16x8x16xf32> -> vector<16x16x8xf32>
    %cst_14 = arith.constant 0.000000e+00 : f32
    "tpu.trace_stop"() : () -> ()
    %21 = vector.broadcast %cst_14 : f32 to vector<16x16x72xf32>
    %c0_15 = arith.constant 0 : index
    %c0_16 = arith.constant 0 : index
    %c0_17 = arith.constant 0 : index
    %22 = vector.load %arg9[%c0_15, %c0_16, %c0_17] : memref<16x16x72xf32, #tpu.memory_space<vmem>>, vector<16x16x72xf32>
    tpu.vector_store %arg9[%c0_15, %c0_16, %c0_17], %21 {strides = array<i32>} : memref<16x16x72xf32, #tpu.memory_space<vmem>>, vector<16x16x72xf32>,
    %23 = vector.extract_strided_slice %20 {offsets = [0, 0, 0], sizes = [15, 15, 8], strides = [1, 1, 1]} : vector<16x16x8xf32> to vector<15x15x8xf32>
    %c1 = arith.constant 1 : index
    %c1_18 = arith.constant 1 : index
    %c0_19 = arith.constant 0 : index
    %24 = vector.load %arg9[%c1, %c1_18, %c0_19] : memref<16x16x72xf32, #tpu.memory_space<vmem>>, vector<15x15x8xf32>
    tpu.vector_store %arg9[%c1, %c1_18, %c0_19], %23 {strides = array<i32>} : memref<16x16x72xf32, #tpu.memory_space<vmem>>, vector<15x15x8xf32>,
    %25 = vector.extract_strided_slice %20 {offsets = [0, 0, 0], sizes = [15, 16, 8], strides = [1, 1, 1]} : vector<16x16x8xf32> to vector<15x16x8xf32>
    %c1_20 = arith.constant 1 : index
    %c0_21 = arith.constant 0 : index
    %c8 = arith.constant 8 : index
    %26 = vector.load %arg9[%c1_20, %c0_21, %c8] : memref<16x16x72xf32, #tpu.memory_space<vmem>>, vector<15x16x8xf32>
    tpu.vector_store %arg9[%c1_20, %c0_21, %c8], %25 {strides = array<i32>} : memref<16x16x72xf32, #tpu.memory_space<vmem>>, vector<15x16x8xf32>,
    %27 = vector.extract_strided_slice %20 {offsets = [0, 1, 0], sizes = [15, 15, 8], strides = [1, 1, 1]} : vector<16x16x8xf32> to vector<15x15x8xf32>
    %c1_22 = arith.constant 1 : index
    %c0_23 = arith.constant 0 : index
    %c16 = arith.constant 16 : index
    %28 = vector.load %arg9[%c1_22, %c0_23, %c16] : memref<16x16x72xf32, #tpu.memory_space<vmem>>, vector<15x15x8xf32>
    tpu.vector_store %arg9[%c1_22, %c0_23, %c16], %27 {strides = array<i32>} : memref<16x16x72xf32, #tpu.memory_space<vmem>>, vector<15x15x8xf32>,
    %29 = vector.extract_strided_slice %20 {offsets = [0, 0, 0], sizes = [16, 15, 8], strides = [1, 1, 1]} : vector<16x16x8xf32> to vector<16x15x8xf32>
    %c0_24 = arith.constant 0 : index
    %c1_25 = arith.constant 1 : index
    %c24 = arith.constant 24 : index
    %30 = vector.load %arg9[%c0_24, %c1_25, %c24] : memref<16x16x72xf32, #tpu.memory_space<vmem>>, vector<16x15x8xf32>
    tpu.vector_store %arg9[%c0_24, %c1_25, %c24], %29 {strides = array<i32>} : memref<16x16x72xf32, #tpu.memory_space<vmem>>, vector<16x15x8xf32>,
    %c0_26 = arith.constant 0 : index
    %c0_27 = arith.constant 0 : index
    %c32 = arith.constant 32 : index
    %31 = vector.load %arg9[%c0_26, %c0_27, %c32] : memref<16x16x72xf32, #tpu.memory_space<vmem>>, vector<16x16x8xf32>
    tpu.vector_store %arg9[%c0_26, %c0_27, %c32], %20 {strides = array<i32>} : memref<16x16x72xf32, #tpu.memory_space<vmem>>, vector<16x16x8xf32>,
    %32 = vector.extract_strided_slice %20 {offsets = [0, 1, 0], sizes = [16, 15, 8], strides = [1, 1, 1]} : vector<16x16x8xf32> to vector<16x15x8xf32>
    %c0_28 = arith.constant 0 : index
    %c0_29 = arith.constant 0 : index
    %c40 = arith.constant 40 : index
    %33 = vector.load %arg9[%c0_28, %c0_29, %c40] : memref<16x16x72xf32, #tpu.memory_space<vmem>>, vector<16x15x8xf32>
    tpu.vector_store %arg9[%c0_28, %c0_29, %c40], %32 {strides = array<i32>} : memref<16x16x72xf32, #tpu.memory_space<vmem>>, vector<16x15x8xf32>,
    %34 = vector.extract_strided_slice %20 {offsets = [1, 0, 0], sizes = [15, 15, 8], strides = [1, 1, 1]} : vector<16x16x8xf32> to vector<15x15x8xf32>
    %c0_30 = arith.constant 0 : index
    %c1_31 = arith.constant 1 : index
    %c48 = arith.constant 48 : index
    %35 = vector.load %arg9[%c0_30, %c1_31, %c48] : memref<16x16x72xf32, #tpu.memory_space<vmem>>, vector<15x15x8xf32>
    tpu.vector_store %arg9[%c0_30, %c1_31, %c48], %34 {strides = array<i32>} : memref<16x16x72xf32, #tpu.memory_space<vmem>>, vector<15x15x8xf32>,
    %36 = vector.extract_strided_slice %20 {offsets = [1, 0, 0], sizes = [15, 16, 8], strides = [1, 1, 1]} : vector<16x16x8xf32> to vector<15x16x8xf32>
    %c0_32 = arith.constant 0 : index
    %c0_33 = arith.constant 0 : index
    %c56 = arith.constant 56 : index
    %37 = vector.load %arg9[%c0_32, %c0_33, %c56] : memref<16x16x72xf32, #tpu.memory_space<vmem>>, vector<15x16x8xf32>
    tpu.vector_store %arg9[%c0_32, %c0_33, %c56], %36 {strides = array<i32>} : memref<16x16x72xf32, #tpu.memory_space<vmem>>, vector<15x16x8xf32>,
    %38 = vector.extract_strided_slice %20 {offsets = [1, 1, 0], sizes = [15, 15, 8], strides = [1, 1, 1]} : vector<16x16x8xf32> to vector<15x15x8xf32>
    %c0_34 = arith.constant 0 : index
    %c0_35 = arith.constant 0 : index
    %c64 = arith.constant 64 : index
    %39 = vector.load %arg9[%c0_34, %c0_35, %c64] : memref<16x16x72xf32, #tpu.memory_space<vmem>>, vector<15x15x8xf32>
    tpu.vector_store %arg9[%c0_34, %c0_35, %c64], %38 {strides = array<i32>} : memref<16x16x72xf32, #tpu.memory_space<vmem>>, vector<15x15x8xf32>,
    %c0_36 = arith.constant 0 : index
    %c0_37 = arith.constant 0 : index
    %c0_38 = arith.constant 0 : index
    %40 = vector.load %arg9[%c0_36, %c0_37, %c0_38] : memref<16x16x72xf32, #tpu.memory_space<vmem>>, vector<16x16x72xf32>
    %41 = vector.shape_cast %40 : vector<16x16x72xf32> to vector<256x72xf32>
    %42 = arith.truncf %41 : vector<256x72xf32> to vector<256x72xbf16>
    %c0_39 = arith.constant 0 : index
    %c0_40 = arith.constant 0 : index
    %43 = vector.load %arg6[%c0_39, %c0_40] : memref<72x8xf32, #tpu.memory_space<vmem>>, vector<72x8xf32>
    %44 = arith.truncf %43 : vector<72x8xf32> to vector<72x8xbf16>
    %cst_41 = arith.constant dense<0.000000e+00> : vector<256x8xf32>
    %45 = tpu.matmul %42, %44, %cst_41 {dimension_numbers = #tpu.dot_dimension_numbers<[1], [0], [0], [1], [0, 0, 1, 1], [], []>} : vector<256x72xbf16>, vector<72x8xbf16>, vector<256x8xf32> -> vector<256x8xf32>
    %c0_42 = arith.constant 0 : index
    %c0_43 = arith.constant 0 : index
    %46 = vector.load %arg7[%c0_42, %c0_43] : memref<1x8xf32, #tpu.memory_space<vmem>>, vector<1x8xf32>
    %47 = vector.broadcast %46 : vector<1x8xf32> to vector<256x8xf32>
    %48 = arith.addf %45, %47 : vector<256x8xf32>
    %cst_44 = arith.constant 0.000000e+00 : f32
    %49 = vector.broadcast %cst_44 : f32 to vector<256x8xf32>
    %50 = arith.cmpf oge, %48, %49 : vector<256x8xf32>
    %cst_45 = arith.constant 0.00999999977 : f32
    %51 = vector.broadcast %cst_45 : f32 to vector<256x8xf32>
    %52 = arith.mulf %51, %48 : vector<256x8xf32>
    %53 = arith.select %50, %48, %52 : vector<256x8xi1>, vector<256x8xf32>
    %54 = tpu.transpose %53, [1, 0] : vector<256x8xf32> -> vector<8x256xf32>
    %c0_46 = arith.constant 0 : index
    %c0_47 = arith.constant 0 : index
    %c0_48 = arith.constant 0 : index
    %55 = vector.load %arg8[%c0_46, %c0_47, %c0_48] : memref<1x8x256xf32, #tpu.memory_space<vmem>>, vector<1x8x256xf32>
    %56 = vector.shape_cast %55 : vector<1x8x256xf32> to vector<8x256xf32>
    %57 = vector.shape_cast %54 : vector<8x256xf32> to vector<1x8x256xf32>
    tpu.vector_store %arg8[%c0_46, %c0_47, %c0_48], %57 {strides = array<i32>} : memref<1x8x256xf32, #tpu.memory_space<vmem>>, vector<1x8x256xf32>,
    return
  }
  func.func @transform_0(%arg0: i32) -> (i32, i32, i32) {
    %c0_i32 = arith.constant 0 : i32
    %c0_i32_0 = arith.constant 0 : i32
    %c0_i32_1 = arith.constant 0 : i32
    return %arg0, %c0_i32, %c0_i32_0 : i32, i32, i32
  }
  func.func @transform_1(%arg0: i32) -> (i32, i32) {
    %c0_i32 = arith.constant 0 : i32
    %c0_i32_0 = arith.constant 0 : i32
    %c0_i32_1 = arith.constant 0 : i32
    return %c0_i32, %c0_i32_0 : i32, i32
  }
  func.func @transform_2(%arg0: i32) -> (i32, i32) {
    %c0_i32 = arith.constant 0 : i32
    %c0_i32_0 = arith.constant 0 : i32
    %c0_i32_1 = arith.constant 0 : i32
    return %c0_i32, %c0_i32_0 : i32, i32
  }
  func.func @transform_3(%arg0: i32) -> (i32, i32) {
    %c0_i32 = arith.constant 0 : i32
    %c0_i32_0 = arith.constant 0 : i32
    %c0_i32_1 = arith.constant 0 : i32
    return %c0_i32, %c0_i32_0 : i32, i32
  }
  func.func @transform_4(%arg0: i32) -> (i32, i32) {
    %c0_i32 = arith.constant 0 : i32
    %c0_i32_0 = arith.constant 0 : i32
    %c0_i32_1 = arith.constant 0 : i32
    return %c0_i32, %c0_i32_0 : i32, i32
  }
  func.func @transform_5(%arg0: i32) -> (i32, i32) {
    %c0_i32 = arith.constant 0 : i32
    %c0_i32_0 = arith.constant 0 : i32
    %c0_i32_1 = arith.constant 0 : i32
    return %c0_i32, %c0_i32_0 : i32, i32
  }
  func.func @transform_6(%arg0: i32) -> (i32, i32) {
    %c0_i32 = arith.constant 0 : i32
    %c0_i32_0 = arith.constant 0 : i32
    %c0_i32_1 = arith.constant 0 : i32
    return %c0_i32, %c0_i32_0 : i32, i32
  }
  func.func @transform_7(%arg0: i32) -> (i32, i32, i32) {
    %c0_i32 = arith.constant 0 : i32
    %c0_i32_0 = arith.constant 0 : i32
    %c0_i32_1 = arith.constant 0 : i32
    return %arg0, %c0_i32, %c0_i32_0 : i32, i32, i32
  }
}

</mosaic_0001>

<llo_original>
// kernel: tpu_custom_call.1
$region0: #{tpu_custom_call.1}
  #allocation0 [shape = 'u32[]', space=smem, size = 0x4, offset = 0x4, fixed_abs, tag = 'smem constant byte address 0x4 - core index']
  #allocation1 [shape = 'u32[72,128]{1,0:T(1,128)}', space=vmem, size = 0x9000, scoped, tag = 'internal scratch']
  #allocation2 [shape = 'f32[16,16,72]{2,1,0:T(8,128)}', space=vmem, size = 0x20000, scoped, tag = 'scratch operand']
  %s0 = inlined_call_operand.vmem [shape: f32[2,4,64], index: 0, kind: input, shape index: {}]
  %s1 = inlined_call_operand.vmem [shape: f32[8,4], index: 1, kind: input, shape index: {}]
  %s2 = inlined_call_operand.vmem [shape: f32[8,1], index: 2, kind: input, shape index: {}]
  %s3 = inlined_call_operand.vmem [shape: f32[16,8], index: 3, kind: input, shape index: {}]
  %s4 = inlined_call_operand.vmem [shape: f32[16,8], index: 4, kind: input, shape index: {}]
  %s5 = inlined_call_operand.vmem [shape: f32[72,8], index: 5, kind: input, shape index: {}]
  %s6 = inlined_call_operand.vmem [shape: f32[1,8], index: 6, kind: input, shape index: {}]
  %s7 = inlined_call_operand.hbm [shape: f32[2,8,256], index: 7, kind: output, shape index: {}]
  %s8 = sld [smem:[#allocation0]]
  $region61: #{tpu_custom_call.1} parent=0
    _
  %s10 = ssub.s32 1, %s8
  %s11 = scalar_select 0, %s10, %s8
  $region1: #{tpu_custom_call.1} parent=0
    #allocation3 [shape = 'u8[16384]{0}', space=vmem, size = 0x4000, scoped, tag = 'output window, operand 0']
    #allocation4 [shape = 's32[2]{0}', space=sflag, size = 0x8, scoped, tag = 'scoped memory for tpu_custom_call.1']
    %12 = vsyncpa [#allocation4], 0
    %s13 = scalar_lea.sflag [#allocation4], 1
    %14 = vsyncpa %s13, 0
    loop: start=0, step=1, limit=4
    $region2: #{tpu_custom_call.1} parent=1 // loop_pre_header
      _
    $region3: #{tpu_custom_call.1} parent=1 // loop_header
      %s16 = sphi 0, %s20
      %p17 = scmp.ge.s32.totalorder %s16, 4
      %s26 = sphi 0, %s28
      %s29 = sphi 0, %s26
      %s30 = sphi 0, %s29
      %s46 = sphi 0, %s30
      %s50 = sphi 0, %s50
      %s52 = sphi 0, %s50
      %s53 = sphi 0, %s52
      %s67 = sphi 0, %s53
      %s71 = sphi 0, %s71
      %s73 = sphi 0, %s71
      %s74 = sphi 0, %s73
      %s88 = sphi 0, %s74
      %s92 = sphi 0, %s92
      %s94 = sphi 0, %s92
      %s95 = sphi 0, %s94
      %s109 = sphi 0, %s95
      %s113 = sphi 0, %s113
      %s115 = sphi 0, %s113
      %s116 = sphi 0, %s115
      %s130 = sphi 0, %s116
      %s134 = sphi 0, %s134
      %s136 = sphi 0, %s134
      %s137 = sphi 0, %s136
      %s151 = sphi 0, %s137
      %s155 = sphi 0, %s155
      %s157 = sphi 0, %s155
      %s158 = sphi 0, %s157
      %s172 = sphi 0, %s158
      %s178 = sphi 0, %s180
      %s181 = sphi 0, %s178
      %s182 = sphi 0, %s181
      %s198 = sphi 0, %s182
    $region4: #{tpu_custom_call.1} parent=1 // loop_header_branch
      %19 = sbr.rel (%p17) target = $region8
    $region5: #{tpu_custom_call.1} parent=1 // loop_body
      %s21 = ssub.s32 %s16, 1
      %s22 = ssub.s32 %s16, 2
      %s23 = sadd.s32 %s16, 1
      %s24 = ssub.s32 %s16, %s23
      %p25 = scmp.eq.s32.totalorder %s24, 0
      %s27 = sadd.s32 %s26, 1
      %s28 = scalar_select %p25, %s26, %s27
      %p31 = pneg %p25
      %p32 = scmp.eq.s32.totalorder %s16, 1
      %p33 = por %p31, %p32
      %p34 = scmp.ne.s32.totalorder %s26, %s29
      %p35 = scmp.eq.s32.totalorder %s16, 0
      %p36 = por %p34, %p35
      %p37 = scmp.ne.s32.totalorder %s26, %s29
      %p38 = scmp.eq.s32.totalorder %s21, 1
      %p39 = por %p37, %p38
      %p40 = scmp.ne.s32.totalorder %s29, %s30
      %p41 = scmp.eq.s32.totalorder %s21, 0
      %p42 = por %p40, %p41
      %p43 = scmp.ne.s32.totalorder %s29, %s30
      %p44 = scmp.eq.s32.totalorder %s22, 1
      %p45 = por %p43, %p44
      %p47 = scmp.ne.s32.totalorder %s30, %s46
      %p48 = scmp.eq.s32.totalorder %s22, 0
      %p49 = por %p47, %p48
      %s51 = sadd.s32 %s50, 1
      %p54 = scmp.eq.s32.totalorder %s16, 1
      %p55 = scmp.ne.s32.totalorder %s50, %s52
      %p56 = scmp.eq.s32.totalorder %s16, 0
      %p57 = por %p55, %p56
      %p58 = scmp.ne.s32.totalorder %s50, %s52
      %p59 = scmp.eq.s32.totalorder %s21, 1
      %p60 = por %p58, %p59
      %p61 = scmp.ne.s32.totalorder %s52, %s53
      %p62 = scmp.eq.s32.totalorder %s21, 0
      %p63 = por %p61, %p62
      %p64 = scmp.ne.s32.totalorder %s52, %s53
      %p65 = scmp.eq.s32.totalorder %s22, 1
      %p66 = por %p64, %p65
      %p68 = scmp.ne.s32.totalorder %s53, %s67
      %p69 = scmp.eq.s32.totalorder %s22, 0
      %p70 = por %p68, %p69
      %s72 = sadd.s32 %s71, 1
      %p75 = scmp.eq.s32.totalorder %s16, 1
      %p76 = scmp.ne.s32.totalorder %s71, %s73
      %p77 = scmp.eq.s32.totalorder %s16, 0
      %p78 = por %p76, %p77
      %p79 = scmp.ne.s32.totalorder %s71, %s73
      %p80 = scmp.eq.s32.totalorder %s21, 1
      %p81 = por %p79, %p80
      %p82 = scmp.ne.s32.totalorder %s73, %s74
      %p83 = scmp.eq.s32.totalorder %s21, 0
      %p84 = por %p82, %p83
      %p85 = scmp.ne.s32.totalorder %s73, %s74
      %p86 = scmp.eq.s32.totalorder %s22, 1
      %p87 = por %p85, %p86
      %p89 = scmp.ne.s32.totalorder %s74, %s88
      %p90 = scmp.eq.s32.totalorder %s22, 0
      %p91 = por %p89, %p90
      %s93 = sadd.s32 %s92, 1
      %p96 = scmp.eq.s32.totalorder %s16, 1
      %p97 = scmp.ne.s32.totalorder %s92, %s94
      %p98 = scmp.eq.s32.totalorder %s16, 0
      %p99 = por %p97, %p98
      %p100 = scmp.ne.s32.totalorder %s92, %s94
      %p101 = scmp.eq.s32.totalorder %s21, 1
      %p102 = por %p100, %p101
      %p103 = scmp.ne.s32.totalorder %s94, %s95
      %p104 = scmp.eq.s32.totalorder %s21, 0
      %p105 = por %p103, %p104
      %p106 = scmp.ne.s32.totalorder %s94, %s95
      %p107 = scmp.eq.s32.totalorder %s22, 1
      %p108 = por %p106, %p107
      %p110 = scmp.ne.s32.totalorder %s95, %s109
      %p111 = scmp.eq.s32.totalorder %s22, 0
      %p112 = por %p110, %p111
      %s114 = sadd.s32 %s113, 1
      %p117 = scmp.eq.s32.totalorder %s16, 1
      %p118 = scmp.ne.s32.totalorder %s113, %s115
      %p119 = scmp.eq.s32.totalorder %s16, 0
      %p120 = por %p118, %p119
      %p121 = scmp.ne.s32.totalorder %s113, %s115
      %p122 = scmp.eq.s32.totalorder %s21, 1
      %p123 = por %p121, %p122
      %p124 = scmp.ne.s32.totalorder %s115, %s116
      %p125 = scmp.eq.s32.totalorder %s21, 0
      %p126 = por %p124, %p125
      %p127 = scmp.ne.s32.totalorder %s115, %s116
      %p128 = scmp.eq.s32.totalorder %s22, 1
      %p129 = por %p127, %p128
      %p131 = scmp.ne.s32.totalorder %s116, %s130
      %p132 = scmp.eq.s32.totalorder %s22, 0
      %p133 = por %p131, %p132
      %s135 = sadd.s32 %s134, 1
      %p138 = scmp.eq.s32.totalorder %s16, 1
      %p139 = scmp.ne.s32.totalorder %s134, %s136
      %p140 = scmp.eq.s32.totalorder %s16, 0
      %p141 = por %p139, %p140
      %p142 = scmp.ne.s32.totalorder %s134, %s136
      %p143 = scmp.eq.s32.totalorder %s21, 1
      %p144 = por %p142, %p143
      %p145 = scmp.ne.s32.totalorder %s136, %s137
      %p146 = scmp.eq.s32.totalorder %s21, 0
      %p147 = por %p145, %p146
      %p148 = scmp.ne.s32.totalorder %s136, %s137
      %p149 = scmp.eq.s32.totalorder %s22, 1
      %p150 = por %p148, %p149
      %p152 = scmp.ne.s32.totalorder %s137, %s151
      %p153 = scmp.eq.s32.totalorder %s22, 0
      %p154 = por %p152, %p153
      %s156 = sadd.s32 %s155, 1
      %p159 = scmp.eq.s32.totalorder %s16, 1
      %p160 = scmp.ne.s32.totalorder %s155, %s157
      %p161 = scmp.eq.s32.totalorder %s16, 0
      %p162 = por %p160, %p161
      %p163 = scmp.ne.s32.totalorder %s155, %s157
      %p164 = scmp.eq.s32.totalorder %s21, 1
      %p165 = por %p163, %p164
      %p166 = scmp.ne.s32.totalorder %s157, %s158
      %p167 = scmp.eq.s32.totalorder %s21, 0
      %p168 = por %p166, %p167
      %p169 = scmp.ne.s32.totalorder %s157, %s158
      %p170 = scmp.eq.s32.totalorder %s22, 1
      %p171 = por %p169, %p170
      %p173 = scmp.ne.s32.totalorder %s158, %s172
      %p174 = scmp.eq.s32.totalorder %s22, 0
      %p175 = por %p173, %p174
      %s176 = ssub.s32 %s16, %s23
      %p177 = scmp.eq.s32.totalorder %s176, 0
      %s179 = sadd.s32 %s178, 1
      %s180 = scalar_select %p177, %s178, %s179
      %p183 = pneg %p177
      %p184 = scmp.eq.s32.totalorder %s16, 1
      %p185 = por %p183, %p184
      %p186 = scmp.ne.s32.totalorder %s178, %s181
      %p187 = scmp.eq.s32.totalorder %s16, 0
      %p188 = por %p186, %p187
      %p189 = scmp.ne.s32.totalorder %s178, %s181
      %p190 = scmp.eq.s32.totalorder %s21, 1
      %p191 = por %p189, %p190
      %p192 = scmp.ne.s32.totalorder %s181, %s182
      %p193 = scmp.eq.s32.totalorder %s21, 0
      %p194 = por %p192, %p193
      %p195 = scmp.ne.s32.totalorder %s181, %s182
      %p196 = scmp.eq.s32.totalorder %s22, 1
      %p197 = por %p195, %p196
      %p199 = scmp.ne.s32.totalorder %s182, %s198
      %p200 = scmp.eq.s32.totalorder %s22, 0
      %p201 = por %p199, %p200
      %p202 = scmp.le.s32.totalorder 1, %s16
      %p203 = scmp.lt.s32.totalorder %s16, 3
      %p204 = pnand %p202, %p203
      %p205 = pneg %p204
      // Predicated region
      $region9: #{tpu_custom_call.1} parent=5 // pred_check
        _
      $region10: #{tpu_custom_call.1} parent=5 // pred_check_branch
        %207 = sbr.rel (%p204) target = $region12
      $region11: #{tpu_custom_call.1} parent=5 // pred_region
        %s208 = ssub.s32 %s16, 1
        // Predicated region
        $region13: #{tpu_custom_call.1} parent=11 // pred_check
          %p209 = pneg %p63
        $region14: #{tpu_custom_call.1} parent=11 // pred_check_branch
          %211 = sbr.rel (%p209) target = $region16
        $region15: #{tpu_custom_call.1} parent=11 // pred_region
          _
        $region16: #{tpu_custom_call.1} parent=11 // pred_fallthru
          _
        // Predicated region
        $region17: #{tpu_custom_call.1} parent=11 // pred_check
          %p212 = pneg %p84
        $region18: #{tpu_custom_call.1} parent=11 // pred_check_branch
          %214 = sbr.rel (%p212) target = $region20
        $region19: #{tpu_custom_call.1} parent=11 // pred_region
          _
        $region20: #{tpu_custom_call.1} parent=11 // pred_fallthru
          _
        // Predicated region
        $region21: #{tpu_custom_call.1} parent=11 // pred_check
          %p215 = pneg %p105
        $region22: #{tpu_custom_call.1} parent=11 // pred_check_branch
          %217 = sbr.rel (%p215) target = $region24
        $region23: #{tpu_custom_call.1} parent=11 // pred_region
          _
        $region24: #{tpu_custom_call.1} parent=11 // pred_fallthru
          _
        // Predicated region
        $region25: #{tpu_custom_call.1} parent=11 // pred_check
          %p218 = pneg %p126
        $region26: #{tpu_custom_call.1} parent=11 // pred_check_branch
          %220 = sbr.rel (%p218) target = $region28
        $region27: #{tpu_custom_call.1} parent=11 // pred_region
          _
        $region28: #{tpu_custom_call.1} parent=11 // pred_fallthru
          _
        // Predicated region
        $region29: #{tpu_custom_call.1} parent=11 // pred_check
          %p221 = pneg %p147
        $region30: #{tpu_custom_call.1} parent=11 // pred_check_branch
          %223 = sbr.rel (%p221) target = $region32
        $region31: #{tpu_custom_call.1} parent=11 // pred_region
          _
        $region32: #{tpu_custom_call.1} parent=11 // pred_fallthru
          _
        // Predicated region
        $region33: #{tpu_custom_call.1} parent=11 // pred_check
          %p224 = pneg %p168
        $region34: #{tpu_custom_call.1} parent=11 // pred_check_branch
          %226 = sbr.rel (%p224) target = $region36
        $region35: #{tpu_custom_call.1} parent=11 // pred_region
          _
        $region36: #{tpu_custom_call.1} parent=11 // pred_fallthru
          _
      $region12: #{tpu_custom_call.1} parent=5 // pred_fallthru
        _
      %p227 = scmp.lt.s32.totalorder %s16, 2
      // Predicated region
      $region37: #{tpu_custom_call.1} parent=5 // pred_check
        %p228 = pneg %p227
      $region38: #{tpu_custom_call.1} parent=5 // pred_check_branch
        %230 = sbr.rel (%p228) target = $region40
      $region39: #{tpu_custom_call.1} parent=5 // pred_region
        // Predicated region
        $region41: #{tpu_custom_call.1} parent=39 // pred_check
          %p231 = pneg %p36
        $region42: #{tpu_custom_call.1} parent=39 // pred_check_branch
          %233 = sbr.rel (%p231) target = $region44
        $region43: #{tpu_custom_call.1} parent=39 // pred_region
          %p234 = scmp.lt.s32.totalorder %s16, 1
          %s235 = scalar_select %p234, %s16, 1
          %s236 = smul.addr %s235, 4
          %s237 = scalar_lea.vmem %s0, %s236
        $region44: #{tpu_custom_call.1} parent=39 // pred_fallthru
          _
      $region40: #{tpu_custom_call.1} parent=5 // pred_fallthru
        _
      %p238 = scmp.le.s32.totalorder 1, %s16
      %p239 = scmp.lt.s32.totalorder %s16, 3
      %p240 = pnand %p238, %p239
      %p241 = pneg %p240
      // Predicated region
      $region45: #{tpu_custom_call.1} parent=5 // pred_check
        _
      $region46: #{tpu_custom_call.1} parent=5 // pred_check_branch
        %243 = sbr.rel (%p240) target = $region48
      $region47: #{tpu_custom_call.1} parent=5 // pred_region
        %s244 = ssub.s32 %s16, 1
        %p245 = scmp.lt.s32.totalorder %s21, 1
        %s246 = scalar_select %p245, %s21, 1
        %s247 = smul.addr %s246, 4
        %s248 = scalar_lea.vmem %s0, %s247
        %p249 = pneg %p42
        %p250 = pneg %p39
        %p251 = pneg %p63
        %p252 = pneg %p60
        %p253 = pneg %p84
        %p254 = pneg %p81
        %p255 = pneg %p105
        %p256 = pneg %p102
        %p257 = pneg %p126
        %p258 = pneg %p123
        %p259 = pneg %p147
        %p260 = pneg %p144
        %p261 = pneg %p168
        %p262 = pneg %p165
        %p263 = pneg %p194
        %p264 = pneg %p191
        %s265 = sand.u32 %s181, 1
        %s266 = scalar_lea.sflag [#allocation4], %s265
        %s267 = sand.u32 %s181, 1
        %s268 = smul.addr %s267, 16
        %s269 = scalar_lea.vmem [#allocation3], %s268
        %p270 = scmp.lt.s32.totalorder %s21, 1
        %s271 = scalar_select %p270, %s21, 1
        %s272 = smul.addr %s271, 4
        %s273 = scalar_lea.vmem %s0, %s272
        %v275 = vld [vmem:[%s1] sm:$0xff]
        %v276 = vpack.c.bf16 %v275, %v275
        %v277 = vld [vmem:[%s273] sm:$0xf]
        %v278 = vpack.c.bf16 %v277, %v277
        %v279 = vld [vmem:[%s2] sm:$0xff]
        %281 = vset.pattern.permute.xlu0 0
        %282 = vperm.xlu0 %281, %v279
        %v283 = vpop.permute.xlu0 %282
        %vm285 = vcmask 31744
        %v287 = vsel %vm285, %v276, 0
        %vm289 = vcmask 1041408
        %v291 = vsel %vm289, %v278, 0
        %293 = vmatpush.bf16.msra.mxu0 0
        %294 = vmatpush.bf16.msra.mxu0 0
        %295 = vmatpush.bf16.msra.mxu0 0
        %296 = vmatpush.bf16.msra.mxu0 0
        %297 = vmatpush.bf16.msra.mxu0 0
        %298 = vmatpush.bf16.msra.mxu0 0
        %299 = vmatpush.bf16.msra.mxu0 0
        %300 = vmatpush.bf16.msra.mxu0 %v291
        %301 = vmatmul.bf16.gmra.mxu0 %v287
        %v302 = vpop.f32.mrf.mxu0
        %v303 = vadd.f32 %v283, %v302
        %v304 = vpop.f32.mrf.mxu0
        %305 = vdwg.mxu0
        %vm306 = vcmp.ge.f32.partialorder %v303, 0.0
        %v307 = vmul.f32 %v303, 0.01
        %v308 = vsel %vm306, %v303, %v307
        %309 = vxpose.xlu0.b32.start [1/16] %v308, 128
        %310 = vxpose.xlu0.b32.cont [2/16] 0.0, 128
        %311 = vxpose.xlu0.b32.cont [3/16] 0.0, 128
        %312 = vxpose.xlu0.b32.cont [4/16] 0.0, 128
        %313 = vxpose.xlu0.b32.cont [5/16] 0.0, 128
        %314 = vxpose.xlu0.b32.cont [6/16] 0.0, 128
        %315 = vxpose.xlu0.b32.cont [7/16] 0.0, 128
        %316 = vxpose.xlu0.b32.cont [8/16] 0.0, 128
        %317 = vxpose.xlu0.b32.cont [9/16] 0.0, 128
        %318 = vxpose.xlu0.b32.cont [10/16] 0.0, 128
        %319 = vxpose.xlu0.b32.cont [11/16] 0.0, 128
        %320 = vxpose.xlu0.b32.cont [12/16] 0.0, 128
        %321 = vxpose.xlu0.b32.cont [13/16] 0.0, 128
        %322 = vxpose.xlu0.b32.cont [14/16] 0.0, 128
        %323 = vxpose.xlu0.b32.cont [15/16] 0.0, 128
        %324 = vxpose.xlu0.b32.end [16/16] 0.0, 128
        %v325 = vpop.trf.xlu0
        %v326 = vpop.trf.xlu0
        %v327 = vpop.trf.xlu0
        %v328 = vpop.trf.xlu0
        %v329 = vpop.trf.xlu0
        %v330 = vpop.trf.xlu0
        %v331 = vpop.trf.xlu0
        %v332 = vpop.trf.xlu0
        %v333 = vpop.trf.xlu0
        %v334 = vpop.trf.xlu0
        %v335 = vpop.trf.xlu0
        %v336 = vpop.trf.xlu0
        %v337 = vpop.trf.xlu0
        %v338 = vpop.trf.xlu0
        %v339 = vpop.trf.xlu0
        %v340 = vpop.trf.xlu0
        %v341 = vld [vmem:[%s3] sm:$0xff]
        %v342 = vld [vmem:[%s3 + $0x8] sm:$0xff]
        %v343 = vrot.slane %v327, 4
        %vm344 = vcmask 1047556
        %v345 = vsel %vm344, %v343, %v325
        %v346 = vrot.slane %v325, 4
        %v347 = vsel %vm344, %v327, %v346
        %v349 = vunpack.c.l.s4 1983009808
        %v350 = vunpack.c.0.s8 %v349
        %v351 = vperm.slane %v345, %v350
        %v353 = vunpack.c.l.s4 1983009808
        %v354 = vunpack.c.0.s8 %v353
        %v355 = vperm.slane %v347, %v354
        %v356 = vrot.slane %v328, 4
        %v357 = vsel %vm344, %v356, %v326
        %v358 = vrot.slane %v326, 4
        %v359 = vsel %vm344, %v328, %v358
        %v361 = vunpack.c.l.s4 1983009808
        %v362 = vunpack.c.0.s8 %v361
        %v363 = vperm.slane %v357, %v362
        %v365 = vunpack.c.l.s4 1983009808
        %v366 = vunpack.c.0.s8 %v365
        %v367 = vperm.slane %v359, %v366
        %v368 = vrot.slane %v331, 4
        %v369 = vsel %vm344, %v368, %v329
        %v370 = vrot.slane %v329, 4
        %v371 = vsel %vm344, %v331, %v370
        %v373 = vunpack.c.l.s4 1983009808
        %v374 = vunpack.c.0.s8 %v373
        %v375 = vperm.slane %v369, %v374
        %v377 = vunpack.c.l.s4 1983009808
        %v378 = vunpack.c.0.s8 %v377
        %v379 = vperm.slane %v371, %v378
        %v380 = vrot.slane %v332, 4
        %v381 = vsel %vm344, %v380, %v330
        %v382 = vrot.slane %v330, 4
        %v383 = vsel %vm344, %v332, %v382
        %v385 = vunpack.c.l.s4 1983009808
        %v386 = vunpack.c.0.s8 %v385
        %v387 = vperm.slane %v381, %v386
        %v389 = vunpack.c.l.s4 1983009808
        %v390 = vunpack.c.0.s8 %v389
        %v391 = vperm.slane %v383, %v390
        %v392 = vrot.slane %v363, 4
        %v393 = vsel %vm344, %v392, %v351
        %v394 = vrot.slane %v351, 4
        %v395 = vsel %vm344, %v363, %v394
        %v397 = vunpack.c.l.s4 1934713408
        %v398 = vunpack.c.0.s8 %v397
        %v399 = vperm.slane %v393, %v398
        %v401 = vunpack.c.l.s4 1934713408
        %v402 = vunpack.c.0.s8 %v401
        %v403 = vperm.slane %v395, %v402
        %v404 = vrot.slane %v367, 4
        %v405 = vsel %vm344, %v404, %v355
        %v406 = vrot.slane %v355, 4
        %v407 = vsel %vm344, %v367, %v406
        %v409 = vunpack.c.l.s4 1934713408
        %v410 = vunpack.c.0.s8 %v409
        %v411 = vperm.slane %v405, %v410
        %v413 = vunpack.c.l.s4 1934713408
        %v414 = vunpack.c.0.s8 %v413
        %v415 = vperm.slane %v407, %v414
        %v416 = vrot.slane %v387, 4
        %v417 = vsel %vm344, %v416, %v375
        %v418 = vrot.slane %v375, 4
        %v419 = vsel %vm344, %v387, %v418
        %v421 = vunpack.c.l.s4 1934713408
        %v422 = vunpack.c.0.s8 %v421
        %v423 = vperm.slane %v417, %v422
        %v425 = vunpack.c.l.s4 1934713408
        %v426 = vunpack.c.0.s8 %v425
        %v427 = vperm.slane %v419, %v426
        %v428 = vrot.slane %v391, 4
        %v429 = vsel %vm344, %v428, %v379
        %v430 = vrot.slane %v379, 4
        %v431 = vsel %vm344, %v391, %v430
        %v433 = vunpack.c.l.s4 1934713408
        %v434 = vunpack.c.0.s8 %v433
        %v435 = vperm.slane %v429, %v434
        %v437 = vunpack.c.l.s4 1934713408
        %v438 = vunpack.c.0.s8 %v437
        %v439 = vperm.slane %v431, %v438
        %v440 = vrot.slane %v423, 4
        %v441 = vsel %vm344, %v440, %v399
        %v442 = vrot.slane %v399, 4
        %v443 = vsel %vm344, %v423, %v442
        %v444 = vrot.slane %v427, 4
        %v445 = vsel %vm344, %v444, %v403
        %v446 = vrot.slane %v403, 4
        %v447 = vsel %vm344, %v427, %v446
        %v448 = vrot.slane %v435, 4
        %v449 = vsel %vm344, %v448, %v411
        %v450 = vrot.slane %v411, 4
        %v451 = vsel %vm344, %v435, %v450
        %v452 = vrot.slane %v439, 4
        %v453 = vsel %vm344, %v452, %v415
        %v454 = vrot.slane %v415, 4
        %v455 = vsel %vm344, %v439, %v454
        %457 = vrot.lane.b32.xlu0 %v443, 8
        %v458 = vpop.permute.xlu0 %457
        %461 = vrot.lane.b32.xlu0 %v445, 16
        %v462 = vpop.permute.xlu0 %461
        %465 = vrot.lane.b32.xlu0 %v447, 24
        %v466 = vpop.permute.xlu0 %465
        %469 = vrot.lane.b32.xlu0 %v449, 32
        %v470 = vpop.permute.xlu0 %469
        %473 = vrot.lane.b32.xlu0 %v451, 40
        %v474 = vpop.permute.xlu0 %473
        %477 = vrot.lane.b32.xlu0 %v453, 48
        %v478 = vpop.permute.xlu0 %477
        %481 = vrot.lane.b32.xlu0 %v455, 56
        %v482 = vpop.permute.xlu0 %481
        %vm484 = vcmask 64512
        %v485 = vsel %vm484, %v441, %v458
        %vm486 = vcmask 130048
        %v487 = vsel %vm486, %v485, %v462
        %vm488 = vcmask 195584
        %v489 = vsel %vm488, %v487, %v466
        %vm490 = vcmask 261120
        %v491 = vsel %vm490, %v489, %v470
        %vm492 = vcmask 326656
        %v493 = vsel %vm492, %v491, %v474
        %vm494 = vcmask 392192
        %v495 = vsel %vm494, %v493, %v478
        %vm496 = vcmask 457728
        %v497 = vsel %vm496, %v495, %v482
        %v498 = vsel %vm344, 0.0, 0.0
        %v499 = vsel %vm344, 0.0, 0.0
        %v501 = vunpack.c.l.s4 1983009808
        %v502 = vunpack.c.0.s8 %v501
        %v503 = vperm.slane %v498, %v502
        %v505 = vunpack.c.l.s4 1983009808
        %v506 = vunpack.c.0.s8 %v505
        %v507 = vperm.slane %v499, %v506
        %v508 = vrot.slane %v503, 4
        %v509 = vsel %vm344, %v508, %v503
        %v510 = vsel %vm344, %v503, %v508
        %v512 = vunpack.c.l.s4 1934713408
        %v513 = vunpack.c.0.s8 %v512
        %v514 = vperm.slane %v509, %v513
        %v516 = vunpack.c.l.s4 1934713408
        %v517 = vunpack.c.0.s8 %v516
        %v518 = vperm.slane %v510, %v517
        %v519 = vrot.slane %v507, 4
        %v520 = vsel %vm344, %v519, %v507
        %v521 = vsel %vm344, %v507, %v519
        %v523 = vunpack.c.l.s4 1934713408
        %v524 = vunpack.c.0.s8 %v523
        %v525 = vperm.slane %v520, %v524
        %v527 = vunpack.c.l.s4 1934713408
        %v528 = vunpack.c.0.s8 %v527
        %v529 = vperm.slane %v521, %v528
        %v530 = vrot.slane %v514, 4
        %v531 = vsel %vm344, %v530, %v514
        %v532 = vsel %vm344, %v514, %v530
        %v533 = vrot.slane %v518, 4
        %v534 = vsel %vm344, %v533, %v518
        %v535 = vsel %vm344, %v518, %v533
        %v536 = vrot.slane %v525, 4
        %v537 = vsel %vm344, %v536, %v525
        %v538 = vsel %vm344, %v525, %v536
        %v539 = vrot.slane %v529, 4
        %v540 = vsel %vm344, %v539, %v529
        %v541 = vsel %vm344, %v529, %v539
        %543 = vrot.lane.b32.xlu0 %v532, 8
        %v544 = vpop.permute.xlu0 %543
        %547 = vrot.lane.b32.xlu0 %v534, 16
        %v548 = vpop.permute.xlu0 %547
        %551 = vrot.lane.b32.xlu0 %v535, 24
        %v552 = vpop.permute.xlu0 %551
        %555 = vrot.lane.b32.xlu0 %v537, 32
        %v556 = vpop.permute.xlu0 %555
        %559 = vrot.lane.b32.xlu0 %v538, 40
        %v560 = vpop.permute.xlu0 %559
        %563 = vrot.lane.b32.xlu0 %v540, 48
        %v564 = vpop.permute.xlu0 %563
        %567 = vrot.lane.b32.xlu0 %v541, 56
        %v568 = vpop.permute.xlu0 %567
        %v570 = vsel %vm484, %v531, %v544
        %v571 = vsel %vm486, %v570, %v548
        %v572 = vsel %vm488, %v571, %v552
        %v573 = vsel %vm490, %v572, %v556
        %v574 = vsel %vm492, %v573, %v560
        %v575 = vsel %vm494, %v574, %v564
        %v576 = vsel %vm496, %v575, %v568
        %v578 = vsel %vm484, %v341, 0
        %v581 = vsel %vm484, %v342, 0
        %583 = vmatpush.msra.mxu0 0.0
        %584 = vmatpush.msra.mxu0 0.0
        %585 = vmatpush.msra.mxu0 0.0
        %586 = vmatpush.msra.mxu0 0.0
        %587 = vmatpush.msra.mxu0 0.0
        %588 = vmatpush.msra.mxu0 0.0
        %589 = vmatpush.msra.mxu0 0.0
        %590 = vmatpush.msra.mxu0 0.0
        %591 = vmatpush.msra.mxu0 0.0
        %592 = vmatpush.msra.mxu0 0.0
        %593 = vmatpush.msra.mxu0 0.0
        %594 = vmatpush.msra.mxu0 0.0
        %595 = vmatpush.msra.mxu0 0.0
        %596 = vmatpush.msra.mxu0 0.0
        %597 = vmatpush.msra.mxu0 0.0
        %598 = vmatpush.msra.mxu0 %v497
        %599 = vmatmul.f32.gmra.mxu0 %v578
        %v600 = vpop.f32.mrf.mxu0
        %v601 = vadd.f32 %v576, %v600
        %602 = vmatmul.f32.gmra.mxu0 %v581
        %v603 = vpop.f32.mrf.mxu0
        %v604 = vadd.f32 %v576, %v603
        %605 = vdwg.mxu0
        %608 = vrot.lane.b32.xlu0 %v601, 120
        %v609 = vpop.permute.xlu0 %608
        %610 = vrot.lane.b32.xlu0 %v604, 120
        %v611 = vpop.permute.xlu0 %610
        %614 = vrot.lane.b32.xlu0 %v601, 112
        %v615 = vpop.permute.xlu0 %614
        %616 = vrot.lane.b32.xlu0 %v604, 112
        %v617 = vpop.permute.xlu0 %616
        %620 = vrot.lane.b32.xlu0 %v601, 104
        %v621 = vpop.permute.xlu0 %620
        %622 = vrot.lane.b32.xlu0 %v604, 104
        %v623 = vpop.permute.xlu0 %622
        %626 = vrot.lane.b32.xlu0 %v601, 96
        %v627 = vpop.permute.xlu0 %626
        %628 = vrot.lane.b32.xlu0 %v604, 96
        %v629 = vpop.permute.xlu0 %628
        %632 = vrot.lane.b32.xlu0 %v601, 88
        %v633 = vpop.permute.xlu0 %632
        %634 = vrot.lane.b32.xlu0 %v604, 88
        %v635 = vpop.permute.xlu0 %634
        %638 = vrot.lane.b32.xlu0 %v601, 80
        %v639 = vpop.permute.xlu0 %638
        %640 = vrot.lane.b32.xlu0 %v604, 80
        %v641 = vpop.permute.xlu0 %640
        %644 = vrot.lane.b32.xlu0 %v601, 72
        %v645 = vpop.permute.xlu0 %644
        %646 = vrot.lane.b32.xlu0 %v604, 72
        %v647 = vpop.permute.xlu0 %646
        %v650 = vld [vmem:[%s4] sm:$0xff]
        %v651 = vld [vmem:[%s4 + $0x8] sm:$0xff]
        %652 = vxpose.xlu0.b32.start [1/16] %v601, 128
        %653 = vxpose.xlu0.b32.cont [2/16] %v604, 128
        %654 = vxpose.xlu0.b32.cont [3/16] 0.0, 128
        %655 = vxpose.xlu0.b32.cont [4/16] 0.0, 128
        %656 = vxpose.xlu0.b32.cont [5/16] 0.0, 128
        %657 = vxpose.xlu0.b32.cont [6/16] 0.0, 128
        %658 = vxpose.xlu0.b32.cont [7/16] 0.0, 128
        %659 = vxpose.xlu0.b32.cont [8/16] 0.0, 128
        %660 = vxpose.xlu0.b32.cont [9/16] 0.0, 128
        %661 = vxpose.xlu0.b32.cont [10/16] 0.0, 128
        %662 = vxpose.xlu0.b32.cont [11/16] 0.0, 128
        %663 = vxpose.xlu0.b32.cont [12/16] 0.0, 128
        %664 = vxpose.xlu0.b32.cont [13/16] 0.0, 128
        %665 = vxpose.xlu0.b32.cont [14/16] 0.0, 128
        %666 = vxpose.xlu0.b32.cont [15/16] 0.0, 128
        %667 = vxpose.xlu0.b32.end [16/16] 0.0, 128
        %v668 = vpop.trf.xlu0
        %v669 = vpop.trf.xlu0
        %v670 = vpop.trf.xlu0
        %v671 = vpop.trf.xlu0
        %v672 = vpop.trf.xlu0
        %v673 = vpop.trf.xlu0
        %v674 = vpop.trf.xlu0
        %v675 = vpop.trf.xlu0
        %v676 = vpop.trf.xlu0
        %v677 = vpop.trf.xlu0
        %v678 = vpop.trf.xlu0
        %v679 = vpop.trf.xlu0
        %v680 = vpop.trf.xlu0
        %v681 = vpop.trf.xlu0
        %v682 = vpop.trf.xlu0
        %v683 = vpop.trf.xlu0
        %684 = vxpose.xlu0.b32.start [1/16] %v609, 128
        %685 = vxpose.xlu0.b32.cont [2/16] %v611, 128
        %686 = vxpose.xlu0.b32.cont [3/16] 0.0, 128
        %687 = vxpose.xlu0.b32.cont [4/16] 0.0, 128
        %688 = vxpose.xlu0.b32.cont [5/16] 0.0, 128
        %689 = vxpose.xlu0.b32.cont [6/16] 0.0, 128
        %690 = vxpose.xlu0.b32.cont [7/16] 0.0, 128
        %691 = vxpose.xlu0.b32.cont [8/16] 0.0, 128
        %692 = vxpose.xlu0.b32.cont [9/16] 0.0, 128
        %693 = vxpose.xlu0.b32.cont [10/16] 0.0, 128
        %694 = vxpose.xlu0.b32.cont [11/16] 0.0, 128
        %695 = vxpose.xlu0.b32.cont [12/16] 0.0, 128
        %696 = vxpose.xlu0.b32.cont [13/16] 0.0, 128
        %697 = vxpose.xlu0.b32.cont [14/16] 0.0, 128
        %698 = vxpose.xlu0.b32.cont [15/16] 0.0, 128
        %699 = vxpose.xlu0.b32.end [16/16] 0.0, 128
        %v700 = vpop.trf.xlu0
        %v701 = vpop.trf.xlu0
        %v702 = vpop.trf.xlu0
        %v703 = vpop.trf.xlu0
        %v704 = vpop.trf.xlu0
        %v705 = vpop.trf.xlu0
        %v706 = vpop.trf.xlu0
        %v707 = vpop.trf.xlu0
        %v708 = vpop.trf.xlu0
        %v709 = vpop.trf.xlu0
        %v710 = vpop.trf.xlu0
        %v711 = vpop.trf.xlu0
        %v712 = vpop.trf.xlu0
        %v713 = vpop.trf.xlu0
        %v714 = vpop.trf.xlu0
        %v715 = vpop.trf.xlu0
        %716 = vxpose.xlu0.b32.start [1/16] %v615, 128
        %717 = vxpose.xlu0.b32.cont [2/16] %v617, 128
        %718 = vxpose.xlu0.b32.cont [3/16] 0.0, 128
        %719 = vxpose.xlu0.b32.cont [4/16] 0.0, 128
        %720 = vxpose.xlu0.b32.cont [5/16] 0.0, 128
        %721 = vxpose.xlu0.b32.cont [6/16] 0.0, 128
        %722 = vxpose.xlu0.b32.cont [7/16] 0.0, 128
        %723 = vxpose.xlu0.b32.cont [8/16] 0.0, 128
        %724 = vxpose.xlu0.b32.cont [9/16] 0.0, 128
        %725 = vxpose.xlu0.b32.cont [10/16] 0.0, 128
        %726 = vxpose.xlu0.b32.cont [11/16] 0.0, 128
        %727 = vxpose.xlu0.b32.cont [12/16] 0.0, 128
        %728 = vxpose.xlu0.b32.cont [13/16] 0.0, 128
        %729 = vxpose.xlu0.b32.cont [14/16] 0.0, 128
        %730 = vxpose.xlu0.b32.cont [15/16] 0.0, 128
        %731 = vxpose.xlu0.b32.end [16/16] 0.0, 128
        %v732 = vpop.trf.xlu0
        %v733 = vpop.trf.xlu0
        %v734 = vpop.trf.xlu0
        %v735 = vpop.trf.xlu0
        %v736 = vpop.trf.xlu0
        %v737 = vpop.trf.xlu0
        %v738 = vpop.trf.xlu0
        %v739 = vpop.trf.xlu0
        %v740 = vpop.trf.xlu0
        %v741 = vpop.trf.xlu0
        %v742 = vpop.trf.xlu0
        %v743 = vpop.trf.xlu0
        %v744 = vpop.trf.xlu0
        %v745 = vpop.trf.xlu0
        %v746 = vpop.trf.xlu0
        %v747 = vpop.trf.xlu0
        %748 = vxpose.xlu0.b32.start [1/16] %v621, 128
        %749 = vxpose.xlu0.b32.cont [2/16] %v623, 128
        %750 = vxpose.xlu0.b32.cont [3/16] 0.0, 128
        %751 = vxpose.xlu0.b32.cont [4/16] 0.0, 128
        %752 = vxpose.xlu0.b32.cont [5/16] 0.0, 128
        %753 = vxpose.xlu0.b32.cont [6/16] 0.0, 128
        %754 = vxpose.xlu0.b32.cont [7/16] 0.0, 128
        %755 = vxpose.xlu0.b32.cont [8/16] 0.0, 128
        %756 = vxpose.xlu0.b32.cont [9/16] 0.0, 128
        %757 = vxpose.xlu0.b32.cont [10/16] 0.0, 128
        %758 = vxpose.xlu0.b32.cont [11/16] 0.0, 128
        %759 = vxpose.xlu0.b32.cont [12/16] 0.0, 128
        %760 = vxpose.xlu0.b32.cont [13/16] 0.0, 128
        %761 = vxpose.xlu0.b32.cont [14/16] 0.0, 128
        %762 = vxpose.xlu0.b32.cont [15/16] 0.0, 128
        %763 = vxpose.xlu0.b32.end [16/16] 0.0, 128
        %v764 = vpop.trf.xlu0
        %v765 = vpop.trf.xlu0
        %v766 = vpop.trf.xlu0
        %v767 = vpop.trf.xlu0
        %v768 = vpop.trf.xlu0
        %v769 = vpop.trf.xlu0
        %v770 = vpop.trf.xlu0
        %v771 = vpop.trf.xlu0
        %v772 = vpop.trf.xlu0
        %v773 = vpop.trf.xlu0
        %v774 = vpop.trf.xlu0
        %v775 = vpop.trf.xlu0
        %v776 = vpop.trf.xlu0
        %v777 = vpop.trf.xlu0
        %v778 = vpop.trf.xlu0
        %v779 = vpop.trf.xlu0
        %780 = vxpose.xlu0.b32.start [1/16] %v627, 128
        %781 = vxpose.xlu0.b32.cont [2/16] %v629, 128
        %782 = vxpose.xlu0.b32.cont [3/16] 0.0, 128
        %783 = vxpose.xlu0.b32.cont [4/16] 0.0, 128
        %784 = vxpose.xlu0.b32.cont [5/16] 0.0, 128
        %785 = vxpose.xlu0.b32.cont [6/16] 0.0, 128
        %786 = vxpose.xlu0.b32.cont [7/16] 0.0, 128
        %787 = vxpose.xlu0.b32.cont [8/16] 0.0, 128
        %788 = vxpose.xlu0.b32.cont [9/16] 0.0, 128
        %789 = vxpose.xlu0.b32.cont [10/16] 0.0, 128
        %790 = vxpose.xlu0.b32.cont [11/16] 0.0, 128
        %791 = vxpose.xlu0.b32.cont [12/16] 0.0, 128
        %792 = vxpose.xlu0.b32.cont [13/16] 0.0, 128
        %793 = vxpose.xlu0.b32.cont [14/16] 0.0, 128
        %794 = vxpose.xlu0.b32.cont [15/16] 0.0, 128
        %795 = vxpose.xlu0.b32.end [16/16] 0.0, 128
        %v796 = vpop.trf.xlu0
        %v797 = vpop.trf.xlu0
        %v798 = vpop.trf.xlu0
        %v799 = vpop.trf.xlu0
        %v800 = vpop.trf.xlu0
        %v801 = vpop.trf.xlu0
        %v802 = vpop.trf.xlu0
        %v803 = vpop.trf.xlu0
        %v804 = vpop.trf.xlu0
        %v805 = vpop.trf.xlu0
        %v806 = vpop.trf.xlu0
        %v807 = vpop.trf.xlu0
        %v808 = vpop.trf.xlu0
        %v809 = vpop.trf.xlu0
        %v810 = vpop.trf.xlu0
        %v811 = vpop.trf.xlu0
        %812 = vxpose.xlu0.b32.start [1/16] %v633, 128
        %813 = vxpose.xlu0.b32.cont [2/16] %v635, 128
        %814 = vxpose.xlu0.b32.cont [3/16] 0.0, 128
        %815 = vxpose.xlu0.b32.cont [4/16] 0.0, 128
        %816 = vxpose.xlu0.b32.cont [5/16] 0.0, 128
        %817 = vxpose.xlu0.b32.cont [6/16] 0.0, 128
        %818 = vxpose.xlu0.b32.cont [7/16] 0.0, 128
        %819 = vxpose.xlu0.b32.cont [8/16] 0.0, 128
        %820 = vxpose.xlu0.b32.cont [9/16] 0.0, 128
        %821 = vxpose.xlu0.b32.cont [10/16] 0.0, 128
        %822 = vxpose.xlu0.b32.cont [11/16] 0.0, 128
        %823 = vxpose.xlu0.b32.cont [12/16] 0.0, 128
        %824 = vxpose.xlu0.b32.cont [13/16] 0.0, 128
        %825 = vxpose.xlu0.b32.cont [14/16] 0.0, 128
        %826 = vxpose.xlu0.b32.cont [15/16] 0.0, 128
        %827 = vxpose.xlu0.b32.end [16/16] 0.0, 128
        %v828 = vpop.trf.xlu0
        %v829 = vpop.trf.xlu0
        %v830 = vpop.trf.xlu0
        %v831 = vpop.trf.xlu0
        %v832 = vpop.trf.xlu0
        %v833 = vpop.trf.xlu0
        %v834 = vpop.trf.xlu0
        %v835 = vpop.trf.xlu0
        %v836 = vpop.trf.xlu0
        %v837 = vpop.trf.xlu0
        %v838 = vpop.trf.xlu0
        %v839 = vpop.trf.xlu0
        %v840 = vpop.trf.xlu0
        %v841 = vpop.trf.xlu0
        %v842 = vpop.trf.xlu0
        %v843 = vpop.trf.xlu0
        %844 = vxpose.xlu0.b32.start [1/16] %v639, 128
        %845 = vxpose.xlu0.b32.cont [2/16] %v641, 128
        %846 = vxpose.xlu0.b32.cont [3/16] 0.0, 128
        %847 = vxpose.xlu0.b32.cont [4/16] 0.0, 128
        %848 = vxpose.xlu0.b32.cont [5/16] 0.0, 128
        %849 = vxpose.xlu0.b32.cont [6/16] 0.0, 128
        %850 = vxpose.xlu0.b32.cont [7/16] 0.0, 128
        %851 = vxpose.xlu0.b32.cont [8/16] 0.0, 128
        %852 = vxpose.xlu0.b32.cont [9/16] 0.0, 128
        %853 = vxpose.xlu0.b32.cont [10/16] 0.0, 128
        %854 = vxpose.xlu0.b32.cont [11/16] 0.0, 128
        %855 = vxpose.xlu0.b32.cont [12/16] 0.0, 128
        %856 = vxpose.xlu0.b32.cont [13/16] 0.0, 128
        %857 = vxpose.xlu0.b32.cont [14/16] 0.0, 128
        %858 = vxpose.xlu0.b32.cont [15/16] 0.0, 128
        %859 = vxpose.xlu0.b32.end [16/16] 0.0, 128
        %v860 = vpop.trf.xlu0
        %v861 = vpop.trf.xlu0
        %v862 = vpop.trf.xlu0
        %v863 = vpop.trf.xlu0
        %v864 = vpop.trf.xlu0
        %v865 = vpop.trf.xlu0
        %v866 = vpop.trf.xlu0
        %v867 = vpop.trf.xlu0
        %v868 = vpop.trf.xlu0
        %v869 = vpop.trf.xlu0
        %v870 = vpop.trf.xlu0
        %v871 = vpop.trf.xlu0
        %v872 = vpop.trf.xlu0
        %v873 = vpop.trf.xlu0
        %v874 = vpop.trf.xlu0
        %v875 = vpop.trf.xlu0
        %876 = vxpose.xlu0.b32.start [1/16] %v645, 128
        %877 = vxpose.xlu0.b32.cont [2/16] %v647, 128
        %878 = vxpose.xlu0.b32.cont [3/16] 0.0, 128
        %879 = vxpose.xlu0.b32.cont [4/16] 0.0, 128
        %880 = vxpose.xlu0.b32.cont [5/16] 0.0, 128
        %881 = vxpose.xlu0.b32.cont [6/16] 0.0, 128
        %882 = vxpose.xlu0.b32.cont [7/16] 0.0, 128
        %883 = vxpose.xlu0.b32.cont [8/16] 0.0, 128
        %884 = vxpose.xlu0.b32.cont [9/16] 0.0, 128
        %885 = vxpose.xlu0.b32.cont [10/16] 0.0, 128
        %886 = vxpose.xlu0.b32.cont [11/16] 0.0, 128
        %887 = vxpose.xlu0.b32.cont [12/16] 0.0, 128
        %888 = vxpose.xlu0.b32.cont [13/16] 0.0, 128
        %889 = vxpose.xlu0.b32.cont [14/16] 0.0, 128
        %890 = vxpose.xlu0.b32.cont [15/16] 0.0, 128
        %891 = vxpose.xlu0.b32.end [16/16] 0.0, 128
        %v892 = vpop.trf.xlu0
        %v893 = vpop.trf.xlu0
        %v894 = vpop.trf.xlu0
        %v895 = vpop.trf.xlu0
        %v896 = vpop.trf.xlu0
        %v897 = vpop.trf.xlu0
        %v898 = vpop.trf.xlu0
        %v899 = vpop.trf.xlu0
        %v900 = vpop.trf.xlu0
        %v901 = vpop.trf.xlu0
        %v902 = vpop.trf.xlu0
        %v903 = vpop.trf.xlu0
        %v904 = vpop.trf.xlu0
        %v905 = vpop.trf.xlu0
        %v906 = vpop.trf.xlu0
        %v907 = vpop.trf.xlu0
        %v908 = vrot.slane %v732, 4
        %v909 = vsel %vm344, %v908, %v668
        %v910 = vrot.slane %v668, 4
        %v911 = vsel %vm344, %v732, %v910
        %v913 = vunpack.c.l.s4 1983009808
        %v914 = vunpack.c.0.s8 %v913
        %v915 = vperm.slane %v909, %v914
        %v917 = vunpack.c.l.s4 1983009808
        %v918 = vunpack.c.0.s8 %v917
        %v919 = vperm.slane %v911, %v918
        %v920 = vrot.slane %v764, 4
        %v921 = vsel %vm344, %v920, %v700
        %v922 = vrot.slane %v700, 4
        %v923 = vsel %vm344, %v764, %v922
        %v925 = vunpack.c.l.s4 1983009808
        %v926 = vunpack.c.0.s8 %v925
        %v927 = vperm.slane %v921, %v926
        %v929 = vunpack.c.l.s4 1983009808
        %v930 = vunpack.c.0.s8 %v929
        %v931 = vperm.slane %v923, %v930
        %v932 = vrot.slane %v860, 4
        %v933 = vsel %vm344, %v932, %v796
        %v934 = vrot.slane %v796, 4
        %v935 = vsel %vm344, %v860, %v934
        %v937 = vunpack.c.l.s4 1983009808
        %v938 = vunpack.c.0.s8 %v937
        %v939 = vperm.slane %v933, %v938
        %v941 = vunpack.c.l.s4 1983009808
        %v942 = vunpack.c.0.s8 %v941
        %v943 = vperm.slane %v935, %v942
        %v944 = vrot.slane %v892, 4
        %v945 = vsel %vm344, %v944, %v828
        %v946 = vrot.slane %v828, 4
        %v947 = vsel %vm344, %v892, %v946
        %v949 = vunpack.c.l.s4 1983009808
        %v950 = vunpack.c.0.s8 %v949
        %v951 = vperm.slane %v945, %v950
        %v953 = vunpack.c.l.s4 1983009808
        %v954 = vunpack.c.0.s8 %v953
        %v955 = vperm.slane %v947, %v954
        %v956 = vrot.slane %v927, 4
        %v957 = vsel %vm344, %v956, %v915
        %v958 = vrot.slane %v915, 4
        %v959 = vsel %vm344, %v927, %v958
        %v961 = vunpack.c.l.s4 1934713408
        %v962 = vunpack.c.0.s8 %v961
        %v963 = vperm.slane %v957, %v962
        %v965 = vunpack.c.l.s4 1934713408
        %v966 = vunpack.c.0.s8 %v965
        %v967 = vperm.slane %v959, %v966
        %v968 = vrot.slane %v931, 4
        %v969 = vsel %vm344, %v968, %v919
        %v970 = vrot.slane %v919, 4
        %v971 = vsel %vm344, %v931, %v970
        %v973 = vunpack.c.l.s4 1934713408
        %v974 = vunpack.c.0.s8 %v973
        %v975 = vperm.slane %v969, %v974
        %v977 = vunpack.c.l.s4 1934713408
        %v978 = vunpack.c.0.s8 %v977
        %v979 = vperm.slane %v971, %v978
        %v980 = vrot.slane %v951, 4
        %v981 = vsel %vm344, %v980, %v939
        %v982 = vrot.slane %v939, 4
        %v983 = vsel %vm344, %v951, %v982
        %v985 = vunpack.c.l.s4 1934713408
        %v986 = vunpack.c.0.s8 %v985
        %v987 = vperm.slane %v981, %v986
        %v989 = vunpack.c.l.s4 1934713408
        %v990 = vunpack.c.0.s8 %v989
        %v991 = vperm.slane %v983, %v990
        %v992 = vrot.slane %v955, 4
        %v993 = vsel %vm344, %v992, %v943
        %v994 = vrot.slane %v943, 4
        %v995 = vsel %vm344, %v955, %v994
        %v997 = vunpack.c.l.s4 1934713408
        %v998 = vunpack.c.0.s8 %v997
        %v999 = vperm.slane %v993, %v998
        %v1001 = vunpack.c.l.s4 1934713408
        %v1002 = vunpack.c.0.s8 %v1001
        %v1003 = vperm.slane %v995, %v1002
        %v1004 = vrot.slane %v987, 4
        %v1005 = vsel %vm344, %v1004, %v963
        %v1006 = vrot.slane %v963, 4
        %v1007 = vsel %vm344, %v987, %v1006
        %v1008 = vrot.slane %v991, 4
        %v1009 = vsel %vm344, %v1008, %v967
        %v1010 = vrot.slane %v967, 4
        %v1011 = vsel %vm344, %v991, %v1010
        %v1012 = vrot.slane %v999, 4
        %v1013 = vsel %vm344, %v1012, %v975
        %v1014 = vrot.slane %v975, 4
        %v1015 = vsel %vm344, %v999, %v1014
        %v1016 = vrot.slane %v1003, 4
        %v1017 = vsel %vm344, %v1016, %v979
        %v1018 = vrot.slane %v979, 4
        %v1019 = vsel %vm344, %v1003, %v1018
        %1020 = vxpose.xlu0.b32.start [1/16] %v1005, 128
        %1021 = vxpose.xlu0.b32.cont [2/16] 0.0, 128
        %1022 = vxpose.xlu0.b32.cont [3/16] 0.0, 128
        %1023 = vxpose.xlu0.b32.cont [4/16] 0.0, 128
        %1024 = vxpose.xlu0.b32.cont [5/16] 0.0, 128
        %1025 = vxpose.xlu0.b32.cont [6/16] 0.0, 128
        %1026 = vxpose.xlu0.b32.cont [7/16] 0.0, 128
        %1027 = vxpose.xlu0.b32.cont [8/16] 0.0, 128
        %1028 = vxpose.xlu0.b32.cont [9/16] 0.0, 128
        %1029 = vxpose.xlu0.b32.cont [10/16] 0.0, 128
        %1030 = vxpose.xlu0.b32.cont [11/16] 0.0, 128
        %1031 = vxpose.xlu0.b32.cont [12/16] 0.0, 128
        %1032 = vxpose.xlu0.b32.cont [13/16] 0.0, 128
        %1033 = vxpose.xlu0.b32.cont [14/16] 0.0, 128
        %1034 = vxpose.xlu0.b32.cont [15/16] 0.0, 128
        %1035 = vxpose.xlu0.b32.end [16/16] 0.0, 128
        %v1036 = vpop.trf.xlu0
        %v1037 = vpop.trf.xlu0
        %v1038 = vpop.trf.xlu0
        %v1039 = vpop.trf.xlu0
        %v1040 = vpop.trf.xlu0
        %v1041 = vpop.trf.xlu0
        %v1042 = vpop.trf.xlu0
        %v1043 = vpop.trf.xlu0
        %v1044 = vpop.trf.xlu0
        %v1045 = vpop.trf.xlu0
        %v1046 = vpop.trf.xlu0
        %v1047 = vpop.trf.xlu0
        %v1048 = vpop.trf.xlu0
        %v1049 = vpop.trf.xlu0
        %v1050 = vpop.trf.xlu0
        %v1051 = vpop.trf.xlu0
        %1052 = vxpose.xlu0.b32.start [1/16] %v1007, 128
        %1053 = vxpose.xlu0.b32.cont [2/16] 0.0, 128
        %1054 = vxpose.xlu0.b32.cont [3/16] 0.0, 128
        %1055 = vxpose.xlu0.b32.cont [4/16] 0.0, 128
        %1056 = vxpose.xlu0.b32.cont [5/16] 0.0, 128
        %1057 = vxpose.xlu0.b32.cont [6/16] 0.0, 128
        %1058 = vxpose.xlu0.b32.cont [7/16] 0.0, 128
        %1059 = vxpose.xlu0.b32.cont [8/16] 0.0, 128
        %1060 = vxpose.xlu0.b32.cont [9/16] 0.0, 128
        %1061 = vxpose.xlu0.b32.cont [10/16] 0.0, 128
        %1062 = vxpose.xlu0.b32.cont [11/16] 0.0, 128
        %1063 = vxpose.xlu0.b32.cont [12/16] 0.0, 128
        %1064 = vxpose.xlu0.b32.cont [13/16] 0.0, 128
        %1065 = vxpose.xlu0.b32.cont [14/16] 0.0, 128
        %1066 = vxpose.xlu0.b32.cont [15/16] 0.0, 128
        %1067 = vxpose.xlu0.b32.end [16/16] 0.0, 128
        %v1068 = vpop.trf.xlu0
        %v1069 = vpop.trf.xlu0
        %v1070 = vpop.trf.xlu0
        %v1071 = vpop.trf.xlu0
        %v1072 = vpop.trf.xlu0
        %v1073 = vpop.trf.xlu0
        %v1074 = vpop.trf.xlu0
        %v1075 = vpop.trf.xlu0
        %v1076 = vpop.trf.xlu0
        %v1077 = vpop.trf.xlu0
        %v1078 = vpop.trf.xlu0
        %v1079 = vpop.trf.xlu0
        %v1080 = vpop.trf.xlu0
        %v1081 = vpop.trf.xlu0
        %v1082 = vpop.trf.xlu0
        %v1083 = vpop.trf.xlu0
        %1084 = vxpose.xlu0.b32.start [1/16] %v1009, 128
        %1085 = vxpose.xlu0.b32.cont [2/16] 0.0, 128
        %1086 = vxpose.xlu0.b32.cont [3/16] 0.0, 128
        %1087 = vxpose.xlu0.b32.cont [4/16] 0.0, 128
        %1088 = vxpose.xlu0.b32.cont [5/16] 0.0, 128
        %1089 = vxpose.xlu0.b32.cont [6/16] 0.0, 128
        %1090 = vxpose.xlu0.b32.cont [7/16] 0.0, 128
        %1091 = vxpose.xlu0.b32.cont [8/16] 0.0, 128
        %1092 = vxpose.xlu0.b32.cont [9/16] 0.0, 128
        %1093 = vxpose.xlu0.b32.cont [10/16] 0.0, 128
        %1094 = vxpose.xlu0.b32.cont [11/16] 0.0, 128
        %1095 = vxpose.xlu0.b32.cont [12/16] 0.0, 128
        %1096 = vxpose.xlu0.b32.cont [13/16] 0.0, 128
        %1097 = vxpose.xlu0.b32.cont [14/16] 0.0, 128
        %1098 = vxpose.xlu0.b32.cont [15/16] 0.0, 128
        %1099 = vxpose.xlu0.b32.end [16/16] 0.0, 128
        %v1100 = vpop.trf.xlu0
        %v1101 = vpop.trf.xlu0
        %v1102 = vpop.trf.xlu0
        %v1103 = vpop.trf.xlu0
        %v1104 = vpop.trf.xlu0
        %v1105 = vpop.trf.xlu0
        %v1106 = vpop.trf.xlu0
        %v1107 = vpop.trf.xlu0
        %v1108 = vpop.trf.xlu0
        %v1109 = vpop.trf.xlu0
        %v1110 = vpop.trf.xlu0
        %v1111 = vpop.trf.xlu0
        %v1112 = vpop.trf.xlu0
        %v1113 = vpop.trf.xlu0
        %v1114 = vpop.trf.xlu0
        %v1115 = vpop.trf.xlu0
        %1116 = vxpose.xlu0.b32.start [1/16] %v1011, 128
        %1117 = vxpose.xlu0.b32.cont [2/16] 0.0, 128
        %1118 = vxpose.xlu0.b32.cont [3/16] 0.0, 128
        %1119 = vxpose.xlu0.b32.cont [4/16] 0.0, 128
        %1120 = vxpose.xlu0.b32.cont [5/16] 0.0, 128
        %1121 = vxpose.xlu0.b32.cont [6/16] 0.0, 128
        %1122 = vxpose.xlu0.b32.cont [7/16] 0.0, 128
        %1123 = vxpose.xlu0.b32.cont [8/16] 0.0, 128
        %1124 = vxpose.xlu0.b32.cont [9/16] 0.0, 128
        %1125 = vxpose.xlu0.b32.cont [10/16] 0.0, 128
        %1126 = vxpose.xlu0.b32.cont [11/16] 0.0, 128
        %1127 = vxpose.xlu0.b32.cont [12/16] 0.0, 128
        %1128 = vxpose.xlu0.b32.cont [13/16] 0.0, 128
        %1129 = vxpose.xlu0.b32.cont [14/16] 0.0, 128
        %1130 = vxpose.xlu0.b32.cont [15/16] 0.0, 128
        %1131 = vxpose.xlu0.b32.end [16/16] 0.0, 128
        %v1132 = vpop.trf.xlu0
        %v1133 = vpop.trf.xlu0
        %v1134 = vpop.trf.xlu0
        %v1135 = vpop.trf.xlu0
        %v1136 = vpop.trf.xlu0
        %v1137 = vpop.trf.xlu0
        %v1138 = vpop.trf.xlu0
        %v1139 = vpop.trf.xlu0
        %v1140 = vpop.trf.xlu0
        %v1141 = vpop.trf.xlu0
        %v1142 = vpop.trf.xlu0
        %v1143 = vpop.trf.xlu0
        %v1144 = vpop.trf.xlu0
        %v1145 = vpop.trf.xlu0
        %v1146 = vpop.trf.xlu0
        %v1147 = vpop.trf.xlu0
        %1148 = vxpose.xlu0.b32.start [1/16] %v1013, 128
        %1149 = vxpose.xlu0.b32.cont [2/16] 0.0, 128
        %1150 = vxpose.xlu0.b32.cont [3/16] 0.0, 128
        %1151 = vxpose.xlu0.b32.cont [4/16] 0.0, 128
        %1152 = vxpose.xlu0.b32.cont [5/16] 0.0, 128
        %1153 = vxpose.xlu0.b32.cont [6/16] 0.0, 128
        %1154 = vxpose.xlu0.b32.cont [7/16] 0.0, 128
        %1155 = vxpose.xlu0.b32.cont [8/16] 0.0, 128
        %1156 = vxpose.xlu0.b32.cont [9/16] 0.0, 128
        %1157 = vxpose.xlu0.b32.cont [10/16] 0.0, 128
        %1158 = vxpose.xlu0.b32.cont [11/16] 0.0, 128
        %1159 = vxpose.xlu0.b32.cont [12/16] 0.0, 128
        %1160 = vxpose.xlu0.b32.cont [13/16] 0.0, 128
        %1161 = vxpose.xlu0.b32.cont [14/16] 0.0, 128
        %1162 = vxpose.xlu0.b32.cont [15/16] 0.0, 128
        %1163 = vxpose.xlu0.b32.end [16/16] 0.0, 128
        %v1164 = vpop.trf.xlu0
        %v1165 = vpop.trf.xlu0
        %v1166 = vpop.trf.xlu0
        %v1167 = vpop.trf.xlu0
        %v1168 = vpop.trf.xlu0
        %v1169 = vpop.trf.xlu0
        %v1170 = vpop.trf.xlu0
        %v1171 = vpop.trf.xlu0
        %v1172 = vpop.trf.xlu0
        %v1173 = vpop.trf.xlu0
        %v1174 = vpop.trf.xlu0
        %v1175 = vpop.trf.xlu0
        %v1176 = vpop.trf.xlu0
        %v1177 = vpop.trf.xlu0
        %v1178 = vpop.trf.xlu0
        %v1179 = vpop.trf.xlu0
        %1180 = vxpose.xlu0.b32.start [1/16] %v1015, 128
        %1181 = vxpose.xlu0.b32.cont [2/16] 0.0, 128
        %1182 = vxpose.xlu0.b32.cont [3/16] 0.0, 128
        %1183 = vxpose.xlu0.b32.cont [4/16] 0.0, 128
        %1184 = vxpose.xlu0.b32.cont [5/16] 0.0, 128
        %1185 = vxpose.xlu0.b32.cont [6/16] 0.0, 128
        %1186 = vxpose.xlu0.b32.cont [7/16] 0.0, 128
        %1187 = vxpose.xlu0.b32.cont [8/16] 0.0, 128
        %1188 = vxpose.xlu0.b32.cont [9/16] 0.0, 128
        %1189 = vxpose.xlu0.b32.cont [10/16] 0.0, 128
        %1190 = vxpose.xlu0.b32.cont [11/16] 0.0, 128
        %1191 = vxpose.xlu0.b32.cont [12/16] 0.0, 128
        %1192 = vxpose.xlu0.b32.cont [13/16] 0.0, 128
        %1193 = vxpose.xlu0.b32.cont [14/16] 0.0, 128
        %1194 = vxpose.xlu0.b32.cont [15/16] 0.0, 128
        %1195 = vxpose.xlu0.b32.end [16/16] 0.0, 128
        %v1196 = vpop.trf.xlu0
        %v1197 = vpop.trf.xlu0
        %v1198 = vpop.trf.xlu0
        %v1199 = vpop.trf.xlu0
        %v1200 = vpop.trf.xlu0
        %v1201 = vpop.trf.xlu0
        %v1202 = vpop.trf.xlu0
        %v1203 = vpop.trf.xlu0
        %v1204 = vpop.trf.xlu0
        %v1205 = vpop.trf.xlu0
        %v1206 = vpop.trf.xlu0
        %v1207 = vpop.trf.xlu0
        %v1208 = vpop.trf.xlu0
        %v1209 = vpop.trf.xlu0
        %v1210 = vpop.trf.xlu0
        %v1211 = vpop.trf.xlu0
        %1212 = vxpose.xlu0.b32.start [1/16] %v1017, 128
        %1213 = vxpose.xlu0.b32.cont [2/16] 0.0, 128
        %1214 = vxpose.xlu0.b32.cont [3/16] 0.0, 128
        %1215 = vxpose.xlu0.b32.cont [4/16] 0.0, 128
        %1216 = vxpose.xlu0.b32.cont [5/16] 0.0, 128
        %1217 = vxpose.xlu0.b32.cont [6/16] 0.0, 128
        %1218 = vxpose.xlu0.b32.cont [7/16] 0.0, 128
        %1219 = vxpose.xlu0.b32.cont [8/16] 0.0, 128
        %1220 = vxpose.xlu0.b32.cont [9/16] 0.0, 128
        %1221 = vxpose.xlu0.b32.cont [10/16] 0.0, 128
        %1222 = vxpose.xlu0.b32.cont [11/16] 0.0, 128
        %1223 = vxpose.xlu0.b32.cont [12/16] 0.0, 128
        %1224 = vxpose.xlu0.b32.cont [13/16] 0.0, 128
        %1225 = vxpose.xlu0.b32.cont [14/16] 0.0, 128
        %1226 = vxpose.xlu0.b32.cont [15/16] 0.0, 128
        %1227 = vxpose.xlu0.b32.end [16/16] 0.0, 128
        %v1228 = vpop.trf.xlu0
        %v1229 = vpop.trf.xlu0
        %v1230 = vpop.trf.xlu0
        %v1231 = vpop.trf.xlu0
        %v1232 = vpop.trf.xlu0
        %v1233 = vpop.trf.xlu0
        %v1234 = vpop.trf.xlu0
        %v1235 = vpop.trf.xlu0
        %v1236 = vpop.trf.xlu0
        %v1237 = vpop.trf.xlu0
        %v1238 = vpop.trf.xlu0
        %v1239 = vpop.trf.xlu0
        %v1240 = vpop.trf.xlu0
        %v1241 = vpop.trf.xlu0
        %v1242 = vpop.trf.xlu0
        %v1243 = vpop.trf.xlu0
        %1244 = vxpose.xlu0.b32.start [1/16] %v1019, 128
        %1245 = vxpose.xlu0.b32.cont [2/16] 0.0, 128
        %1246 = vxpose.xlu0.b32.cont [3/16] 0.0, 128
        %1247 = vxpose.xlu0.b32.cont [4/16] 0.0, 128
        %1248 = vxpose.xlu0.b32.cont [5/16] 0.0, 128
        %1249 = vxpose.xlu0.b32.cont [6/16] 0.0, 128
        %1250 = vxpose.xlu0.b32.cont [7/16] 0.0, 128
        %1251 = vxpose.xlu0.b32.cont [8/16] 0.0, 128
        %1252 = vxpose.xlu0.b32.cont [9/16] 0.0, 128
        %1253 = vxpose.xlu0.b32.cont [10/16] 0.0, 128
        %1254 = vxpose.xlu0.b32.cont [11/16] 0.0, 128
        %1255 = vxpose.xlu0.b32.cont [12/16] 0.0, 128
        %1256 = vxpose.xlu0.b32.cont [13/16] 0.0, 128
        %1257 = vxpose.xlu0.b32.cont [14/16] 0.0, 128
        %1258 = vxpose.xlu0.b32.cont [15/16] 0.0, 128
        %1259 = vxpose.xlu0.b32.end [16/16] 0.0, 128
        %v1260 = vpop.trf.xlu0
        %v1261 = vpop.trf.xlu0
        %v1262 = vpop.trf.xlu0
        %v1263 = vpop.trf.xlu0
        %v1264 = vpop.trf.xlu0
        %v1265 = vpop.trf.xlu0
        %v1266 = vpop.trf.xlu0
        %v1267 = vpop.trf.xlu0
        %v1268 = vpop.trf.xlu0
        %v1269 = vpop.trf.xlu0
        %v1270 = vpop.trf.xlu0
        %v1271 = vpop.trf.xlu0
        %v1272 = vpop.trf.xlu0
        %v1273 = vpop.trf.xlu0
        %v1274 = vpop.trf.xlu0
        %v1275 = vpop.trf.xlu0
        %v1276 = vrot.slane %v1100, 4
        %v1277 = vsel %vm344, %v1276, %v1036
        %v1278 = vrot.slane %v1036, 4
        %v1279 = vsel %vm344, %v1100, %v1278
        %v1281 = vunpack.c.l.s4 1983009808
        %v1282 = vunpack.c.0.s8 %v1281
        %v1283 = vperm.slane %v1277, %v1282
        %v1285 = vunpack.c.l.s4 1983009808
        %v1286 = vunpack.c.0.s8 %v1285
        %v1287 = vperm.slane %v1279, %v1286
        %v1288 = vrot.slane %v1132, 4
        %v1289 = vsel %vm344, %v1288, %v1068
        %v1290 = vrot.slane %v1068, 4
        %v1291 = vsel %vm344, %v1132, %v1290
        %v1293 = vunpack.c.l.s4 1983009808
        %v1294 = vunpack.c.0.s8 %v1293
        %v1295 = vperm.slane %v1289, %v1294
        %v1297 = vunpack.c.l.s4 1983009808
        %v1298 = vunpack.c.0.s8 %v1297
        %v1299 = vperm.slane %v1291, %v1298
        %v1300 = vrot.slane %v1228, 4
        %v1301 = vsel %vm344, %v1300, %v1164
        %v1302 = vrot.slane %v1164, 4
        %v1303 = vsel %vm344, %v1228, %v1302
        %v1305 = vunpack.c.l.s4 1983009808
        %v1306 = vunpack.c.0.s8 %v1305
        %v1307 = vperm.slane %v1301, %v1306
        %v1309 = vunpack.c.l.s4 1983009808
        %v1310 = vunpack.c.0.s8 %v1309
        %v1311 = vperm.slane %v1303, %v1310
        %v1312 = vrot.slane %v1260, 4
        %v1313 = vsel %vm344, %v1312, %v1196
        %v1314 = vrot.slane %v1196, 4
        %v1315 = vsel %vm344, %v1260, %v1314
        %v1317 = vunpack.c.l.s4 1983009808
        %v1318 = vunpack.c.0.s8 %v1317
        %v1319 = vperm.slane %v1313, %v1318
        %v1321 = vunpack.c.l.s4 1983009808
        %v1322 = vunpack.c.0.s8 %v1321
        %v1323 = vperm.slane %v1315, %v1322
        %v1324 = vrot.slane %v1295, 4
        %v1325 = vsel %vm344, %v1324, %v1283
        %v1326 = vrot.slane %v1283, 4
        %v1327 = vsel %vm344, %v1295, %v1326
        %v1329 = vunpack.c.l.s4 1934713408
        %v1330 = vunpack.c.0.s8 %v1329
        %v1331 = vperm.slane %v1325, %v1330
        %v1333 = vunpack.c.l.s4 1934713408
        %v1334 = vunpack.c.0.s8 %v1333
        %v1335 = vperm.slane %v1327, %v1334
        %v1336 = vrot.slane %v1299, 4
        %v1337 = vsel %vm344, %v1336, %v1287
        %v1338 = vrot.slane %v1287, 4
        %v1339 = vsel %vm344, %v1299, %v1338
        %v1341 = vunpack.c.l.s4 1934713408
        %v1342 = vunpack.c.0.s8 %v1341
        %v1343 = vperm.slane %v1337, %v1342
        %v1345 = vunpack.c.l.s4 1934713408
        %v1346 = vunpack.c.0.s8 %v1345
        %v1347 = vperm.slane %v1339, %v1346
        %v1348 = vrot.slane %v1319, 4
        %v1349 = vsel %vm344, %v1348, %v1307
        %v1350 = vrot.slane %v1307, 4
        %v1351 = vsel %vm344, %v1319, %v1350
        %v1353 = vunpack.c.l.s4 1934713408
        %v1354 = vunpack.c.0.s8 %v1353
        %v1355 = vperm.slane %v1349, %v1354
        %v1357 = vunpack.c.l.s4 1934713408
        %v1358 = vunpack.c.0.s8 %v1357
        %v1359 = vperm.slane %v1351, %v1358
        %v1360 = vrot.slane %v1323, 4
        %v1361 = vsel %vm344, %v1360, %v1311
        %v1362 = vrot.slane %v1311, 4
        %v1363 = vsel %vm344, %v1323, %v1362
        %v1365 = vunpack.c.l.s4 1934713408
        %v1366 = vunpack.c.0.s8 %v1365
        %v1367 = vperm.slane %v1361, %v1366
        %v1369 = vunpack.c.l.s4 1934713408
        %v1370 = vunpack.c.0.s8 %v1369
        %v1371 = vperm.slane %v1363, %v1370
        %v1372 = vrot.slane %v1355, 4
        %v1373 = vsel %vm344, %v1372, %v1331
        %v1374 = vrot.slane %v1331, 4
        %v1375 = vsel %vm344, %v1355, %v1374
        %v1376 = vrot.slane %v1359, 4
        %v1377 = vsel %vm344, %v1376, %v1335
        %v1378 = vrot.slane %v1335, 4
        %v1379 = vsel %vm344, %v1359, %v1378
        %v1380 = vrot.slane %v1367, 4
        %v1381 = vsel %vm344, %v1380, %v1343
        %v1382 = vrot.slane %v1343, 4
        %v1383 = vsel %vm344, %v1367, %v1382
        %v1384 = vrot.slane %v1371, 4
        %v1385 = vsel %vm344, %v1384, %v1347
        %v1386 = vrot.slane %v1347, 4
        %v1387 = vsel %vm344, %v1371, %v1386
        %v1388 = vrot.slane %v1101, 4
        %v1389 = vsel %vm344, %v1388, %v1037
        %v1390 = vrot.slane %v1037, 4
        %v1391 = vsel %vm344, %v1101, %v1390
        %v1393 = vunpack.c.l.s4 1983009808
        %v1394 = vunpack.c.0.s8 %v1393
        %v1395 = vperm.slane %v1389, %v1394
        %v1397 = vunpack.c.l.s4 1983009808
        %v1398 = vunpack.c.0.s8 %v1397
        %v1399 = vperm.slane %v1391, %v1398
        %v1400 = vrot.slane %v1133, 4
        %v1401 = vsel %vm344, %v1400, %v1069
        %v1402 = vrot.slane %v1069, 4
        %v1403 = vsel %vm344, %v1133, %v1402
        %v1405 = vunpack.c.l.s4 1983009808
        %v1406 = vunpack.c.0.s8 %v1405
        %v1407 = vperm.slane %v1401, %v1406
        %v1409 = vunpack.c.l.s4 1983009808
        %v1410 = vunpack.c.0.s8 %v1409
        %v1411 = vperm.slane %v1403, %v1410
        %v1412 = vrot.slane %v1229, 4
        %v1413 = vsel %vm344, %v1412, %v1165
        %v1414 = vrot.slane %v1165, 4
        %v1415 = vsel %vm344, %v1229, %v1414
        %v1417 = vunpack.c.l.s4 1983009808
        %v1418 = vunpack.c.0.s8 %v1417
        %v1419 = vperm.slane %v1413, %v1418
        %v1421 = vunpack.c.l.s4 1983009808
        %v1422 = vunpack.c.0.s8 %v1421
        %v1423 = vperm.slane %v1415, %v1422
        %v1424 = vrot.slane %v1261, 4
        %v1425 = vsel %vm344, %v1424, %v1197
        %v1426 = vrot.slane %v1197, 4
        %v1427 = vsel %vm344, %v1261, %v1426
        %v1429 = vunpack.c.l.s4 1983009808
        %v1430 = vunpack.c.0.s8 %v1429
        %v1431 = vperm.slane %v1425, %v1430
        %v1433 = vunpack.c.l.s4 1983009808
        %v1434 = vunpack.c.0.s8 %v1433
        %v1435 = vperm.slane %v1427, %v1434
        %v1436 = vrot.slane %v1407, 4
        %v1437 = vsel %vm344, %v1436, %v1395
        %v1438 = vrot.slane %v1395, 4
        %v1439 = vsel %vm344, %v1407, %v1438
        %v1441 = vunpack.c.l.s4 1934713408
        %v1442 = vunpack.c.0.s8 %v1441
        %v1443 = vperm.slane %v1437, %v1442
        %v1445 = vunpack.c.l.s4 1934713408
        %v1446 = vunpack.c.0.s8 %v1445
        %v1447 = vperm.slane %v1439, %v1446
        %v1448 = vrot.slane %v1411, 4
        %v1449 = vsel %vm344, %v1448, %v1399
        %v1450 = vrot.slane %v1399, 4
        %v1451 = vsel %vm344, %v1411, %v1450
        %v1453 = vunpack.c.l.s4 1934713408
        %v1454 = vunpack.c.0.s8 %v1453
        %v1455 = vperm.slane %v1449, %v1454
        %v1457 = vunpack.c.l.s4 1934713408
        %v1458 = vunpack.c.0.s8 %v1457
        %v1459 = vperm.slane %v1451, %v1458
        %v1460 = vrot.slane %v1431, 4
        %v1461 = vsel %vm344, %v1460, %v1419
        %v1462 = vrot.slane %v1419, 4
        %v1463 = vsel %vm344, %v1431, %v1462
        %v1465 = vunpack.c.l.s4 1934713408
        %v1466 = vunpack.c.0.s8 %v1465
        %v1467 = vperm.slane %v1461, %v1466
        %v1469 = vunpack.c.l.s4 1934713408
        %v1470 = vunpack.c.0.s8 %v1469
        %v1471 = vperm.slane %v1463, %v1470
        %v1472 = vrot.slane %v1435, 4
        %v1473 = vsel %vm344, %v1472, %v1423
        %v1474 = vrot.slane %v1423, 4
        %v1475 = vsel %vm344, %v1435, %v1474
        %v1477 = vunpack.c.l.s4 1934713408
        %v1478 = vunpack.c.0.s8 %v1477
        %v1479 = vperm.slane %v1473, %v1478
        %v1481 = vunpack.c.l.s4 1934713408
        %v1482 = vunpack.c.0.s8 %v1481
        %v1483 = vperm.slane %v1475, %v1482
        %v1484 = vrot.slane %v1467, 4
        %v1485 = vsel %vm344, %v1484, %v1443
        %v1486 = vrot.slane %v1443, 4
        %v1487 = vsel %vm344, %v1467, %v1486
        %v1488 = vrot.slane %v1471, 4
        %v1489 = vsel %vm344, %v1488, %v1447
        %v1490 = vrot.slane %v1447, 4
        %v1491 = vsel %vm344, %v1471, %v1490
        %v1492 = vrot.slane %v1479, 4
        %v1493 = vsel %vm344, %v1492, %v1455
        %v1494 = vrot.slane %v1455, 4
        %v1495 = vsel %vm344, %v1479, %v1494
        %v1496 = vrot.slane %v1483, 4
        %v1497 = vsel %vm344, %v1496, %v1459
        %v1498 = vrot.slane %v1459, 4
        %v1499 = vsel %vm344, %v1483, %v1498
        %v1501 = vsel %vm484, %v1373, 0
        %v1504 = vsel %vm484, %v1375, 0
        %v1507 = vsel %vm484, %v1377, 0
        %v1510 = vsel %vm484, %v1379, 0
        %v1513 = vsel %vm484, %v1381, 0
        %v1516 = vsel %vm484, %v1383, 0
        %v1519 = vsel %vm484, %v1385, 0
        %v1522 = vsel %vm484, %v1387, 0
        %v1525 = vsel %vm484, %v1485, 0
        %v1528 = vsel %vm484, %v1487, 0
        %v1531 = vsel %vm484, %v1489, 0
        %v1534 = vsel %vm484, %v1491, 0
        %v1537 = vsel %vm484, %v1493, 0
        %v1540 = vsel %vm484, %v1495, 0
        %v1543 = vsel %vm484, %v1497, 0
        %v1546 = vsel %vm484, %v1499, 0
        %v1549 = vsel %vm484, %v650, 0
        %v1552 = vsel %vm484, %v651, 0
        %1554 = vmatpush.xpose.msra.mxu0 0.0
        %1555 = vmatpush.xpose.msra.mxu0 0.0
        %1556 = vmatpush.xpose.msra.mxu0 0.0
        %1557 = vmatpush.xpose.msra.mxu0 0.0
        %1558 = vmatpush.xpose.msra.mxu0 0.0
        %1559 = vmatpush.xpose.msra.mxu0 0.0
        %1560 = vmatpush.xpose.msra.mxu0 0.0
        %1561 = vmatpush.xpose.msra.mxu0 0.0
        %1562 = vmatpush.xpose.msra.mxu0 0.0
        %1563 = vmatpush.xpose.msra.mxu0 0.0
        %1564 = vmatpush.xpose.msra.mxu0 0.0
        %1565 = vmatpush.xpose.msra.mxu0 0.0
        %1566 = vmatpush.xpose.msra.mxu0 0.0
        %1567 = vmatpush.xpose.msra.mxu0 0.0
        %1568 = vmatpush.xpose.msra.mxu0 %v1552
        %1569 = vmatpush.xpose.msra.mxu0 %v1549
        %1570 = vmatmul.f32.gmra.mxu0 %v1501
        %v1571 = vpop.f32.mrf.mxu0
        %v1572 = vadd.f32 0.0, %v1571
        %1573 = vmatmul.f32.gmra.mxu0 %v1504
        %v1574 = vpop.f32.mrf.mxu0
        %v1575 = vadd.f32 0.0, %v1574
        %1576 = vmatmul.f32.gmra.mxu0 %v1507
        %v1577 = vpop.f32.mrf.mxu0
        %v1578 = vadd.f32 0.0, %v1577
        %1579 = vmatmul.f32.gmra.mxu0 %v1510
        %v1580 = vpop.f32.mrf.mxu0
        %v1581 = vadd.f32 0.0, %v1580
        %1582 = vmatmul.f32.gmra.mxu0 %v1513
        %v1583 = vpop.f32.mrf.mxu0
        %v1584 = vadd.f32 0.0, %v1583
        %1585 = vmatmul.f32.gmra.mxu0 %v1516
        %v1586 = vpop.f32.mrf.mxu0
        %v1587 = vadd.f32 0.0, %v1586
        %1588 = vmatmul.f32.gmra.mxu0 %v1519
        %v1589 = vpop.f32.mrf.mxu0
        %v1590 = vadd.f32 0.0, %v1589
        %1591 = vmatmul.f32.gmra.mxu0 %v1522
        %v1592 = vpop.f32.mrf.mxu0
        %v1593 = vadd.f32 0.0, %v1592
        %1594 = vmatmul.f32.gmra.mxu0 %v1525
        %v1595 = vpop.f32.mrf.mxu0
        %v1596 = vadd.f32 0.0, %v1595
        %1597 = vmatmul.f32.gmra.mxu0 %v1528
        %v1598 = vpop.f32.mrf.mxu0
        %v1599 = vadd.f32 0.0, %v1598
        %1600 = vmatmul.f32.gmra.mxu0 %v1531
        %v1601 = vpop.f32.mrf.mxu0
        %v1602 = vadd.f32 0.0, %v1601
        %1603 = vmatmul.f32.gmra.mxu0 %v1534
        %v1604 = vpop.f32.mrf.mxu0
        %v1605 = vadd.f32 0.0, %v1604
        %1606 = vmatmul.f32.gmra.mxu0 %v1537
        %v1607 = vpop.f32.mrf.mxu0
        %v1608 = vadd.f32 0.0, %v1607
        %1609 = vmatmul.f32.gmra.mxu0 %v1540
        %v1610 = vpop.f32.mrf.mxu0
        %v1611 = vadd.f32 0.0, %v1610
        %1612 = vmatmul.f32.gmra.mxu0 %v1543
        %v1613 = vpop.f32.mrf.mxu0
        %v1614 = vadd.f32 0.0, %v1613
        %1615 = vmatmul.f32.gmra.mxu0 %v1546
        %v1616 = vpop.f32.mrf.mxu0
        %v1617 = vadd.f32 0.0, %v1616
        %1618 = vdwg.mxu0
        %1619 = vxpose.xlu0.b32.start [1/16] %v1572, 128
        %1620 = vxpose.xlu0.b32.cont [2/16] 0.0, 128
        %1621 = vxpose.xlu0.b32.cont [3/16] 0.0, 128
        %1622 = vxpose.xlu0.b32.cont [4/16] 0.0, 128
        %1623 = vxpose.xlu0.b32.cont [5/16] 0.0, 128
        %1624 = vxpose.xlu0.b32.cont [6/16] 0.0, 128
        %1625 = vxpose.xlu0.b32.cont [7/16] 0.0, 128
        %1626 = vxpose.xlu0.b32.cont [8/16] 0.0, 128
        %1627 = vxpose.xlu0.b32.cont [9/16] 0.0, 128
        %1628 = vxpose.xlu0.b32.cont [10/16] 0.0, 128
        %1629 = vxpose.xlu0.b32.cont [11/16] 0.0, 128
        %1630 = vxpose.xlu0.b32.cont [12/16] 0.0, 128
        %1631 = vxpose.xlu0.b32.cont [13/16] 0.0, 128
        %1632 = vxpose.xlu0.b32.cont [14/16] 0.0, 128
        %1633 = vxpose.xlu0.b32.cont [15/16] 0.0, 128
        %1634 = vxpose.xlu0.b32.end [16/16] 0.0, 128
        %v1635 = vpop.trf.xlu0
        %v1636 = vpop.trf.xlu0
        %v1637 = vpop.trf.xlu0
        %v1638 = vpop.trf.xlu0
        %v1639 = vpop.trf.xlu0
        %v1640 = vpop.trf.xlu0
        %v1641 = vpop.trf.xlu0
        %v1642 = vpop.trf.xlu0
        %v1643 = vpop.trf.xlu0
        %v1644 = vpop.trf.xlu0
        %v1645 = vpop.trf.xlu0
        %v1646 = vpop.trf.xlu0
        %v1647 = vpop.trf.xlu0
        %v1648 = vpop.trf.xlu0
        %v1649 = vpop.trf.xlu0
        %v1650 = vpop.trf.xlu0
        %1651 = vxpose.xlu0.b32.start [1/16] %v1575, 128
        %1652 = vxpose.xlu0.b32.cont [2/16] 0.0, 128
        %1653 = vxpose.xlu0.b32.cont [3/16] 0.0, 128
        %1654 = vxpose.xlu0.b32.cont [4/16] 0.0, 128
        %1655 = vxpose.xlu0.b32.cont [5/16] 0.0, 128
        %1656 = vxpose.xlu0.b32.cont [6/16] 0.0, 128
        %1657 = vxpose.xlu0.b32.cont [7/16] 0.0, 128
        %1658 = vxpose.xlu0.b32.cont [8/16] 0.0, 128
        %1659 = vxpose.xlu0.b32.cont [9/16] 0.0, 128
        %1660 = vxpose.xlu0.b32.cont [10/16] 0.0, 128
        %1661 = vxpose.xlu0.b32.cont [11/16] 0.0, 128
        %1662 = vxpose.xlu0.b32.cont [12/16] 0.0, 128
        %1663 = vxpose.xlu0.b32.cont [13/16] 0.0, 128
        %1664 = vxpose.xlu0.b32.cont [14/16] 0.0, 128
        %1665 = vxpose.xlu0.b32.cont [15/16] 0.0, 128
        %1666 = vxpose.xlu0.b32.end [16/16] 0.0, 128
        %v1667 = vpop.trf.xlu0
        %v1668 = vpop.trf.xlu0
        %v1669 = vpop.trf.xlu0
        %v1670 = vpop.trf.xlu0
        %v1671 = vpop.trf.xlu0
        %v1672 = vpop.trf.xlu0
        %v1673 = vpop.trf.xlu0
        %v1674 = vpop.trf.xlu0
        %v1675 = vpop.trf.xlu0
        %v1676 = vpop.trf.xlu0
        %v1677 = vpop.trf.xlu0
        %v1678 = vpop.trf.xlu0
        %v1679 = vpop.trf.xlu0
        %v1680 = vpop.trf.xlu0
        %v1681 = vpop.trf.xlu0
        %v1682 = vpop.trf.xlu0
        %1683 = vxpose.xlu0.b32.start [1/16] %v1578, 128
        %1684 = vxpose.xlu0.b32.cont [2/16] 0.0, 128
        %1685 = vxpose.xlu0.b32.cont [3/16] 0.0, 128
        %1686 = vxpose.xlu0.b32.cont [4/16] 0.0, 128
        %1687 = vxpose.xlu0.b32.cont [5/16] 0.0, 128
        %1688 = vxpose.xlu0.b32.cont [6/16] 0.0, 128
        %1689 = vxpose.xlu0.b32.cont [7/16] 0.0, 128
        %1690 = vxpose.xlu0.b32.cont [8/16] 0.0, 128
        %1691 = vxpose.xlu0.b32.cont [9/16] 0.0, 128
        %1692 = vxpose.xlu0.b32.cont [10/16] 0.0, 128
        %1693 = vxpose.xlu0.b32.cont [11/16] 0.0, 128
        %1694 = vxpose.xlu0.b32.cont [12/16] 0.0, 128
        %1695 = vxpose.xlu0.b32.cont [13/16] 0.0, 128
        %1696 = vxpose.xlu0.b32.cont [14/16] 0.0, 128
        %1697 = vxpose.xlu0.b32.cont [15/16] 0.0, 128
        %1698 = vxpose.xlu0.b32.end [16/16] 0.0, 128
        %v1699 = vpop.trf.xlu0
        %v1700 = vpop.trf.xlu0
        %v1701 = vpop.trf.xlu0
        %v1702 = vpop.trf.xlu0
        %v1703 = vpop.trf.xlu0
        %v1704 = vpop.trf.xlu0
        %v1705 = vpop.trf.xlu0
        %v1706 = vpop.trf.xlu0
        %v1707 = vpop.trf.xlu0
        %v1708 = vpop.trf.xlu0
        %v1709 = vpop.trf.xlu0
        %v1710 = vpop.trf.xlu0
        %v1711 = vpop.trf.xlu0
        %v1712 = vpop.trf.xlu0
        %v1713 = vpop.trf.xlu0
        %v1714 = vpop.trf.xlu0
        %1715 = vxpose.xlu0.b32.start [1/16] %v1581, 128
        %1716 = vxpose.xlu0.b32.cont [2/16] 0.0, 128
        %1717 = vxpose.xlu0.b32.cont [3/16] 0.0, 128
        %1718 = vxpose.xlu0.b32.cont [4/16] 0.0, 128
        %1719 = vxpose.xlu0.b32.cont [5/16] 0.0, 128
        %1720 = vxpose.xlu0.b32.cont [6/16] 0.0, 128
        %1721 = vxpose.xlu0.b32.cont [7/16] 0.0, 128
        %1722 = vxpose.xlu0.b32.cont [8/16] 0.0, 128
        %1723 = vxpose.xlu0.b32.cont [9/16] 0.0, 128
        %1724 = vxpose.xlu0.b32.cont [10/16] 0.0, 128
        %1725 = vxpose.xlu0.b32.cont [11/16] 0.0, 128
        %1726 = vxpose.xlu0.b32.cont [12/16] 0.0, 128
        %1727 = vxpose.xlu0.b32.cont [13/16] 0.0, 128
        %1728 = vxpose.xlu0.b32.cont [14/16] 0.0, 128
        %1729 = vxpose.xlu0.b32.cont [15/16] 0.0, 128
        %1730 = vxpose.xlu0.b32.end [16/16] 0.0, 128
        %v1731 = vpop.trf.xlu0
        %v1732 = vpop.trf.xlu0
        %v1733 = vpop.trf.xlu0
        %v1734 = vpop.trf.xlu0
        %v1735 = vpop.trf.xlu0
        %v1736 = vpop.trf.xlu0
        %v1737 = vpop.trf.xlu0
        %v1738 = vpop.trf.xlu0
        %v1739 = vpop.trf.xlu0
        %v1740 = vpop.trf.xlu0
        %v1741 = vpop.trf.xlu0
        %v1742 = vpop.trf.xlu0
        %v1743 = vpop.trf.xlu0
        %v1744 = vpop.trf.xlu0
        %v1745 = vpop.trf.xlu0
        %v1746 = vpop.trf.xlu0
        %1747 = vxpose.xlu0.b32.start [1/16] %v1584, 128
        %1748 = vxpose.xlu0.b32.cont [2/16] 0.0, 128
        %1749 = vxpose.xlu0.b32.cont [3/16] 0.0, 128
        %1750 = vxpose.xlu0.b32.cont [4/16] 0.0, 128
        %1751 = vxpose.xlu0.b32.cont [5/16] 0.0, 128
        %1752 = vxpose.xlu0.b32.cont [6/16] 0.0, 128
        %1753 = vxpose.xlu0.b32.cont [7/16] 0.0, 128
        %1754 = vxpose.xlu0.b32.cont [8/16] 0.0, 128
        %1755 = vxpose.xlu0.b32.cont [9/16] 0.0, 128
        %1756 = vxpose.xlu0.b32.cont [10/16] 0.0, 128
        %1757 = vxpose.xlu0.b32.cont [11/16] 0.0, 128
        %1758 = vxpose.xlu0.b32.cont [12/16] 0.0, 128
        %1759 = vxpose.xlu0.b32.cont [13/16] 0.0, 128
        %1760 = vxpose.xlu0.b32.cont [14/16] 0.0, 128
        %1761 = vxpose.xlu0.b32.cont [15/16] 0.0, 128
        %1762 = vxpose.xlu0.b32.end [16/16] 0.0, 128
        %v1763 = vpop.trf.xlu0
        %v1764 = vpop.trf.xlu0
        %v1765 = vpop.trf.xlu0
        %v1766 = vpop.trf.xlu0
        %v1767 = vpop.trf.xlu0
        %v1768 = vpop.trf.xlu0
        %v1769 = vpop.trf.xlu0
        %v1770 = vpop.trf.xlu0
        %v1771 = vpop.trf.xlu0
        %v1772 = vpop.trf.xlu0
        %v1773 = vpop.trf.xlu0
        %v1774 = vpop.trf.xlu0
        %v1775 = vpop.trf.xlu0
        %v1776 = vpop.trf.xlu0
        %v1777 = vpop.trf.xlu0
        %v1778 = vpop.trf.xlu0
        %1779 = vxpose.xlu0.b32.start [1/16] %v1587, 128
        %1780 = vxpose.xlu0.b32.cont [2/16] 0.0, 128
        %1781 = vxpose.xlu0.b32.cont [3/16] 0.0, 128
        %1782 = vxpose.xlu0.b32.cont [4/16] 0.0, 128
        %1783 = vxpose.xlu0.b32.cont [5/16] 0.0, 128
        %1784 = vxpose.xlu0.b32.cont [6/16] 0.0, 128
        %1785 = vxpose.xlu0.b32.cont [7/16] 0.0, 128
        %1786 = vxpose.xlu0.b32.cont [8/16] 0.0, 128
        %1787 = vxpose.xlu0.b32.cont [9/16] 0.0, 128
        %1788 = vxpose.xlu0.b32.cont [10/16] 0.0, 128
        %1789 = vxpose.xlu0.b32.cont [11/16] 0.0, 128
        %1790 = vxpose.xlu0.b32.cont [12/16] 0.0, 128
        %1791 = vxpose.xlu0.b32.cont [13/16] 0.0, 128
        %1792 = vxpose.xlu0.b32.cont [14/16] 0.0, 128
        %1793 = vxpose.xlu0.b32.cont [15/16] 0.0, 128
        %1794 = vxpose.xlu0.b32.end [16/16] 0.0, 128
        %v1795 = vpop.trf.xlu0
        %v1796 = vpop.trf.xlu0
        %v1797 = vpop.trf.xlu0
        %v1798 = vpop.trf.xlu0
        %v1799 = vpop.trf.xlu0
        %v1800 = vpop.trf.xlu0
        %v1801 = vpop.trf.xlu0
        %v1802 = vpop.trf.xlu0
        %v1803 = vpop.trf.xlu0
        %v1804 = vpop.trf.xlu0
        %v1805 = vpop.trf.xlu0
        %v1806 = vpop.trf.xlu0
        %v1807 = vpop.trf.xlu0
        %v1808 = vpop.trf.xlu0
        %v1809 = vpop.trf.xlu0
        %v1810 = vpop.trf.xlu0
        %1811 = vxpose.xlu0.b32.start [1/16] %v1590, 128
        %1812 = vxpose.xlu0.b32.cont [2/16] 0.0, 128
        %1813 = vxpose.xlu0.b32.cont [3/16] 0.0, 128
        %1814 = vxpose.xlu0.b32.cont [4/16] 0.0, 128
        %1815 = vxpose.xlu0.b32.cont [5/16] 0.0, 128
        %1816 = vxpose.xlu0.b32.cont [6/16] 0.0, 128
        %1817 = vxpose.xlu0.b32.cont [7/16] 0.0, 128
        %1818 = vxpose.xlu0.b32.cont [8/16] 0.0, 128
        %1819 = vxpose.xlu0.b32.cont [9/16] 0.0, 128
        %1820 = vxpose.xlu0.b32.cont [10/16] 0.0, 128
        %1821 = vxpose.xlu0.b32.cont [11/16] 0.0, 128
        %1822 = vxpose.xlu0.b32.cont [12/16] 0.0, 128
        %1823 = vxpose.xlu0.b32.cont [13/16] 0.0, 128
        %1824 = vxpose.xlu0.b32.cont [14/16] 0.0, 128
        %1825 = vxpose.xlu0.b32.cont [15/16] 0.0, 128
        %1826 = vxpose.xlu0.b32.end [16/16] 0.0, 128
        %v1827 = vpop.trf.xlu0
        %v1828 = vpop.trf.xlu0
        %v1829 = vpop.trf.xlu0
        %v1830 = vpop.trf.xlu0
        %v1831 = vpop.trf.xlu0
        %v1832 = vpop.trf.xlu0
        %v1833 = vpop.trf.xlu0
        %v1834 = vpop.trf.xlu0
        %v1835 = vpop.trf.xlu0
        %v1836 = vpop.trf.xlu0
        %v1837 = vpop.trf.xlu0
        %v1838 = vpop.trf.xlu0
        %v1839 = vpop.trf.xlu0
        %v1840 = vpop.trf.xlu0
        %v1841 = vpop.trf.xlu0
        %v1842 = vpop.trf.xlu0
        %1843 = vxpose.xlu0.b32.start [1/16] %v1593, 128
        %1844 = vxpose.xlu0.b32.cont [2/16] 0.0, 128
        %1845 = vxpose.xlu0.b32.cont [3/16] 0.0, 128
        %1846 = vxpose.xlu0.b32.cont [4/16] 0.0, 128
        %1847 = vxpose.xlu0.b32.cont [5/16] 0.0, 128
        %1848 = vxpose.xlu0.b32.cont [6/16] 0.0, 128
        %1849 = vxpose.xlu0.b32.cont [7/16] 0.0, 128
        %1850 = vxpose.xlu0.b32.cont [8/16] 0.0, 128
        %1851 = vxpose.xlu0.b32.cont [9/16] 0.0, 128
        %1852 = vxpose.xlu0.b32.cont [10/16] 0.0, 128
        %1853 = vxpose.xlu0.b32.cont [11/16] 0.0, 128
        %1854 = vxpose.xlu0.b32.cont [12/16] 0.0, 128
        %1855 = vxpose.xlu0.b32.cont [13/16] 0.0, 128
        %1856 = vxpose.xlu0.b32.cont [14/16] 0.0, 128
        %1857 = vxpose.xlu0.b32.cont [15/16] 0.0, 128
        %1858 = vxpose.xlu0.b32.end [16/16] 0.0, 128
        %v1859 = vpop.trf.xlu0
        %v1860 = vpop.trf.xlu0
        %v1861 = vpop.trf.xlu0
        %v1862 = vpop.trf.xlu0
        %v1863 = vpop.trf.xlu0
        %v1864 = vpop.trf.xlu0
        %v1865 = vpop.trf.xlu0
        %v1866 = vpop.trf.xlu0
        %v1867 = vpop.trf.xlu0
        %v1868 = vpop.trf.xlu0
        %v1869 = vpop.trf.xlu0
        %v1870 = vpop.trf.xlu0
        %v1871 = vpop.trf.xlu0
        %v1872 = vpop.trf.xlu0
        %v1873 = vpop.trf.xlu0
        %v1874 = vpop.trf.xlu0
        %1875 = vxpose.xlu0.b32.start [1/16] %v1596, 128
        %1876 = vxpose.xlu0.b32.cont [2/16] 0.0, 128
        %1877 = vxpose.xlu0.b32.cont [3/16] 0.0, 128
        %1878 = vxpose.xlu0.b32.cont [4/16] 0.0, 128
        %1879 = vxpose.xlu0.b32.cont [5/16] 0.0, 128
        %1880 = vxpose.xlu0.b32.cont [6/16] 0.0, 128
        %1881 = vxpose.xlu0.b32.cont [7/16] 0.0, 128
        %1882 = vxpose.xlu0.b32.cont [8/16] 0.0, 128
        %1883 = vxpose.xlu0.b32.cont [9/16] 0.0, 128
        %1884 = vxpose.xlu0.b32.cont [10/16] 0.0, 128
        %1885 = vxpose.xlu0.b32.cont [11/16] 0.0, 128
        %1886 = vxpose.xlu0.b32.cont [12/16] 0.0, 128
        %1887 = vxpose.xlu0.b32.cont [13/16] 0.0, 128
        %1888 = vxpose.xlu0.b32.cont [14/16] 0.0, 128
        %1889 = vxpose.xlu0.b32.cont [15/16] 0.0, 128
        %1890 = vxpose.xlu0.b32.end [16/16] 0.0, 128
        %v1891 = vpop.trf.xlu0
        %v1892 = vpop.trf.xlu0
        %v1893 = vpop.trf.xlu0
        %v1894 = vpop.trf.xlu0
        %v1895 = vpop.trf.xlu0
        %v1896 = vpop.trf.xlu0
        %v1897 = vpop.trf.xlu0
        %v1898 = vpop.trf.xlu0
        %v1899 = vpop.trf.xlu0
        %v1900 = vpop.trf.xlu0
        %v1901 = vpop.trf.xlu0
        %v1902 = vpop.trf.xlu0
        %v1903 = vpop.trf.xlu0
        %v1904 = vpop.trf.xlu0
        %v1905 = vpop.trf.xlu0
        %v1906 = vpop.trf.xlu0
        %1907 = vxpose.xlu0.b32.start [1/16] %v1599, 128
        %1908 = vxpose.xlu0.b32.cont [2/16] 0.0, 128
        %1909 = vxpose.xlu0.b32.cont [3/16] 0.0, 128
        %1910 = vxpose.xlu0.b32.cont [4/16] 0.0, 128
        %1911 = vxpose.xlu0.b32.cont [5/16] 0.0, 128
        %1912 = vxpose.xlu0.b32.cont [6/16] 0.0, 128
        %1913 = vxpose.xlu0.b32.cont [7/16] 0.0, 128
        %1914 = vxpose.xlu0.b32.cont [8/16] 0.0, 128
        %1915 = vxpose.xlu0.b32.cont [9/16] 0.0, 128
        %1916 = vxpose.xlu0.b32.cont [10/16] 0.0, 128
        %1917 = vxpose.xlu0.b32.cont [11/16] 0.0, 128
        %1918 = vxpose.xlu0.b32.cont [12/16] 0.0, 128
        %1919 = vxpose.xlu0.b32.cont [13/16] 0.0, 128
        %1920 = vxpose.xlu0.b32.cont [14/16] 0.0, 128
        %1921 = vxpose.xlu0.b32.cont [15/16] 0.0, 128
        %1922 = vxpose.xlu0.b32.end [16/16] 0.0, 128
        %v1923 = vpop.trf.xlu0
        %v1924 = vpop.trf.xlu0
        %v1925 = vpop.trf.xlu0
        %v1926 = vpop.trf.xlu0
        %v1927 = vpop.trf.xlu0
        %v1928 = vpop.trf.xlu0
        %v1929 = vpop.trf.xlu0
        %v1930 = vpop.trf.xlu0
        %v1931 = vpop.trf.xlu0
        %v1932 = vpop.trf.xlu0
        %v1933 = vpop.trf.xlu0
        %v1934 = vpop.trf.xlu0
        %v1935 = vpop.trf.xlu0
        %v1936 = vpop.trf.xlu0
        %v1937 = vpop.trf.xlu0
        %v1938 = vpop.trf.xlu0
        %1939 = vxpose.xlu0.b32.start [1/16] %v1602, 128
        %1940 = vxpose.xlu0.b32.cont [2/16] 0.0, 128
        %1941 = vxpose.xlu0.b32.cont [3/16] 0.0, 128
        %1942 = vxpose.xlu0.b32.cont [4/16] 0.0, 128
        %1943 = vxpose.xlu0.b32.cont [5/16] 0.0, 128
        %1944 = vxpose.xlu0.b32.cont [6/16] 0.0, 128
        %1945 = vxpose.xlu0.b32.cont [7/16] 0.0, 128
        %1946 = vxpose.xlu0.b32.cont [8/16] 0.0, 128
        %1947 = vxpose.xlu0.b32.cont [9/16] 0.0, 128
        %1948 = vxpose.xlu0.b32.cont [10/16] 0.0, 128
        %1949 = vxpose.xlu0.b32.cont [11/16] 0.0, 128
        %1950 = vxpose.xlu0.b32.cont [12/16] 0.0, 128
        %1951 = vxpose.xlu0.b32.cont [13/16] 0.0, 128
        %1952 = vxpose.xlu0.b32.cont [14/16] 0.0, 128
        %1953 = vxpose.xlu0.b32.cont [15/16] 0.0, 128
        %1954 = vxpose.xlu0.b32.end [16/16] 0.0, 128
        %v1955 = vpop.trf.xlu0
        %v1956 = vpop.trf.xlu0
        %v1957 = vpop.trf.xlu0
        %v1958 = vpop.trf.xlu0
        %v1959 = vpop.trf.xlu0
        %v1960 = vpop.trf.xlu0
        %v1961 = vpop.trf.xlu0
        %v1962 = vpop.trf.xlu0
        %v1963 = vpop.trf.xlu0
        %v1964 = vpop.trf.xlu0
        %v1965 = vpop.trf.xlu0
        %v1966 = vpop.trf.xlu0
        %v1967 = vpop.trf.xlu0
        %v1968 = vpop.trf.xlu0
        %v1969 = vpop.trf.xlu0
        %v1970 = vpop.trf.xlu0
        %1971 = vxpose.xlu0.b32.start [1/16] %v1605, 128
        %1972 = vxpose.xlu0.b32.cont [2/16] 0.0, 128
        %1973 = vxpose.xlu0.b32.cont [3/16] 0.0, 128
        %1974 = vxpose.xlu0.b32.cont [4/16] 0.0, 128
        %1975 = vxpose.xlu0.b32.cont [5/16] 0.0, 128
        %1976 = vxpose.xlu0.b32.cont [6/16] 0.0, 128
        %1977 = vxpose.xlu0.b32.cont [7/16] 0.0, 128
        %1978 = vxpose.xlu0.b32.cont [8/16] 0.0, 128
        %1979 = vxpose.xlu0.b32.cont [9/16] 0.0, 128
        %1980 = vxpose.xlu0.b32.cont [10/16] 0.0, 128
        %1981 = vxpose.xlu0.b32.cont [11/16] 0.0, 128
        %1982 = vxpose.xlu0.b32.cont [12/16] 0.0, 128
        %1983 = vxpose.xlu0.b32.cont [13/16] 0.0, 128
        %1984 = vxpose.xlu0.b32.cont [14/16] 0.0, 128
        %1985 = vxpose.xlu0.b32.cont [15/16] 0.0, 128
        %1986 = vxpose.xlu0.b32.end [16/16] 0.0, 128
        %v1987 = vpop.trf.xlu0
        %v1988 = vpop.trf.xlu0
        %v1989 = vpop.trf.xlu0
        %v1990 = vpop.trf.xlu0
        %v1991 = vpop.trf.xlu0
        %v1992 = vpop.trf.xlu0
        %v1993 = vpop.trf.xlu0
        %v1994 = vpop.trf.xlu0
        %v1995 = vpop.trf.xlu0
        %v1996 = vpop.trf.xlu0
        %v1997 = vpop.trf.xlu0
        %v1998 = vpop.trf.xlu0
        %v1999 = vpop.trf.xlu0
        %v2000 = vpop.trf.xlu0
        %v2001 = vpop.trf.xlu0
        %v2002 = vpop.trf.xlu0
        %2003 = vxpose.xlu0.b32.start [1/16] %v1608, 128
        %2004 = vxpose.xlu0.b32.cont [2/16] 0.0, 128
        %2005 = vxpose.xlu0.b32.cont [3/16] 0.0, 128
        %2006 = vxpose.xlu0.b32.cont [4/16] 0.0, 128
        %2007 = vxpose.xlu0.b32.cont [5/16] 0.0, 128
        %2008 = vxpose.xlu0.b32.cont [6/16] 0.0, 128
        %2009 = vxpose.xlu0.b32.cont [7/16] 0.0, 128
        %2010 = vxpose.xlu0.b32.cont [8/16] 0.0, 128
        %2011 = vxpose.xlu0.b32.cont [9/16] 0.0, 128
        %2012 = vxpose.xlu0.b32.cont [10/16] 0.0, 128
        %2013 = vxpose.xlu0.b32.cont [11/16] 0.0, 128
        %2014 = vxpose.xlu0.b32.cont [12/16] 0.0, 128
        %2015 = vxpose.xlu0.b32.cont [13/16] 0.0, 128
        %2016 = vxpose.xlu0.b32.cont [14/16] 0.0, 128
        %2017 = vxpose.xlu0.b32.cont [15/16] 0.0, 128
        %2018 = vxpose.xlu0.b32.end [16/16] 0.0, 128
        %v2019 = vpop.trf.xlu0
        %v2020 = vpop.trf.xlu0
        %v2021 = vpop.trf.xlu0
        %v2022 = vpop.trf.xlu0
        %v2023 = vpop.trf.xlu0
        %v2024 = vpop.trf.xlu0
        %v2025 = vpop.trf.xlu0
        %v2026 = vpop.trf.xlu0
        %v2027 = vpop.trf.xlu0
        %v2028 = vpop.trf.xlu0
        %v2029 = vpop.trf.xlu0
        %v2030 = vpop.trf.xlu0
        %v2031 = vpop.trf.xlu0
        %v2032 = vpop.trf.xlu0
        %v2033 = vpop.trf.xlu0
        %v2034 = vpop.trf.xlu0
        %2035 = vxpose.xlu0.b32.start [1/16] %v1611, 128
        %2036 = vxpose.xlu0.b32.cont [2/16] 0.0, 128
        %2037 = vxpose.xlu0.b32.cont [3/16] 0.0, 128
        %2038 = vxpose.xlu0.b32.cont [4/16] 0.0, 128
        %2039 = vxpose.xlu0.b32.cont [5/16] 0.0, 128
        %2040 = vxpose.xlu0.b32.cont [6/16] 0.0, 128
        %2041 = vxpose.xlu0.b32.cont [7/16] 0.0, 128
        %2042 = vxpose.xlu0.b32.cont [8/16] 0.0, 128
        %2043 = vxpose.xlu0.b32.cont [9/16] 0.0, 128
        %2044 = vxpose.xlu0.b32.cont [10/16] 0.0, 128
        %2045 = vxpose.xlu0.b32.cont [11/16] 0.0, 128
        %2046 = vxpose.xlu0.b32.cont [12/16] 0.0, 128
        %2047 = vxpose.xlu0.b32.cont [13/16] 0.0, 128
        %2048 = vxpose.xlu0.b32.cont [14/16] 0.0, 128
        %2049 = vxpose.xlu0.b32.cont [15/16] 0.0, 128
        %2050 = vxpose.xlu0.b32.end [16/16] 0.0, 128
        %v2051 = vpop.trf.xlu0
        %v2052 = vpop.trf.xlu0
        %v2053 = vpop.trf.xlu0
        %v2054 = vpop.trf.xlu0
        %v2055 = vpop.trf.xlu0
        %v2056 = vpop.trf.xlu0
        %v2057 = vpop.trf.xlu0
        %v2058 = vpop.trf.xlu0
        %v2059 = vpop.trf.xlu0
        %v2060 = vpop.trf.xlu0
        %v2061 = vpop.trf.xlu0
        %v2062 = vpop.trf.xlu0
        %v2063 = vpop.trf.xlu0
        %v2064 = vpop.trf.xlu0
        %v2065 = vpop.trf.xlu0
        %v2066 = vpop.trf.xlu0
        %2067 = vxpose.xlu0.b32.start [1/16] %v1614, 128
        %2068 = vxpose.xlu0.b32.cont [2/16] 0.0, 128
        %2069 = vxpose.xlu0.b32.cont [3/16] 0.0, 128
        %2070 = vxpose.xlu0.b32.cont [4/16] 0.0, 128
        %2071 = vxpose.xlu0.b32.cont [5/16] 0.0, 128
        %2072 = vxpose.xlu0.b32.cont [6/16] 0.0, 128
        %2073 = vxpose.xlu0.b32.cont [7/16] 0.0, 128
        %2074 = vxpose.xlu0.b32.cont [8/16] 0.0, 128
        %2075 = vxpose.xlu0.b32.cont [9/16] 0.0, 128
        %2076 = vxpose.xlu0.b32.cont [10/16] 0.0, 128
        %2077 = vxpose.xlu0.b32.cont [11/16] 0.0, 128
        %2078 = vxpose.xlu0.b32.cont [12/16] 0.0, 128
        %2079 = vxpose.xlu0.b32.cont [13/16] 0.0, 128
        %2080 = vxpose.xlu0.b32.cont [14/16] 0.0, 128
        %2081 = vxpose.xlu0.b32.cont [15/16] 0.0, 128
        %2082 = vxpose.xlu0.b32.end [16/16] 0.0, 128
        %v2083 = vpop.trf.xlu0
        %v2084 = vpop.trf.xlu0
        %v2085 = vpop.trf.xlu0
        %v2086 = vpop.trf.xlu0
        %v2087 = vpop.trf.xlu0
        %v2088 = vpop.trf.xlu0
        %v2089 = vpop.trf.xlu0
        %v2090 = vpop.trf.xlu0
        %v2091 = vpop.trf.xlu0
        %v2092 = vpop.trf.xlu0
        %v2093 = vpop.trf.xlu0
        %v2094 = vpop.trf.xlu0
        %v2095 = vpop.trf.xlu0
        %v2096 = vpop.trf.xlu0
        %v2097 = vpop.trf.xlu0
        %v2098 = vpop.trf.xlu0
        %2099 = vxpose.xlu0.b32.start [1/16] %v1617, 128
        %2100 = vxpose.xlu0.b32.cont [2/16] 0.0, 128
        %2101 = vxpose.xlu0.b32.cont [3/16] 0.0, 128
        %2102 = vxpose.xlu0.b32.cont [4/16] 0.0, 128
        %2103 = vxpose.xlu0.b32.cont [5/16] 0.0, 128
        %2104 = vxpose.xlu0.b32.cont [6/16] 0.0, 128
        %2105 = vxpose.xlu0.b32.cont [7/16] 0.0, 128
        %2106 = vxpose.xlu0.b32.cont [8/16] 0.0, 128
        %2107 = vxpose.xlu0.b32.cont [9/16] 0.0, 128
        %2108 = vxpose.xlu0.b32.cont [10/16] 0.0, 128
        %2109 = vxpose.xlu0.b32.cont [11/16] 0.0, 128
        %2110 = vxpose.xlu0.b32.cont [12/16] 0.0, 128
        %2111 = vxpose.xlu0.b32.cont [13/16] 0.0, 128
        %2112 = vxpose.xlu0.b32.cont [14/16] 0.0, 128
        %2113 = vxpose.xlu0.b32.cont [15/16] 0.0, 128
        %2114 = vxpose.xlu0.b32.end [16/16] 0.0, 128
        %v2115 = vpop.trf.xlu0
        %v2116 = vpop.trf.xlu0
        %v2117 = vpop.trf.xlu0
        %v2118 = vpop.trf.xlu0
        %v2119 = vpop.trf.xlu0
        %v2120 = vpop.trf.xlu0
        %v2121 = vpop.trf.xlu0
        %v2122 = vpop.trf.xlu0
        %v2123 = vpop.trf.xlu0
        %v2124 = vpop.trf.xlu0
        %v2125 = vpop.trf.xlu0
        %v2126 = vpop.trf.xlu0
        %v2127 = vpop.trf.xlu0
        %v2128 = vpop.trf.xlu0
        %v2129 = vpop.trf.xlu0
        %v2130 = vpop.trf.xlu0
        %vm2131 = vcmask 588800
        %2132 = vst.msk [vmem:[#allocation2] sm:$0xff] %vm2131, 0.0
        %2133 = vst.msk [vmem:[#allocation2 + $0x8] sm:$0xff] %vm2131, 0.0
        %2134 = vst.msk [vmem:[#allocation2 + $0x10] sm:$0xff] %vm2131, 0.0
        %2135 = vst.msk [vmem:[#allocation2 + $0x18] sm:$0xff] %vm2131, 0.0
        %2136 = vst.msk [vmem:[#allocation2 + $0x20] sm:$0xff] %vm2131, 0.0
        %2137 = vst.msk [vmem:[#allocation2 + $0x28] sm:$0xff] %vm2131, 0.0
        %2138 = vst.msk [vmem:[#allocation2 + $0x30] sm:$0xff] %vm2131, 0.0
        %2139 = vst.msk [vmem:[#allocation2 + $0x38] sm:$0xff] %vm2131, 0.0
        %2140 = vst.msk [vmem:[#allocation2 + $0x40] sm:$0xff] %vm2131, 0.0
        %2141 = vst.msk [vmem:[#allocation2 + $0x48] sm:$0xff] %vm2131, 0.0
        %2142 = vst.msk [vmem:[#allocation2 + $0x50] sm:$0xff] %vm2131, 0.0
        %2143 = vst.msk [vmem:[#allocation2 + $0x58] sm:$0xff] %vm2131, 0.0
        %2144 = vst.msk [vmem:[#allocation2 + $0x60] sm:$0xff] %vm2131, 0.0
        %2145 = vst.msk [vmem:[#allocation2 + $0x68] sm:$0xff] %vm2131, 0.0
        %2146 = vst.msk [vmem:[#allocation2 + $0x70] sm:$0xff] %vm2131, 0.0
        %2147 = vst.msk [vmem:[#allocation2 + $0x78] sm:$0xff] %vm2131, 0.0
        %2148 = vst.msk [vmem:[#allocation2 + $0x80] sm:$0xff] %vm2131, 0.0
        %2149 = vst.msk [vmem:[#allocation2 + $0x88] sm:$0xff] %vm2131, 0.0
        %2150 = vst.msk [vmem:[#allocation2 + $0x90] sm:$0xff] %vm2131, 0.0
        %2151 = vst.msk [vmem:[#allocation2 + $0x98] sm:$0xff] %vm2131, 0.0
        %2152 = vst.msk [vmem:[#allocation2 + $0xa0] sm:$0xff] %vm2131, 0.0
        %2153 = vst.msk [vmem:[#allocation2 + $0xa8] sm:$0xff] %vm2131, 0.0
        %2154 = vst.msk [vmem:[#allocation2 + $0xb0] sm:$0xff] %vm2131, 0.0
        %2155 = vst.msk [vmem:[#allocation2 + $0xb8] sm:$0xff] %vm2131, 0.0
        %2156 = vst.msk [vmem:[#allocation2 + $0xc0] sm:$0xff] %vm2131, 0.0
        %2157 = vst.msk [vmem:[#allocation2 + $0xc8] sm:$0xff] %vm2131, 0.0
        %2158 = vst.msk [vmem:[#allocation2 + $0xd0] sm:$0xff] %vm2131, 0.0
        %2159 = vst.msk [vmem:[#allocation2 + $0xd8] sm:$0xff] %vm2131, 0.0
        %2160 = vst.msk [vmem:[#allocation2 + $0xe0] sm:$0xff] %vm2131, 0.0
        %2161 = vst.msk [vmem:[#allocation2 + $0xe8] sm:$0xff] %vm2131, 0.0
        %2162 = vst.msk [vmem:[#allocation2 + $0xf0] sm:$0xff] %vm2131, 0.0
        %2163 = vst.msk [vmem:[#allocation2 + $0xf8] sm:$0xff] %vm2131, 0.0
        %s2164 = scalar_lea.vmem [#allocation2], 16
        %2165 = vst.msk [vmem:[%s2164 + $0x1] sm:$0xff] %vm484, %v1635
        %vm2166 = vcmask 63488
        %2167 = vst.msk [vmem:[%s2164 + $0x9] sm:$0x7f] %vm2166, %v1636
        %2168 = vst.msk [vmem:[%s2164 + $0x11] sm:$0xff] %vm484, %v1667
        %2169 = vst.msk [vmem:[%s2164 + $0x19] sm:$0x7f] %vm2166, %v1668
        %2170 = vst.msk [vmem:[%s2164 + $0x21] sm:$0xff] %vm484, %v1699
        %2171 = vst.msk [vmem:[%s2164 + $0x29] sm:$0x7f] %vm2166, %v1700
        %2172 = vst.msk [vmem:[%s2164 + $0x31] sm:$0xff] %vm484, %v1731
        %2173 = vst.msk [vmem:[%s2164 + $0x39] sm:$0x7f] %vm2166, %v1732
        %2174 = vst.msk [vmem:[%s2164 + $0x41] sm:$0xff] %vm484, %v1763
        %2175 = vst.msk [vmem:[%s2164 + $0x49] sm:$0x7f] %vm2166, %v1764
        %2176 = vst.msk [vmem:[%s2164 + $0x51] sm:$0xff] %vm484, %v1795
        %2177 = vst.msk [vmem:[%s2164 + $0x59] sm:$0x7f] %vm2166, %v1796
        %2178 = vst.msk [vmem:[%s2164 + $0x61] sm:$0xff] %vm484, %v1827
        %2179 = vst.msk [vmem:[%s2164 + $0x69] sm:$0x7f] %vm2166, %v1828
        %2180 = vst.msk [vmem:[%s2164 + $0x71] sm:$0xff] %vm484, %v1859
        %2181 = vst.msk [vmem:[%s2164 + $0x79] sm:$0x7f] %vm2166, %v1860
        %2182 = vst.msk [vmem:[%s2164 + $0x81] sm:$0xff] %vm484, %v1891
        %2183 = vst.msk [vmem:[%s2164 + $0x89] sm:$0x7f] %vm2166, %v1892
        %2184 = vst.msk [vmem:[%s2164 + $0x91] sm:$0xff] %vm484, %v1923
        %2185 = vst.msk [vmem:[%s2164 + $0x99] sm:$0x7f] %vm2166, %v1924
        %2186 = vst.msk [vmem:[%s2164 + $0xa1] sm:$0xff] %vm484, %v1955
        %2187 = vst.msk [vmem:[%s2164 + $0xa9] sm:$0x7f] %vm2166, %v1956
        %2188 = vst.msk [vmem:[%s2164 + $0xb1] sm:$0xff] %vm484, %v1987
        %2189 = vst.msk [vmem:[%s2164 + $0xb9] sm:$0x7f] %vm2166, %v1988
        %2190 = vst.msk [vmem:[%s2164 + $0xc1] sm:$0xff] %vm484, %v2019
        %2191 = vst.msk [vmem:[%s2164 + $0xc9] sm:$0x7f] %vm2166, %v2020
        %2192 = vst.msk [vmem:[%s2164 + $0xd1] sm:$0xff] %vm484, %v2051
        %2193 = vst.msk [vmem:[%s2164 + $0xd9] sm:$0x7f] %vm2166, %v2052
        %2194 = vst.msk [vmem:[%s2164 + $0xe1] sm:$0xff] %vm484, %v2083
        %2195 = vst.msk [vmem:[%s2164 + $0xe9] sm:$0x7f] %vm2166, %v2084
        %2226 = vrot.lane.b32.xlu0 %v1635, 8
        %v2227 = vpop.permute.xlu0 %2226
        %2228 = vrot.lane.b32.xlu0 %v1636, 8
        %v2229 = vpop.permute.xlu0 %2228
        %2230 = vrot.lane.b32.xlu0 %v1667, 8
        %v2231 = vpop.permute.xlu0 %2230
        %2232 = vrot.lane.b32.xlu0 %v1668, 8
        %v2233 = vpop.permute.xlu0 %2232
        %2234 = vrot.lane.b32.xlu0 %v1699, 8
        %v2235 = vpop.permute.xlu0 %2234
        %2236 = vrot.lane.b32.xlu0 %v1700, 8
        %v2237 = vpop.permute.xlu0 %2236
        %2238 = vrot.lane.b32.xlu0 %v1731, 8
        %v2239 = vpop.permute.xlu0 %2238
        %2240 = vrot.lane.b32.xlu0 %v1732, 8
        %v2241 = vpop.permute.xlu0 %2240
        %2242 = vrot.lane.b32.xlu0 %v1763, 8
        %v2243 = vpop.permute.xlu0 %2242
        %2244 = vrot.lane.b32.xlu0 %v1764, 8
        %v2245 = vpop.permute.xlu0 %2244
        %2246 = vrot.lane.b32.xlu0 %v1795, 8
        %v2247 = vpop.permute.xlu0 %2246
        %2248 = vrot.lane.b32.xlu0 %v1796, 8
        %v2249 = vpop.permute.xlu0 %2248
        %2250 = vrot.lane.b32.xlu0 %v1827, 8
        %v2251 = vpop.permute.xlu0 %2250
        %2252 = vrot.lane.b32.xlu0 %v1828, 8
        %v2253 = vpop.permute.xlu0 %2252
        %2254 = vrot.lane.b32.xlu0 %v1859, 8
        %v2255 = vpop.permute.xlu0 %2254
        %2256 = vrot.lane.b32.xlu0 %v1860, 8
        %v2257 = vpop.permute.xlu0 %2256
        %2258 = vrot.lane.b32.xlu0 %v1891, 8
        %v2259 = vpop.permute.xlu0 %2258
        %2260 = vrot.lane.b32.xlu0 %v1892, 8
        %v2261 = vpop.permute.xlu0 %2260
        %2262 = vrot.lane.b32.xlu0 %v1923, 8
        %v2263 = vpop.permute.xlu0 %2262
        %2264 = vrot.lane.b32.xlu0 %v1924, 8
        %v2265 = vpop.permute.xlu0 %2264
        %2266 = vrot.lane.b32.xlu0 %v1955, 8
        %v2267 = vpop.permute.xlu0 %2266
        %2268 = vrot.lane.b32.xlu0 %v1956, 8
        %v2269 = vpop.permute.xlu0 %2268
        %2270 = vrot.lane.b32.xlu0 %v1987, 8
        %v2271 = vpop.permute.xlu0 %2270
        %2272 = vrot.lane.b32.xlu0 %v1988, 8
        %v2273 = vpop.permute.xlu0 %2272
        %2274 = vrot.lane.b32.xlu0 %v2019, 8
        %v2275 = vpop.permute.xlu0 %2274
        %2276 = vrot.lane.b32.xlu0 %v2020, 8
        %v2277 = vpop.permute.xlu0 %2276
        %2278 = vrot.lane.b32.xlu0 %v2051, 8
        %v2279 = vpop.permute.xlu0 %2278
        %2280 = vrot.lane.b32.xlu0 %v2052, 8
        %v2281 = vpop.permute.xlu0 %2280
        %2282 = vrot.lane.b32.xlu0 %v2083, 8
        %v2283 = vpop.permute.xlu0 %2282
        %2284 = vrot.lane.b32.xlu0 %v2084, 8
        %v2285 = vpop.permute.xlu0 %2284
        %vm2316 = vcmask 130112
        %2317 = vst.msk [vmem:[%s2164] sm:$0xff] %vm2316, %v2227
        %2318 = vst.msk [vmem:[%s2164 + $0x8] sm:$0xff] %vm2316, %v2229
        %2319 = vst.msk [vmem:[%s2164 + $0x10] sm:$0xff] %vm2316, %v2231
        %2320 = vst.msk [vmem:[%s2164 + $0x18] sm:$0xff] %vm2316, %v2233
        %2321 = vst.msk [vmem:[%s2164 + $0x20] sm:$0xff] %vm2316, %v2235
        %2322 = vst.msk [vmem:[%s2164 + $0x28] sm:$0xff] %vm2316, %v2237
        %2323 = vst.msk [vmem:[%s2164 + $0x30] sm:$0xff] %vm2316, %v2239
        %2324 = vst.msk [vmem:[%s2164 + $0x38] sm:$0xff] %vm2316, %v2241
        %2325 = vst.msk [vmem:[%s2164 + $0x40] sm:$0xff] %vm2316, %v2243
        %2326 = vst.msk [vmem:[%s2164 + $0x48] sm:$0xff] %vm2316, %v2245
        %2327 = vst.msk [vmem:[%s2164 + $0x50] sm:$0xff] %vm2316, %v2247
        %2328 = vst.msk [vmem:[%s2164 + $0x58] sm:$0xff] %vm2316, %v2249
        %2329 = vst.msk [vmem:[%s2164 + $0x60] sm:$0xff] %vm2316, %v2251
        %2330 = vst.msk [vmem:[%s2164 + $0x68] sm:$0xff] %vm2316, %v2253
        %2331 = vst.msk [vmem:[%s2164 + $0x70] sm:$0xff] %vm2316, %v2255
        %2332 = vst.msk [vmem:[%s2164 + $0x78] sm:$0xff] %vm2316, %v2257
        %2333 = vst.msk [vmem:[%s2164 + $0x80] sm:$0xff] %vm2316, %v2259
        %2334 = vst.msk [vmem:[%s2164 + $0x88] sm:$0xff] %vm2316, %v2261
        %2335 = vst.msk [vmem:[%s2164 + $0x90] sm:$0xff] %vm2316, %v2263
        %2336 = vst.msk [vmem:[%s2164 + $0x98] sm:$0xff] %vm2316, %v2265
        %2337 = vst.msk [vmem:[%s2164 + $0xa0] sm:$0xff] %vm2316, %v2267
        %2338 = vst.msk [vmem:[%s2164 + $0xa8] sm:$0xff] %vm2316, %v2269
        %2339 = vst.msk [vmem:[%s2164 + $0xb0] sm:$0xff] %vm2316, %v2271
        %2340 = vst.msk [vmem:[%s2164 + $0xb8] sm:$0xff] %vm2316, %v2273
        %2341 = vst.msk [vmem:[%s2164 + $0xc0] sm:$0xff] %vm2316, %v2275
        %2342 = vst.msk [vmem:[%s2164 + $0xc8] sm:$0xff] %vm2316, %v2277
        %2343 = vst.msk [vmem:[%s2164 + $0xd0] sm:$0xff] %vm2316, %v2279
        %2344 = vst.msk [vmem:[%s2164 + $0xd8] sm:$0xff] %vm2316, %v2281
        %2345 = vst.msk [vmem:[%s2164 + $0xe0] sm:$0xff] %vm2316, %v2283
        %2346 = vst.msk [vmem:[%s2164 + $0xe8] sm:$0xff] %vm2316, %v2285
        %2347 = vrot.lane.b32.xlu0 %v1635, 16
        %v2348 = vpop.permute.xlu0 %2347
        %2349 = vrot.lane.b32.xlu0 %v1636, 16
        %v2350 = vpop.permute.xlu0 %2349
        %2351 = vrot.lane.b32.xlu0 %v1667, 16
        %v2352 = vpop.permute.xlu0 %2351
        %2353 = vrot.lane.b32.xlu0 %v1668, 16
        %v2354 = vpop.permute.xlu0 %2353
        %2355 = vrot.lane.b32.xlu0 %v1699, 16
        %v2356 = vpop.permute.xlu0 %2355
        %2357 = vrot.lane.b32.xlu0 %v1700, 16
        %v2358 = vpop.permute.xlu0 %2357
        %2359 = vrot.lane.b32.xlu0 %v1731, 16
        %v2360 = vpop.permute.xlu0 %2359
        %2361 = vrot.lane.b32.xlu0 %v1732, 16
        %v2362 = vpop.permute.xlu0 %2361
        %2363 = vrot.lane.b32.xlu0 %v1763, 16
        %v2364 = vpop.permute.xlu0 %2363
        %2365 = vrot.lane.b32.xlu0 %v1764, 16
        %v2366 = vpop.permute.xlu0 %2365
        %2367 = vrot.lane.b32.xlu0 %v1795, 16
        %v2368 = vpop.permute.xlu0 %2367
        %2369 = vrot.lane.b32.xlu0 %v1796, 16
        %v2370 = vpop.permute.xlu0 %2369
        %2371 = vrot.lane.b32.xlu0 %v1827, 16
        %v2372 = vpop.permute.xlu0 %2371
        %2373 = vrot.lane.b32.xlu0 %v1828, 16
        %v2374 = vpop.permute.xlu0 %2373
        %2375 = vrot.lane.b32.xlu0 %v1859, 16
        %v2376 = vpop.permute.xlu0 %2375
        %2377 = vrot.lane.b32.xlu0 %v1860, 16
        %v2378 = vpop.permute.xlu0 %2377
        %2379 = vrot.lane.b32.xlu0 %v1891, 16
        %v2380 = vpop.permute.xlu0 %2379
        %2381 = vrot.lane.b32.xlu0 %v1892, 16
        %v2382 = vpop.permute.xlu0 %2381
        %2383 = vrot.lane.b32.xlu0 %v1923, 16
        %v2384 = vpop.permute.xlu0 %2383
        %2385 = vrot.lane.b32.xlu0 %v1924, 16
        %v2386 = vpop.permute.xlu0 %2385
        %2387 = vrot.lane.b32.xlu0 %v1955, 16
        %v2388 = vpop.permute.xlu0 %2387
        %2389 = vrot.lane.b32.xlu0 %v1956, 16
        %v2390 = vpop.permute.xlu0 %2389
        %2391 = vrot.lane.b32.xlu0 %v1987, 16
        %v2392 = vpop.permute.xlu0 %2391
        %2393 = vrot.lane.b32.xlu0 %v1988, 16
        %v2394 = vpop.permute.xlu0 %2393
        %2395 = vrot.lane.b32.xlu0 %v2019, 16
        %v2396 = vpop.permute.xlu0 %2395
        %2397 = vrot.lane.b32.xlu0 %v2020, 16
        %v2398 = vpop.permute.xlu0 %2397
        %2399 = vrot.lane.b32.xlu0 %v2051, 16
        %v2400 = vpop.permute.xlu0 %2399
        %2401 = vrot.lane.b32.xlu0 %v2052, 16
        %v2402 = vpop.permute.xlu0 %2401
        %2403 = vrot.lane.b32.xlu0 %v2083, 16
        %v2404 = vpop.permute.xlu0 %2403
        %2405 = vrot.lane.b32.xlu0 %v2084, 16
        %v2406 = vpop.permute.xlu0 %2405
        %vm2437 = vcmask 195713
        %2438 = vst.msk [vmem:[%s2164 - $0x1] sm:$0xfe] %vm2437, %v2348
        %vm2439 = vcmask 195712
        %2440 = vst.msk [vmem:[%s2164 + $0x7] sm:$0xff] %vm2439, %v2350
        %2441 = vst.msk [vmem:[%s2164 + $0xf] sm:$0xfe] %vm2437, %v2352
        %2442 = vst.msk [vmem:[%s2164 + $0x17] sm:$0xff] %vm2439, %v2354
        %2443 = vst.msk [vmem:[%s2164 + $0x1f] sm:$0xfe] %vm2437, %v2356
        %2444 = vst.msk [vmem:[%s2164 + $0x27] sm:$0xff] %vm2439, %v2358
        %2445 = vst.msk [vmem:[%s2164 + $0x2f] sm:$0xfe] %vm2437, %v2360
        %2446 = vst.msk [vmem:[%s2164 + $0x37] sm:$0xff] %vm2439, %v2362
        %2447 = vst.msk [vmem:[%s2164 + $0x3f] sm:$0xfe] %vm2437, %v2364
        %2448 = vst.msk [vmem:[%s2164 + $0x47] sm:$0xff] %vm2439, %v2366
        %2449 = vst.msk [vmem:[%s2164 + $0x4f] sm:$0xfe] %vm2437, %v2368
        %2450 = vst.msk [vmem:[%s2164 + $0x57] sm:$0xff] %vm2439, %v2370
        %2451 = vst.msk [vmem:[%s2164 + $0x5f] sm:$0xfe] %vm2437, %v2372
        %2452 = vst.msk [vmem:[%s2164 + $0x67] sm:$0xff] %vm2439, %v2374
        %2453 = vst.msk [vmem:[%s2164 + $0x6f] sm:$0xfe] %vm2437, %v2376
        %2454 = vst.msk [vmem:[%s2164 + $0x77] sm:$0xff] %vm2439, %v2378
        %2455 = vst.msk [vmem:[%s2164 + $0x7f] sm:$0xfe] %vm2437, %v2380
        %2456 = vst.msk [vmem:[%s2164 + $0x87] sm:$0xff] %vm2439, %v2382
        %2457 = vst.msk [vmem:[%s2164 + $0x8f] sm:$0xfe] %vm2437, %v2384
        %2458 = vst.msk [vmem:[%s2164 + $0x97] sm:$0xff] %vm2439, %v2386
        %2459 = vst.msk [vmem:[%s2164 + $0x9f] sm:$0xfe] %vm2437, %v2388
        %2460 = vst.msk [vmem:[%s2164 + $0xa7] sm:$0xff] %vm2439, %v2390
        %2461 = vst.msk [vmem:[%s2164 + $0xaf] sm:$0xfe] %vm2437, %v2392
        %2462 = vst.msk [vmem:[%s2164 + $0xb7] sm:$0xff] %vm2439, %v2394
        %2463 = vst.msk [vmem:[%s2164 + $0xbf] sm:$0xfe] %vm2437, %v2396
        %2464 = vst.msk [vmem:[%s2164 + $0xc7] sm:$0xff] %vm2439, %v2398
        %2465 = vst.msk [vmem:[%s2164 + $0xcf] sm:$0xfe] %vm2437, %v2400
        %2466 = vst.msk [vmem:[%s2164 + $0xd7] sm:$0xff] %vm2439, %v2402
        %2467 = vst.msk [vmem:[%s2164 + $0xdf] sm:$0xfe] %vm2437, %v2404
        %2468 = vst.msk [vmem:[%s2164 + $0xe7] sm:$0xff] %vm2439, %v2406
        %2471 = vrot.lane.b32.xlu0 %v1635, 24
        %v2472 = vpop.permute.xlu0 %2471
        %2473 = vrot.lane.b32.xlu0 %v1636, 24
        %v2474 = vpop.permute.xlu0 %2473
        %2475 = vrot.lane.b32.xlu0 %v1667, 24
        %v2476 = vpop.permute.xlu0 %2475
        %2477 = vrot.lane.b32.xlu0 %v1668, 24
        %v2478 = vpop.permute.xlu0 %2477
        %2479 = vrot.lane.b32.xlu0 %v1699, 24
        %v2480 = vpop.permute.xlu0 %2479
        %2481 = vrot.lane.b32.xlu0 %v1700, 24
        %v2482 = vpop.permute.xlu0 %2481
        %2483 = vrot.lane.b32.xlu0 %v1731, 24
        %v2484 = vpop.permute.xlu0 %2483
        %2485 = vrot.lane.b32.xlu0 %v1732, 24
        %v2486 = vpop.permute.xlu0 %2485
        %2487 = vrot.lane.b32.xlu0 %v1763, 24
        %v2488 = vpop.permute.xlu0 %2487
        %2489 = vrot.lane.b32.xlu0 %v1764, 24
        %v2490 = vpop.permute.xlu0 %2489
        %2491 = vrot.lane.b32.xlu0 %v1795, 24
        %v2492 = vpop.permute.xlu0 %2491
        %2493 = vrot.lane.b32.xlu0 %v1796, 24
        %v2494 = vpop.permute.xlu0 %2493
        %2495 = vrot.lane.b32.xlu0 %v1827, 24
        %v2496 = vpop.permute.xlu0 %2495
        %2497 = vrot.lane.b32.xlu0 %v1828, 24
        %v2498 = vpop.permute.xlu0 %2497
        %2499 = vrot.lane.b32.xlu0 %v1859, 24
        %v2500 = vpop.permute.xlu0 %2499
        %2501 = vrot.lane.b32.xlu0 %v1860, 24
        %v2502 = vpop.permute.xlu0 %2501
        %2503 = vrot.lane.b32.xlu0 %v1891, 24
        %v2504 = vpop.permute.xlu0 %2503
        %2505 = vrot.lane.b32.xlu0 %v1892, 24
        %v2506 = vpop.permute.xlu0 %2505
        %2507 = vrot.lane.b32.xlu0 %v1923, 24
        %v2508 = vpop.permute.xlu0 %2507
        %2509 = vrot.lane.b32.xlu0 %v1924, 24
        %v2510 = vpop.permute.xlu0 %2509
        %2511 = vrot.lane.b32.xlu0 %v1955, 24
        %v2512 = vpop.permute.xlu0 %2511
        %2513 = vrot.lane.b32.xlu0 %v1956, 24
        %v2514 = vpop.permute.xlu0 %2513
        %2515 = vrot.lane.b32.xlu0 %v1987, 24
        %v2516 = vpop.permute.xlu0 %2515
        %2517 = vrot.lane.b32.xlu0 %v1988, 24
        %v2518 = vpop.permute.xlu0 %2517
        %2519 = vrot.lane.b32.xlu0 %v2019, 24
        %v2520 = vpop.permute.xlu0 %2519
        %2521 = vrot.lane.b32.xlu0 %v2020, 24
        %v2522 = vpop.permute.xlu0 %2521
        %2523 = vrot.lane.b32.xlu0 %v2051, 24
        %v2524 = vpop.permute.xlu0 %2523
        %2525 = vrot.lane.b32.xlu0 %v2052, 24
        %v2526 = vpop.permute.xlu0 %2525
        %2527 = vrot.lane.b32.xlu0 %v2083, 24
        %v2528 = vpop.permute.xlu0 %2527
        %2529 = vrot.lane.b32.xlu0 %v2084, 24
        %v2530 = vpop.permute.xlu0 %2529
        %2531 = vrot.lane.b32.xlu0 %v2115, 24
        %v2532 = vpop.permute.xlu0 %2531
        %2533 = vrot.lane.b32.xlu0 %v2116, 24
        %v2534 = vpop.permute.xlu0 %2533
        %vm2567 = vcmask 261312
        %2568 = vst.msk [vmem:[#allocation2 + $0x1] sm:$0xff] %vm2567, %v2472
        %vm2569 = vcmask 260288
        %2570 = vst.msk [vmem:[#allocation2 + $0x9] sm:$0x7f] %vm2569, %v2474
        %2571 = vst.msk [vmem:[#allocation2 + $0x11] sm:$0xff] %vm2567, %v2476
        %2572 = vst.msk [vmem:[#allocation2 + $0x19] sm:$0x7f] %vm2569, %v2478
        %2573 = vst.msk [vmem:[#allocation2 + $0x21] sm:$0xff] %vm2567, %v2480
        %2574 = vst.msk [vmem:[#allocation2 + $0x29] sm:$0x7f] %vm2569, %v2482
        %2575 = vst.msk [vmem:[#allocation2 + $0x31] sm:$0xff] %vm2567, %v2484
        %2576 = vst.msk [vmem:[#allocation2 + $0x39] sm:$0x7f] %vm2569, %v2486
        %2577 = vst.msk [vmem:[#allocation2 + $0x41] sm:$0xff] %vm2567, %v2488
        %2578 = vst.msk [vmem:[#allocation2 + $0x49] sm:$0x7f] %vm2569, %v2490
        %2579 = vst.msk [vmem:[#allocation2 + $0x51] sm:$0xff] %vm2567, %v2492
        %2580 = vst.msk [vmem:[#allocation2 + $0x59] sm:$0x7f] %vm2569, %v2494
        %2581 = vst.msk [vmem:[#allocation2 + $0x61] sm:$0xff] %vm2567, %v2496
        %2582 = vst.msk [vmem:[#allocation2 + $0x69] sm:$0x7f] %vm2569, %v2498
        %2583 = vst.msk [vmem:[#allocation2 + $0x71] sm:$0xff] %vm2567, %v2500
        %2584 = vst.msk [vmem:[#allocation2 + $0x79] sm:$0x7f] %vm2569, %v2502
        %2585 = vst.msk [vmem:[#allocation2 + $0x81] sm:$0xff] %vm2567, %v2504
        %2586 = vst.msk [vmem:[#allocation2 + $0x89] sm:$0x7f] %vm2569, %v2506
        %2587 = vst.msk [vmem:[#allocation2 + $0x91] sm:$0xff] %vm2567, %v2508
        %2588 = vst.msk [vmem:[#allocation2 + $0x99] sm:$0x7f] %vm2569, %v2510
        %2589 = vst.msk [vmem:[#allocation2 + $0xa1] sm:$0xff] %vm2567, %v2512
        %2590 = vst.msk [vmem:[#allocation2 + $0xa9] sm:$0x7f] %vm2569, %v2514
        %2591 = vst.msk [vmem:[#allocation2 + $0xb1] sm:$0xff] %vm2567, %v2516
        %2592 = vst.msk [vmem:[#allocation2 + $0xb9] sm:$0x7f] %vm2569, %v2518
        %2593 = vst.msk [vmem:[#allocation2 + $0xc1] sm:$0xff] %vm2567, %v2520
        %2594 = vst.msk [vmem:[#allocation2 + $0xc9] sm:$0x7f] %vm2569, %v2522
        %2595 = vst.msk [vmem:[#allocation2 + $0xd1] sm:$0xff] %vm2567, %v2524
        %2596 = vst.msk [vmem:[#allocation2 + $0xd9] sm:$0x7f] %vm2569, %v2526
        %2597 = vst.msk [vmem:[#allocation2 + $0xe1] sm:$0xff] %vm2567, %v2528
        %2598 = vst.msk [vmem:[#allocation2 + $0xe9] sm:$0x7f] %vm2569, %v2530
        %2599 = vst.msk [vmem:[#allocation2 + $0xf1] sm:$0xff] %vm2567, %v2532
        %2600 = vst.msk [vmem:[#allocation2 + $0xf9] sm:$0x7f] %vm2569, %v2534
        %2601 = vrot.lane.b32.xlu0 %v1635, 32
        %v2602 = vpop.permute.xlu0 %2601
        %2603 = vrot.lane.b32.xlu0 %v1636, 32
        %v2604 = vpop.permute.xlu0 %2603
        %2605 = vrot.lane.b32.xlu0 %v1667, 32
        %v2606 = vpop.permute.xlu0 %2605
        %2607 = vrot.lane.b32.xlu0 %v1668, 32
        %v2608 = vpop.permute.xlu0 %2607
        %2609 = vrot.lane.b32.xlu0 %v1699, 32
        %v2610 = vpop.permute.xlu0 %2609
        %2611 = vrot.lane.b32.xlu0 %v1700, 32
        %v2612 = vpop.permute.xlu0 %2611
        %2613 = vrot.lane.b32.xlu0 %v1731, 32
        %v2614 = vpop.permute.xlu0 %2613
        %2615 = vrot.lane.b32.xlu0 %v1732, 32
        %v2616 = vpop.permute.xlu0 %2615
        %2617 = vrot.lane.b32.xlu0 %v1763, 32
        %v2618 = vpop.permute.xlu0 %2617
        %2619 = vrot.lane.b32.xlu0 %v1764, 32
        %v2620 = vpop.permute.xlu0 %2619
        %2621 = vrot.lane.b32.xlu0 %v1795, 32
        %v2622 = vpop.permute.xlu0 %2621
        %2623 = vrot.lane.b32.xlu0 %v1796, 32
        %v2624 = vpop.permute.xlu0 %2623
        %2625 = vrot.lane.b32.xlu0 %v1827, 32
        %v2626 = vpop.permute.xlu0 %2625
        %2627 = vrot.lane.b32.xlu0 %v1828, 32
        %v2628 = vpop.permute.xlu0 %2627
        %2629 = vrot.lane.b32.xlu0 %v1859, 32
        %v2630 = vpop.permute.xlu0 %2629
        %2631 = vrot.lane.b32.xlu0 %v1860, 32
        %v2632 = vpop.permute.xlu0 %2631
        %2633 = vrot.lane.b32.xlu0 %v1891, 32
        %v2634 = vpop.permute.xlu0 %2633
        %2635 = vrot.lane.b32.xlu0 %v1892, 32
        %v2636 = vpop.permute.xlu0 %2635
        %2637 = vrot.lane.b32.xlu0 %v1923, 32
        %v2638 = vpop.permute.xlu0 %2637
        %2639 = vrot.lane.b32.xlu0 %v1924, 32
        %v2640 = vpop.permute.xlu0 %2639
        %2641 = vrot.lane.b32.xlu0 %v1955, 32
        %v2642 = vpop.permute.xlu0 %2641
        %2643 = vrot.lane.b32.xlu0 %v1956, 32
        %v2644 = vpop.permute.xlu0 %2643
        %2645 = vrot.lane.b32.xlu0 %v1987, 32
        %v2646 = vpop.permute.xlu0 %2645
        %2647 = vrot.lane.b32.xlu0 %v1988, 32
        %v2648 = vpop.permute.xlu0 %2647
        %2649 = vrot.lane.b32.xlu0 %v2019, 32
        %v2650 = vpop.permute.xlu0 %2649
        %2651 = vrot.lane.b32.xlu0 %v2020, 32
        %v2652 = vpop.permute.xlu0 %2651
        %2653 = vrot.lane.b32.xlu0 %v2051, 32
        %v2654 = vpop.permute.xlu0 %2653
        %2655 = vrot.lane.b32.xlu0 %v2052, 32
        %v2656 = vpop.permute.xlu0 %2655
        %2657 = vrot.lane.b32.xlu0 %v2083, 32
        %v2658 = vpop.permute.xlu0 %2657
        %2659 = vrot.lane.b32.xlu0 %v2084, 32
        %v2660 = vpop.permute.xlu0 %2659
        %2661 = vrot.lane.b32.xlu0 %v2115, 32
        %v2662 = vpop.permute.xlu0 %2661
        %2663 = vrot.lane.b32.xlu0 %v2116, 32
        %v2664 = vpop.permute.xlu0 %2663
        %vm2697 = vcmask 326912
        %2698 = vst.msk [vmem:[#allocation2] sm:$0xff] %vm2697, %v2602
        %2699 = vst.msk [vmem:[#allocation2 + $0x8] sm:$0xff] %vm2697, %v2604
        %2700 = vst.msk [vmem:[#allocation2 + $0x10] sm:$0xff] %vm2697, %v2606
        %2701 = vst.msk [vmem:[#allocation2 + $0x18] sm:$0xff] %vm2697, %v2608
        %2702 = vst.msk [vmem:[#allocation2 + $0x20] sm:$0xff] %vm2697, %v2610
        %2703 = vst.msk [vmem:[#allocation2 + $0x28] sm:$0xff] %vm2697, %v2612
        %2704 = vst.msk [vmem:[#allocation2 + $0x30] sm:$0xff] %vm2697, %v2614
        %2705 = vst.msk [vmem:[#allocation2 + $0x38] sm:$0xff] %vm2697, %v2616
        %2706 = vst.msk [vmem:[#allocation2 + $0x40] sm:$0xff] %vm2697, %v2618
        %2707 = vst.msk [vmem:[#allocation2 + $0x48] sm:$0xff] %vm2697, %v2620
        %2708 = vst.msk [vmem:[#allocation2 + $0x50] sm:$0xff] %vm2697, %v2622
        %2709 = vst.msk [vmem:[#allocation2 + $0x58] sm:$0xff] %vm2697, %v2624
        %2710 = vst.msk [vmem:[#allocation2 + $0x60] sm:$0xff] %vm2697, %v2626
        %2711 = vst.msk [vmem:[#allocation2 + $0x68] sm:$0xff] %vm2697, %v2628
        %2712 = vst.msk [vmem:[#allocation2 + $0x70] sm:$0xff] %vm2697, %v2630
        %2713 = vst.msk [vmem:[#allocation2 + $0x78] sm:$0xff] %vm2697, %v2632
        %2714 = vst.msk [vmem:[#allocation2 + $0x80] sm:$0xff] %vm2697, %v2634
        %2715 = vst.msk [vmem:[#allocation2 + $0x88] sm:$0xff] %vm2697, %v2636
        %2716 = vst.msk [vmem:[#allocation2 + $0x90] sm:$0xff] %vm2697, %v2638
        %2717 = vst.msk [vmem:[#allocation2 + $0x98] sm:$0xff] %vm2697, %v2640
        %2718 = vst.msk [vmem:[#allocation2 + $0xa0] sm:$0xff] %vm2697, %v2642
        %2719 = vst.msk [vmem:[#allocation2 + $0xa8] sm:$0xff] %vm2697, %v2644
        %2720 = vst.msk [vmem:[#allocation2 + $0xb0] sm:$0xff] %vm2697, %v2646
        %2721 = vst.msk [vmem:[#allocation2 + $0xb8] sm:$0xff] %vm2697, %v2648
        %2722 = vst.msk [vmem:[#allocation2 + $0xc0] sm:$0xff] %vm2697, %v2650
        %2723 = vst.msk [vmem:[#allocation2 + $0xc8] sm:$0xff] %vm2697, %v2652
        %2724 = vst.msk [vmem:[#allocation2 + $0xd0] sm:$0xff] %vm2697, %v2654
        %2725 = vst.msk [vmem:[#allocation2 + $0xd8] sm:$0xff] %vm2697, %v2656
        %2726 = vst.msk [vmem:[#allocation2 + $0xe0] sm:$0xff] %vm2697, %v2658
        %2727 = vst.msk [vmem:[#allocation2 + $0xe8] sm:$0xff] %vm2697, %v2660
        %2728 = vst.msk [vmem:[#allocation2 + $0xf0] sm:$0xff] %vm2697, %v2662
        %2729 = vst.msk [vmem:[#allocation2 + $0xf8] sm:$0xff] %vm2697, %v2664
        %2730 = vrot.lane.b32.xlu0 %v1635, 40
        %v2731 = vpop.permute.xlu0 %2730
        %2732 = vrot.lane.b32.xlu0 %v1636, 40
        %v2733 = vpop.permute.xlu0 %2732
        %2734 = vrot.lane.b32.xlu0 %v1667, 40
        %v2735 = vpop.permute.xlu0 %2734
        %2736 = vrot.lane.b32.xlu0 %v1668, 40
        %v2737 = vpop.permute.xlu0 %2736
        %2738 = vrot.lane.b32.xlu0 %v1699, 40
        %v2739 = vpop.permute.xlu0 %2738
        %2740 = vrot.lane.b32.xlu0 %v1700, 40
        %v2741 = vpop.permute.xlu0 %2740
        %2742 = vrot.lane.b32.xlu0 %v1731, 40
        %v2743 = vpop.permute.xlu0 %2742
        %2744 = vrot.lane.b32.xlu0 %v1732, 40
        %v2745 = vpop.permute.xlu0 %2744
        %2746 = vrot.lane.b32.xlu0 %v1763, 40
        %v2747 = vpop.permute.xlu0 %2746
        %2748 = vrot.lane.b32.xlu0 %v1764, 40
        %v2749 = vpop.permute.xlu0 %2748
        %2750 = vrot.lane.b32.xlu0 %v1795, 40
        %v2751 = vpop.permute.xlu0 %2750
        %2752 = vrot.lane.b32.xlu0 %v1796, 40
        %v2753 = vpop.permute.xlu0 %2752
        %2754 = vrot.lane.b32.xlu0 %v1827, 40
        %v2755 = vpop.permute.xlu0 %2754
        %2756 = vrot.lane.b32.xlu0 %v1828, 40
        %v2757 = vpop.permute.xlu0 %2756
        %2758 = vrot.lane.b32.xlu0 %v1859, 40
        %v2759 = vpop.permute.xlu0 %2758
        %2760 = vrot.lane.b32.xlu0 %v1860, 40
        %v2761 = vpop.permute.xlu0 %2760
        %2762 = vrot.lane.b32.xlu0 %v1891, 40
        %v2763 = vpop.permute.xlu0 %2762
        %2764 = vrot.lane.b32.xlu0 %v1892, 40
        %v2765 = vpop.permute.xlu0 %2764
        %2766 = vrot.lane.b32.xlu0 %v1923, 40
        %v2767 = vpop.permute.xlu0 %2766
        %2768 = vrot.lane.b32.xlu0 %v1924, 40
        %v2769 = vpop.permute.xlu0 %2768
        %2770 = vrot.lane.b32.xlu0 %v1955, 40
        %v2771 = vpop.permute.xlu0 %2770
        %2772 = vrot.lane.b32.xlu0 %v1956, 40
        %v2773 = vpop.permute.xlu0 %2772
        %2774 = vrot.lane.b32.xlu0 %v1987, 40
        %v2775 = vpop.permute.xlu0 %2774
        %2776 = vrot.lane.b32.xlu0 %v1988, 40
        %v2777 = vpop.permute.xlu0 %2776
        %2778 = vrot.lane.b32.xlu0 %v2019, 40
        %v2779 = vpop.permute.xlu0 %2778
        %2780 = vrot.lane.b32.xlu0 %v2020, 40
        %v2781 = vpop.permute.xlu0 %2780
        %2782 = vrot.lane.b32.xlu0 %v2051, 40
        %v2783 = vpop.permute.xlu0 %2782
        %2784 = vrot.lane.b32.xlu0 %v2052, 40
        %v2785 = vpop.permute.xlu0 %2784
        %2786 = vrot.lane.b32.xlu0 %v2083, 40
        %v2787 = vpop.permute.xlu0 %2786
        %2788 = vrot.lane.b32.xlu0 %v2084, 40
        %v2789 = vpop.permute.xlu0 %2788
        %2790 = vrot.lane.b32.xlu0 %v2115, 40
        %v2791 = vpop.permute.xlu0 %2790
        %2792 = vrot.lane.b32.xlu0 %v2116, 40
        %v2793 = vpop.permute.xlu0 %2792
        %vm2826 = vcmask 392513
        %2827 = vst.msk [vmem:[#allocation2 - $0x1] sm:$0xfe] %vm2826, %v2731
        %vm2828 = vcmask 392512
        %2829 = vst.msk [vmem:[#allocation2 + $0x7] sm:$0xff] %vm2828, %v2733
        %2830 = vst.msk [vmem:[#allocation2 + $0xf] sm:$0xfe] %vm2826, %v2735
        %2831 = vst.msk [vmem:[#allocation2 + $0x17] sm:$0xff] %vm2828, %v2737
        %2832 = vst.msk [vmem:[#allocation2 + $0x1f] sm:$0xfe] %vm2826, %v2739
        %2833 = vst.msk [vmem:[#allocation2 + $0x27] sm:$0xff] %vm2828, %v2741
        %2834 = vst.msk [vmem:[#allocation2 + $0x2f] sm:$0xfe] %vm2826, %v2743
        %2835 = vst.msk [vmem:[#allocation2 + $0x37] sm:$0xff] %vm2828, %v2745
        %2836 = vst.msk [vmem:[#allocation2 + $0x3f] sm:$0xfe] %vm2826, %v2747
        %2837 = vst.msk [vmem:[#allocation2 + $0x47] sm:$0xff] %vm2828, %v2749
        %2838 = vst.msk [vmem:[#allocation2 + $0x4f] sm:$0xfe] %vm2826, %v2751
        %2839 = vst.msk [vmem:[#allocation2 + $0x57] sm:$0xff] %vm2828, %v2753
        %2840 = vst.msk [vmem:[#allocation2 + $0x5f] sm:$0xfe] %vm2826, %v2755
        %2841 = vst.msk [vmem:[#allocation2 + $0x67] sm:$0xff] %vm2828, %v2757
        %2842 = vst.msk [vmem:[#allocation2 + $0x6f] sm:$0xfe] %vm2826, %v2759
        %2843 = vst.msk [vmem:[#allocation2 + $0x77] sm:$0xff] %vm2828, %v2761
        %2844 = vst.msk [vmem:[#allocation2 + $0x7f] sm:$0xfe] %vm2826, %v2763
        %2845 = vst.msk [vmem:[#allocation2 + $0x87] sm:$0xff] %vm2828, %v2765
        %2846 = vst.msk [vmem:[#allocation2 + $0x8f] sm:$0xfe] %vm2826, %v2767
        %2847 = vst.msk [vmem:[#allocation2 + $0x97] sm:$0xff] %vm2828, %v2769
        %2848 = vst.msk [vmem:[#allocation2 + $0x9f] sm:$0xfe] %vm2826, %v2771
        %2849 = vst.msk [vmem:[#allocation2 + $0xa7] sm:$0xff] %vm2828, %v2773
        %2850 = vst.msk [vmem:[#allocation2 + $0xaf] sm:$0xfe] %vm2826, %v2775
        %2851 = vst.msk [vmem:[#allocation2 + $0xb7] sm:$0xff] %vm2828, %v2777
        %2852 = vst.msk [vmem:[#allocation2 + $0xbf] sm:$0xfe] %vm2826, %v2779
        %2853 = vst.msk [vmem:[#allocation2 + $0xc7] sm:$0xff] %vm2828, %v2781
        %2854 = vst.msk [vmem:[#allocation2 + $0xcf] sm:$0xfe] %vm2826, %v2783
        %2855 = vst.msk [vmem:[#allocation2 + $0xd7] sm:$0xff] %vm2828, %v2785
        %2856 = vst.msk [vmem:[#allocation2 + $0xdf] sm:$0xfe] %vm2826, %v2787
        %2857 = vst.msk [vmem:[#allocation2 + $0xe7] sm:$0xff] %vm2828, %v2789
        %2858 = vst.msk [vmem:[#allocation2 + $0xef] sm:$0xfe] %vm2826, %v2791
        %2859 = vst.msk [vmem:[#allocation2 + $0xf7] sm:$0xff] %vm2828, %v2793
        %2860 = vrot.lane.b32.xlu0 %v1667, 48
        %v2861 = vpop.permute.xlu0 %2860
        %2862 = vrot.lane.b32.xlu0 %v1668, 48
        %v2863 = vpop.permute.xlu0 %2862
        %2864 = vrot.lane.b32.xlu0 %v1699, 48
        %v2865 = vpop.permute.xlu0 %2864
        %2866 = vrot.lane.b32.xlu0 %v1700, 48
        %v2867 = vpop.permute.xlu0 %2866
        %2868 = vrot.lane.b32.xlu0 %v1731, 48
        %v2869 = vpop.permute.xlu0 %2868
        %2870 = vrot.lane.b32.xlu0 %v1732, 48
        %v2871 = vpop.permute.xlu0 %2870
        %2872 = vrot.lane.b32.xlu0 %v1763, 48
        %v2873 = vpop.permute.xlu0 %2872
        %2874 = vrot.lane.b32.xlu0 %v1764, 48
        %v2875 = vpop.permute.xlu0 %2874
        %2876 = vrot.lane.b32.xlu0 %v1795, 48
        %v2877 = vpop.permute.xlu0 %2876
        %2878 = vrot.lane.b32.xlu0 %v1796, 48
        %v2879 = vpop.permute.xlu0 %2878
        %2880 = vrot.lane.b32.xlu0 %v1827, 48
        %v2881 = vpop.permute.xlu0 %2880
        %2882 = vrot.lane.b32.xlu0 %v1828, 48
        %v2883 = vpop.permute.xlu0 %2882
        %2884 = vrot.lane.b32.xlu0 %v1859, 48
        %v2885 = vpop.permute.xlu0 %2884
        %2886 = vrot.lane.b32.xlu0 %v1860, 48
        %v2887 = vpop.permute.xlu0 %2886
        %2888 = vrot.lane.b32.xlu0 %v1891, 48
        %v2889 = vpop.permute.xlu0 %2888
        %2890 = vrot.lane.b32.xlu0 %v1892, 48
        %v2891 = vpop.permute.xlu0 %2890
        %2892 = vrot.lane.b32.xlu0 %v1923, 48
        %v2893 = vpop.permute.xlu0 %2892
        %2894 = vrot.lane.b32.xlu0 %v1924, 48
        %v2895 = vpop.permute.xlu0 %2894
        %2896 = vrot.lane.b32.xlu0 %v1955, 48
        %v2897 = vpop.permute.xlu0 %2896
        %2898 = vrot.lane.b32.xlu0 %v1956, 48
        %v2899 = vpop.permute.xlu0 %2898
        %2900 = vrot.lane.b32.xlu0 %v1987, 48
        %v2901 = vpop.permute.xlu0 %2900
        %2902 = vrot.lane.b32.xlu0 %v1988, 48
        %v2903 = vpop.permute.xlu0 %2902
        %2904 = vrot.lane.b32.xlu0 %v2019, 48
        %v2905 = vpop.permute.xlu0 %2904
        %2906 = vrot.lane.b32.xlu0 %v2020, 48
        %v2907 = vpop.permute.xlu0 %2906
        %2908 = vrot.lane.b32.xlu0 %v2051, 48
        %v2909 = vpop.permute.xlu0 %2908
        %2910 = vrot.lane.b32.xlu0 %v2052, 48
        %v2911 = vpop.permute.xlu0 %2910
        %2912 = vrot.lane.b32.xlu0 %v2083, 48
        %v2913 = vpop.permute.xlu0 %2912
        %2914 = vrot.lane.b32.xlu0 %v2084, 48
        %v2915 = vpop.permute.xlu0 %2914
        %2916 = vrot.lane.b32.xlu0 %v2115, 48
        %v2917 = vpop.permute.xlu0 %2916
        %2918 = vrot.lane.b32.xlu0 %v2116, 48
        %v2919 = vpop.permute.xlu0 %2918
        %vm2950 = vcmask 458112
        %2951 = vst.msk [vmem:[#allocation2 + $0x1] sm:$0xff] %vm2950, %v2861
        %vm2952 = vcmask 457088
        %2953 = vst.msk [vmem:[#allocation2 + $0x9] sm:$0x7f] %vm2952, %v2863
        %2954 = vst.msk [vmem:[#allocation2 + $0x11] sm:$0xff] %vm2950, %v2865
        %2955 = vst.msk [vmem:[#allocation2 + $0x19] sm:$0x7f] %vm2952, %v2867
        %2956 = vst.msk [vmem:[#allocation2 + $0x21] sm:$0xff] %vm2950, %v2869
        %2957 = vst.msk [vmem:[#allocation2 + $0x29] sm:$0x7f] %vm2952, %v2871
        %2958 = vst.msk [vmem:[#allocation2 + $0x31] sm:$0xff] %vm2950, %v2873
        %2959 = vst.msk [vmem:[#allocation2 + $0x39] sm:$0x7f] %vm2952, %v2875
        %2960 = vst.msk [vmem:[#allocation2 + $0x41] sm:$0xff] %vm2950, %v2877
        %2961 = vst.msk [vmem:[#allocation2 + $0x49] sm:$0x7f] %vm2952, %v2879
        %2962 = vst.msk [vmem:[#allocation2 + $0x51] sm:$0xff] %vm2950, %v2881
        %2963 = vst.msk [vmem:[#allocation2 + $0x59] sm:$0x7f] %vm2952, %v2883
        %2964 = vst.msk [vmem:[#allocation2 + $0x61] sm:$0xff] %vm2950, %v2885
        %2965 = vst.msk [vmem:[#allocation2 + $0x69] sm:$0x7f] %vm2952, %v2887
        %2966 = vst.msk [vmem:[#allocation2 + $0x71] sm:$0xff] %vm2950, %v2889
        %2967 = vst.msk [vmem:[#allocation2 + $0x79] sm:$0x7f] %vm2952, %v2891
        %2968 = vst.msk [vmem:[#allocation2 + $0x81] sm:$0xff] %vm2950, %v2893
        %2969 = vst.msk [vmem:[#allocation2 + $0x89] sm:$0x7f] %vm2952, %v2895
        %2970 = vst.msk [vmem:[#allocation2 + $0x91] sm:$0xff] %vm2950, %v2897
        %2971 = vst.msk [vmem:[#allocation2 + $0x99] sm:$0x7f] %vm2952, %v2899
        %2972 = vst.msk [vmem:[#allocation2 + $0xa1] sm:$0xff] %vm2950, %v2901
        %2973 = vst.msk [vmem:[#allocation2 + $0xa9] sm:$0x7f] %vm2952, %v2903
        %2974 = vst.msk [vmem:[#allocation2 + $0xb1] sm:$0xff] %vm2950, %v2905
        %2975 = vst.msk [vmem:[#allocation2 + $0xb9] sm:$0x7f] %vm2952, %v2907
        %2976 = vst.msk [vmem:[#allocation2 + $0xc1] sm:$0xff] %vm2950, %v2909
        %2977 = vst.msk [vmem:[#allocation2 + $0xc9] sm:$0x7f] %vm2952, %v2911
        %2978 = vst.msk [vmem:[#allocation2 + $0xd1] sm:$0xff] %vm2950, %v2913
        %2979 = vst.msk [vmem:[#allocation2 + $0xd9] sm:$0x7f] %vm2952, %v2915
        %2980 = vst.msk [vmem:[#allocation2 + $0xe1] sm:$0xff] %vm2950, %v2917
        %2981 = vst.msk [vmem:[#allocation2 + $0xe9] sm:$0x7f] %vm2952, %v2919
        %2982 = vrot.lane.b32.xlu0 %v1667, 56
        %v2983 = vpop.permute.xlu0 %2982
        %2984 = vrot.lane.b32.xlu0 %v1668, 56
        %v2985 = vpop.permute.xlu0 %2984
        %2986 = vrot.lane.b32.xlu0 %v1699, 56
        %v2987 = vpop.permute.xlu0 %2986
        %2988 = vrot.lane.b32.xlu0 %v1700, 56
        %v2989 = vpop.permute.xlu0 %2988
        %2990 = vrot.lane.b32.xlu0 %v1731, 56
        %v2991 = vpop.permute.xlu0 %2990
        %2992 = vrot.lane.b32.xlu0 %v1732, 56
        %v2993 = vpop.permute.xlu0 %2992
        %2994 = vrot.lane.b32.xlu0 %v1763, 56
        %v2995 = vpop.permute.xlu0 %2994
        %2996 = vrot.lane.b32.xlu0 %v1764, 56
        %v2997 = vpop.permute.xlu0 %2996
        %2998 = vrot.lane.b32.xlu0 %v1795, 56
        %v2999 = vpop.permute.xlu0 %2998
        %3000 = vrot.lane.b32.xlu0 %v1796, 56
        %v3001 = vpop.permute.xlu0 %3000
        %3002 = vrot.lane.b32.xlu0 %v1827, 56
        %v3003 = vpop.permute.xlu0 %3002
        %3004 = vrot.lane.b32.xlu0 %v1828, 56
        %v3005 = vpop.permute.xlu0 %3004
        %3006 = vrot.lane.b32.xlu0 %v1859, 56
        %v3007 = vpop.permute.xlu0 %3006
        %3008 = vrot.lane.b32.xlu0 %v1860, 56
        %v3009 = vpop.permute.xlu0 %3008
        %3010 = vrot.lane.b32.xlu0 %v1891, 56
        %v3011 = vpop.permute.xlu0 %3010
        %3012 = vrot.lane.b32.xlu0 %v1892, 56
        %v3013 = vpop.permute.xlu0 %3012
        %3014 = vrot.lane.b32.xlu0 %v1923, 56
        %v3015 = vpop.permute.xlu0 %3014
        %3016 = vrot.lane.b32.xlu0 %v1924, 56
        %v3017 = vpop.permute.xlu0 %3016
        %3018 = vrot.lane.b32.xlu0 %v1955, 56
        %v3019 = vpop.permute.xlu0 %3018
        %3020 = vrot.lane.b32.xlu0 %v1956, 56
        %v3021 = vpop.permute.xlu0 %3020
        %3022 = vrot.lane.b32.xlu0 %v1987, 56
        %v3023 = vpop.permute.xlu0 %3022
        %3024 = vrot.lane.b32.xlu0 %v1988, 56
        %v3025 = vpop.permute.xlu0 %3024
        %3026 = vrot.lane.b32.xlu0 %v2019, 56
        %v3027 = vpop.permute.xlu0 %3026
        %3028 = vrot.lane.b32.xlu0 %v2020, 56
        %v3029 = vpop.permute.xlu0 %3028
        %3030 = vrot.lane.b32.xlu0 %v2051, 56
        %v3031 = vpop.permute.xlu0 %3030
        %3032 = vrot.lane.b32.xlu0 %v2052, 56
        %v3033 = vpop.permute.xlu0 %3032
        %3034 = vrot.lane.b32.xlu0 %v2083, 56
        %v3035 = vpop.permute.xlu0 %3034
        %3036 = vrot.lane.b32.xlu0 %v2084, 56
        %v3037 = vpop.permute.xlu0 %3036
        %3038 = vrot.lane.b32.xlu0 %v2115, 56
        %v3039 = vpop.permute.xlu0 %3038
        %3040 = vrot.lane.b32.xlu0 %v2116, 56
        %v3041 = vpop.permute.xlu0 %3040
        %vm3072 = vcmask 523712
        %3073 = vst.msk [vmem:[#allocation2] sm:$0xff] %vm3072, %v2983
        %3074 = vst.msk [vmem:[#allocation2 + $0x8] sm:$0xff] %vm3072, %v2985
        %3075 = vst.msk [vmem:[#allocation2 + $0x10] sm:$0xff] %vm3072, %v2987
        %3076 = vst.msk [vmem:[#allocation2 + $0x18] sm:$0xff] %vm3072, %v2989
        %3077 = vst.msk [vmem:[#allocation2 + $0x20] sm:$0xff] %vm3072, %v2991
        %3078 = vst.msk [vmem:[#allocation2 + $0x28] sm:$0xff] %vm3072, %v2993
        %3079 = vst.msk [vmem:[#allocation2 + $0x30] sm:$0xff] %vm3072, %v2995
        %3080 = vst.msk [vmem:[#allocation2 + $0x38] sm:$0xff] %vm3072, %v2997
        %3081 = vst.msk [vmem:[#allocation2 + $0x40] sm:$0xff] %vm3072, %v2999
        %3082 = vst.msk [vmem:[#allocation2 + $0x48] sm:$0xff] %vm3072, %v3001
        %3083 = vst.msk [vmem:[#allocation2 + $0x50] sm:$0xff] %vm3072, %v3003
        %3084 = vst.msk [vmem:[#allocation2 + $0x58] sm:$0xff] %vm3072, %v3005
        %3085 = vst.msk [vmem:[#allocation2 + $0x60] sm:$0xff] %vm3072, %v3007
        %3086 = vst.msk [vmem:[#allocation2 + $0x68] sm:$0xff] %vm3072, %v3009
        %3087 = vst.msk [vmem:[#allocation2 + $0x70] sm:$0xff] %vm3072, %v3011
        %3088 = vst.msk [vmem:[#allocation2 + $0x78] sm:$0xff] %vm3072, %v3013
        %3089 = vst.msk [vmem:[#allocation2 + $0x80] sm:$0xff] %vm3072, %v3015
        %3090 = vst.msk [vmem:[#allocation2 + $0x88] sm:$0xff] %vm3072, %v3017
        %3091 = vst.msk [vmem:[#allocation2 + $0x90] sm:$0xff] %vm3072, %v3019
        %3092 = vst.msk [vmem:[#allocation2 + $0x98] sm:$0xff] %vm3072, %v3021
        %3093 = vst.msk [vmem:[#allocation2 + $0xa0] sm:$0xff] %vm3072, %v3023
        %3094 = vst.msk [vmem:[#allocation2 + $0xa8] sm:$0xff] %vm3072, %v3025
        %3095 = vst.msk [vmem:[#allocation2 + $0xb0] sm:$0xff] %vm3072, %v3027
        %3096 = vst.msk [vmem:[#allocation2 + $0xb8] sm:$0xff] %vm3072, %v3029
        %3097 = vst.msk [vmem:[#allocation2 + $0xc0] sm:$0xff] %vm3072, %v3031
        %3098 = vst.msk [vmem:[#allocation2 + $0xc8] sm:$0xff] %vm3072, %v3033
        %3099 = vst.msk [vmem:[#allocation2 + $0xd0] sm:$0xff] %vm3072, %v3035
        %3100 = vst.msk [vmem:[#allocation2 + $0xd8] sm:$0xff] %vm3072, %v3037
        %3101 = vst.msk [vmem:[#allocation2 + $0xe0] sm:$0xff] %vm3072, %v3039
        %3102 = vst.msk [vmem:[#allocation2 + $0xe8] sm:$0xff] %vm3072, %v3041
        %3103 = vrot.lane.b32.xlu0 %v1667, 64
        %v3104 = vpop.permute.xlu0 %3103
        %3105 = vrot.lane.b32.xlu0 %v1668, 64
        %v3106 = vpop.permute.xlu0 %3105
        %3107 = vrot.lane.b32.xlu0 %v1699, 64
        %v3108 = vpop.permute.xlu0 %3107
        %3109 = vrot.lane.b32.xlu0 %v1700, 64
        %v3110 = vpop.permute.xlu0 %3109
        %3111 = vrot.lane.b32.xlu0 %v1731, 64
        %v3112 = vpop.permute.xlu0 %3111
        %3113 = vrot.lane.b32.xlu0 %v1732, 64
        %v3114 = vpop.permute.xlu0 %3113
        %3115 = vrot.lane.b32.xlu0 %v1763, 64
        %v3116 = vpop.permute.xlu0 %3115
        %3117 = vrot.lane.b32.xlu0 %v1764, 64
        %v3118 = vpop.permute.xlu0 %3117
        %3119 = vrot.lane.b32.xlu0 %v1795, 64
        %v3120 = vpop.permute.xlu0 %3119
        %3121 = vrot.lane.b32.xlu0 %v1796, 64
        %v3122 = vpop.permute.xlu0 %3121
        %3123 = vrot.lane.b32.xlu0 %v1827, 64
        %v3124 = vpop.permute.xlu0 %3123
        %3125 = vrot.lane.b32.xlu0 %v1828, 64
        %v3126 = vpop.permute.xlu0 %3125
        %3127 = vrot.lane.b32.xlu0 %v1859, 64
        %v3128 = vpop.permute.xlu0 %3127
        %3129 = vrot.lane.b32.xlu0 %v1860, 64
        %v3130 = vpop.permute.xlu0 %3129
        %3131 = vrot.lane.b32.xlu0 %v1891, 64
        %v3132 = vpop.permute.xlu0 %3131
        %3133 = vrot.lane.b32.xlu0 %v1892, 64
        %v3134 = vpop.permute.xlu0 %3133
        %3135 = vrot.lane.b32.xlu0 %v1923, 64
        %v3136 = vpop.permute.xlu0 %3135
        %3137 = vrot.lane.b32.xlu0 %v1924, 64
        %v3138 = vpop.permute.xlu0 %3137
        %3139 = vrot.lane.b32.xlu0 %v1955, 64
        %v3140 = vpop.permute.xlu0 %3139
        %3141 = vrot.lane.b32.xlu0 %v1956, 64
        %v3142 = vpop.permute.xlu0 %3141
        %3143 = vrot.lane.b32.xlu0 %v1987, 64
        %v3144 = vpop.permute.xlu0 %3143
        %3145 = vrot.lane.b32.xlu0 %v1988, 64
        %v3146 = vpop.permute.xlu0 %3145
        %3147 = vrot.lane.b32.xlu0 %v2019, 64
        %v3148 = vpop.permute.xlu0 %3147
        %3149 = vrot.lane.b32.xlu0 %v2020, 64
        %v3150 = vpop.permute.xlu0 %3149
        %3151 = vrot.lane.b32.xlu0 %v2051, 64
        %v3152 = vpop.permute.xlu0 %3151
        %3153 = vrot.lane.b32.xlu0 %v2052, 64
        %v3154 = vpop.permute.xlu0 %3153
        %3155 = vrot.lane.b32.xlu0 %v2083, 64
        %v3156 = vpop.permute.xlu0 %3155
        %3157 = vrot.lane.b32.xlu0 %v2084, 64
        %v3158 = vpop.permute.xlu0 %3157
        %3159 = vrot.lane.b32.xlu0 %v2115, 64
        %v3160 = vpop.permute.xlu0 %3159
        %3161 = vrot.lane.b32.xlu0 %v2116, 64
        %v3162 = vpop.permute.xlu0 %3161
        %vm3193 = vcmask 589313
        %3194 = vst.msk [vmem:[#allocation2 - $0x1] sm:$0xfe] %vm3193, %v3104
        %vm3195 = vcmask 589312
        %3196 = vst.msk [vmem:[#allocation2 + $0x7] sm:$0xff] %vm3195, %v3106
        %3197 = vst.msk [vmem:[#allocation2 + $0xf] sm:$0xfe] %vm3193, %v3108
        %3198 = vst.msk [vmem:[#allocation2 + $0x17] sm:$0xff] %vm3195, %v3110
        %3199 = vst.msk [vmem:[#allocation2 + $0x1f] sm:$0xfe] %vm3193, %v3112
        %3200 = vst.msk [vmem:[#allocation2 + $0x27] sm:$0xff] %vm3195, %v3114
        %3201 = vst.msk [vmem:[#allocation2 + $0x2f] sm:$0xfe] %vm3193, %v3116
        %3202 = vst.msk [vmem:[#allocation2 + $0x37] sm:$0xff] %vm3195, %v3118
        %3203 = vst.msk [vmem:[#allocation2 + $0x3f] sm:$0xfe] %vm3193, %v3120
        %3204 = vst.msk [vmem:[#allocation2 + $0x47] sm:$0xff] %vm3195, %v3122
        %3205 = vst.msk [vmem:[#allocation2 + $0x4f] sm:$0xfe] %vm3193, %v3124
        %3206 = vst.msk [vmem:[#allocation2 + $0x57] sm:$0xff] %vm3195, %v3126
        %3207 = vst.msk [vmem:[#allocation2 + $0x5f] sm:$0xfe] %vm3193, %v3128
        %3208 = vst.msk [vmem:[#allocation2 + $0x67] sm:$0xff] %vm3195, %v3130
        %3209 = vst.msk [vmem:[#allocation2 + $0x6f] sm:$0xfe] %vm3193, %v3132
        %3210 = vst.msk [vmem:[#allocation2 + $0x77] sm:$0xff] %vm3195, %v3134
        %3211 = vst.msk [vmem:[#allocation2 + $0x7f] sm:$0xfe] %vm3193, %v3136
        %3212 = vst.msk [vmem:[#allocation2 + $0x87] sm:$0xff] %vm3195, %v3138
        %3213 = vst.msk [vmem:[#allocation2 + $0x8f] sm:$0xfe] %vm3193, %v3140
        %3214 = vst.msk [vmem:[#allocation2 + $0x97] sm:$0xff] %vm3195, %v3142
        %3215 = vst.msk [vmem:[#allocation2 + $0x9f] sm:$0xfe] %vm3193, %v3144
        %3216 = vst.msk [vmem:[#allocation2 + $0xa7] sm:$0xff] %vm3195, %v3146
        %3217 = vst.msk [vmem:[#allocation2 + $0xaf] sm:$0xfe] %vm3193, %v3148
        %3218 = vst.msk [vmem:[#allocation2 + $0xb7] sm:$0xff] %vm3195, %v3150
        %3219 = vst.msk [vmem:[#allocation2 + $0xbf] sm:$0xfe] %vm3193, %v3152
        %3220 = vst.msk [vmem:[#allocation2 + $0xc7] sm:$0xff] %vm3195, %v3154
        %3221 = vst.msk [vmem:[#allocation2 + $0xcf] sm:$0xfe] %vm3193, %v3156
        %3222 = vst.msk [vmem:[#allocation2 + $0xd7] sm:$0xff] %vm3195, %v3158
        %3223 = vst.msk [vmem:[#allocation2 + $0xdf] sm:$0xfe] %vm3193, %v3160
        %3224 = vst.msk [vmem:[#allocation2 + $0xe7] sm:$0xff] %vm3195, %v3162
        %v3225 = vld [vmem:[#allocation2] sm:$0xff]
        %v3226 = vld [vmem:[#allocation2 + $0x8] sm:$0xff]
        %v3227 = vld [vmem:[#allocation2 + $0x10] sm:$0xff]
        %v3228 = vld [vmem:[#allocation2 + $0x18] sm:$0xff]
        %v3229 = vld [vmem:[#allocation2 + $0x20] sm:$0xff]
        %v3230 = vld [vmem:[#allocation2 + $0x28] sm:$0xff]
        %v3231 = vld [vmem:[#allocation2 + $0x30] sm:$0xff]
        %v3232 = vld [vmem:[#allocation2 + $0x38] sm:$0xff]
        %v3233 = vld [vmem:[#allocation2 + $0x40] sm:$0xff]
        %v3234 = vld [vmem:[#allocation2 + $0x48] sm:$0xff]
        %v3235 = vld [vmem:[#allocation2 + $0x50] sm:$0xff]
        %v3236 = vld [vmem:[#allocation2 + $0x58] sm:$0xff]
        %v3237 = vld [vmem:[#allocation2 + $0x60] sm:$0xff]
        %v3238 = vld [vmem:[#allocation2 + $0x68] sm:$0xff]
        %v3239 = vld [vmem:[#allocation2 + $0x70] sm:$0xff]
        %v3240 = vld [vmem:[#allocation2 + $0x78] sm:$0xff]
        %v3241 = vld [vmem:[#allocation2 + $0x80] sm:$0xff]
        %v3242 = vld [vmem:[#allocation2 + $0x88] sm:$0xff]
        %v3243 = vld [vmem:[#allocation2 + $0x90] sm:$0xff]
        %v3244 = vld [vmem:[#allocation2 + $0x98] sm:$0xff]
        %v3245 = vld [vmem:[#allocation2 + $0xa0] sm:$0xff]
        %v3246 = vld [vmem:[#allocation2 + $0xa8] sm:$0xff]
        %v3247 = vld [vmem:[#allocation2 + $0xb0] sm:$0xff]
        %v3248 = vld [vmem:[#allocation2 + $0xb8] sm:$0xff]
        %v3249 = vld [vmem:[#allocation2 + $0xc0] sm:$0xff]
        %v3250 = vld [vmem:[#allocation2 + $0xc8] sm:$0xff]
        %v3251 = vld [vmem:[#allocation2 + $0xd0] sm:$0xff]
        %v3252 = vld [vmem:[#allocation2 + $0xd8] sm:$0xff]
        %v3253 = vld [vmem:[#allocation2 + $0xe0] sm:$0xff]
        %v3254 = vld [vmem:[#allocation2 + $0xe8] sm:$0xff]
        %v3255 = vld [vmem:[#allocation2 + $0xf0] sm:$0xff]
        %v3256 = vld [vmem:[#allocation2 + $0xf8] sm:$0xff]
        %v3257 = vpack.c.bf16 %v3226, %v3225
        %v3258 = vpack.c.bf16 %v3228, %v3227
        %v3259 = vpack.c.bf16 %v3230, %v3229
        %v3260 = vpack.c.bf16 %v3232, %v3231
        %v3261 = vpack.c.bf16 %v3234, %v3233
        %v3262 = vpack.c.bf16 %v3236, %v3235
        %v3263 = vpack.c.bf16 %v3238, %v3237
        %v3264 = vpack.c.bf16 %v3240, %v3239
        %v3265 = vpack.c.bf16 %v3242, %v3241
        %v3266 = vpack.c.bf16 %v3244, %v3243
        %v3267 = vpack.c.bf16 %v3246, %v3245
        %v3268 = vpack.c.bf16 %v3248, %v3247
        %v3269 = vpack.c.bf16 %v3250, %v3249
        %v3270 = vpack.c.bf16 %v3252, %v3251
        %v3271 = vpack.c.bf16 %v3254, %v3253
        %v3272 = vpack.c.bf16 %v3256, %v3255
        %v3273 = vld [vmem:[%s5] sm:$0xff]
        %v3274 = vld [vmem:[%s5 + $0x8] sm:$0xff]
        %v3275 = vld [vmem:[%s5 + $0x10] sm:$0xff]
        %v3276 = vld [vmem:[%s5 + $0x18] sm:$0xff]
        %v3277 = vld [vmem:[%s5 + $0x20] sm:$0xff]
        %v3278 = vld [vmem:[%s5 + $0x28] sm:$0xff]
        %v3279 = vld [vmem:[%s5 + $0x30] sm:$0xff]
        %v3280 = vld [vmem:[%s5 + $0x38] sm:$0xff]
        %v3281 = vld [vmem:[%s5 + $0x40] sm:$0xff]
        %v3282 = vpack.c.bf16 %v3274, %v3273
        %v3283 = vpack.c.bf16 %v3276, %v3275
        %v3284 = vpack.c.bf16 %v3278, %v3277
        %v3285 = vpack.c.bf16 %v3280, %v3279
        %v3286 = vpack.c.bf16 %v3281, %v3281
        %v3287 = vld [vmem:[%s6] sm:$0x1]
        %v3289 = vperm.slane %v3287, 0
        %v3292 = vsel %vm2131, %v3257, 0
        %v3295 = vsel %vm2131, %v3258, 0
        %v3298 = vsel %vm2131, %v3259, 0
        %v3301 = vsel %vm2131, %v3260, 0
        %v3304 = vsel %vm2131, %v3261, 0
        %v3307 = vsel %vm2131, %v3262, 0
        %v3310 = vsel %vm2131, %v3263, 0
        %v3313 = vsel %vm2131, %v3264, 0
        %v3316 = vsel %vm2131, %v3265, 0
        %v3319 = vsel %vm2131, %v3266, 0
        %v3322 = vsel %vm2131, %v3267, 0
        %v3325 = vsel %vm2131, %v3268, 0
        %v3328 = vsel %vm2131, %v3269, 0
        %v3331 = vsel %vm2131, %v3270, 0
        %v3334 = vsel %vm2131, %v3271, 0
        %v3337 = vsel %vm2131, %v3272, 0
        %vm3339 = vcmask 1043456
        %v3341 = vsel %vm3339, %v3286, 0
        %3343 = vmatpush.bf16.msra.mxu0 0
        %3344 = vmatpush.bf16.msra.mxu0 0
        %3345 = vmatpush.bf16.msra.mxu0 0
        %3346 = vmatpush.bf16.msra.mxu0 %v3341
        %3347 = vmatpush.bf16.msra.mxu0 %v3285
        %3348 = vmatpush.bf16.msra.mxu0 %v3284
        %3349 = vmatpush.bf16.msra.mxu0 %v3283
        %3350 = vmatpush.bf16.msra.mxu0 %v3282
        %3351 = vmatmul.bf16.gmra.mxu0 %v3292
        %v3352 = vpop.f32.mrf.mxu0
        %v3353 = vadd.f32 %v3289, %v3352
        %v3354 = vpop.f32.mrf.mxu0
        %v3355 = vadd.f32 %v3289, %v3354
        %3356 = vmatmul.bf16.gmra.mxu0 %v3295
        %v3357 = vpop.f32.mrf.mxu0
        %v3358 = vadd.f32 %v3289, %v3357
        %v3359 = vpop.f32.mrf.mxu0
        %v3360 = vadd.f32 %v3289, %v3359
        %3361 = vmatmul.bf16.gmra.mxu0 %v3298
        %v3362 = vpop.f32.mrf.mxu0
        %v3363 = vadd.f32 %v3289, %v3362
        %v3364 = vpop.f32.mrf.mxu0
        %v3365 = vadd.f32 %v3289, %v3364
        %3366 = vmatmul.bf16.gmra.mxu0 %v3301
        %v3367 = vpop.f32.mrf.mxu0
        %v3368 = vadd.f32 %v3289, %v3367
        %v3369 = vpop.f32.mrf.mxu0
        %v3370 = vadd.f32 %v3289, %v3369
        %3371 = vmatmul.bf16.gmra.mxu0 %v3304
        %v3372 = vpop.f32.mrf.mxu0
        %v3373 = vadd.f32 %v3289, %v3372
        %v3374 = vpop.f32.mrf.mxu0
        %v3375 = vadd.f32 %v3289, %v3374
        %3376 = vmatmul.bf16.gmra.mxu0 %v3307
        %v3377 = vpop.f32.mrf.mxu0
        %v3378 = vadd.f32 %v3289, %v3377
        %v3379 = vpop.f32.mrf.mxu0
        %v3380 = vadd.f32 %v3289, %v3379
        %3381 = vmatmul.bf16.gmra.mxu0 %v3310
        %v3382 = vpop.f32.mrf.mxu0
        %v3383 = vadd.f32 %v3289, %v3382
        %v3384 = vpop.f32.mrf.mxu0
        %v3385 = vadd.f32 %v3289, %v3384
        %3386 = vmatmul.bf16.gmra.mxu0 %v3313
        %v3387 = vpop.f32.mrf.mxu0
        %v3388 = vadd.f32 %v3289, %v3387
        %v3389 = vpop.f32.mrf.mxu0
        %v3390 = vadd.f32 %v3289, %v3389
        %3391 = vmatmul.bf16.gmra.mxu0 %v3316
        %v3392 = vpop.f32.mrf.mxu0
        %v3393 = vadd.f32 %v3289, %v3392
        %v3394 = vpop.f32.mrf.mxu0
        %v3395 = vadd.f32 %v3289, %v3394
        %3396 = vmatmul.bf16.gmra.mxu0 %v3319
        %v3397 = vpop.f32.mrf.mxu0
        %v3398 = vadd.f32 %v3289, %v3397
        %v3399 = vpop.f32.mrf.mxu0
        %v3400 = vadd.f32 %v3289, %v3399
        %3401 = vmatmul.bf16.gmra.mxu0 %v3322
        %v3402 = vpop.f32.mrf.mxu0
        %v3403 = vadd.f32 %v3289, %v3402
        %v3404 = vpop.f32.mrf.mxu0
        %v3405 = vadd.f32 %v3289, %v3404
        %3406 = vmatmul.bf16.gmra.mxu0 %v3325
        %v3407 = vpop.f32.mrf.mxu0
        %v3408 = vadd.f32 %v3289, %v3407
        %v3409 = vpop.f32.mrf.mxu0
        %v3410 = vadd.f32 %v3289, %v3409
        %3411 = vmatmul.bf16.gmra.mxu0 %v3328
        %v3412 = vpop.f32.mrf.mxu0
        %v3413 = vadd.f32 %v3289, %v3412
        %v3414 = vpop.f32.mrf.mxu0
        %v3415 = vadd.f32 %v3289, %v3414
        %3416 = vmatmul.bf16.gmra.mxu0 %v3331
        %v3417 = vpop.f32.mrf.mxu0
        %v3418 = vadd.f32 %v3289, %v3417
        %v3419 = vpop.f32.mrf.mxu0
        %v3420 = vadd.f32 %v3289, %v3419
        %3421 = vmatmul.bf16.gmra.mxu0 %v3334
        %v3422 = vpop.f32.mrf.mxu0
        %v3423 = vadd.f32 %v3289, %v3422
        %v3424 = vpop.f32.mrf.mxu0
        %v3425 = vadd.f32 %v3289, %v3424
        %3426 = vmatmul.bf16.gmra.mxu0 %v3337
        %v3427 = vpop.f32.mrf.mxu0
        %v3428 = vadd.f32 %v3289, %v3427
        %v3429 = vpop.f32.mrf.mxu0
        %v3430 = vadd.f32 %v3289, %v3429
        %3431 = vdwg.mxu0
        %vm3432 = vcmp.ge.f32.partialorder %v3353, 0.0
        %vm3433 = vcmp.ge.f32.partialorder %v3355, 0.0
        %vm3434 = vcmp.ge.f32.partialorder %v3358, 0.0
        %vm3435 = vcmp.ge.f32.partialorder %v3360, 0.0
        %vm3436 = vcmp.ge.f32.partialorder %v3363, 0.0
        %vm3437 = vcmp.ge.f32.partialorder %v3365, 0.0
        %vm3438 = vcmp.ge.f32.partialorder %v3368, 0.0
        %vm3439 = vcmp.ge.f32.partialorder %v3370, 0.0
        %vm3440 = vcmp.ge.f32.partialorder %v3373, 0.0
        %vm3441 = vcmp.ge.f32.partialorder %v3375, 0.0
        %vm3442 = vcmp.ge.f32.partialorder %v3378, 0.0
        %vm3443 = vcmp.ge.f32.partialorder %v3380, 0.0
        %vm3444 = vcmp.ge.f32.partialorder %v3383, 0.0
        %vm3445 = vcmp.ge.f32.partialorder %v3385, 0.0
        %vm3446 = vcmp.ge.f32.partialorder %v3388, 0.0
        %vm3447 = vcmp.ge.f32.partialorder %v3390, 0.0
        %vm3448 = vcmp.ge.f32.partialorder %v3393, 0.0
        %vm3449 = vcmp.ge.f32.partialorder %v3395, 0.0
        %vm3450 = vcmp.ge.f32.partialorder %v3398, 0.0
        %vm3451 = vcmp.ge.f32.partialorder %v3400, 0.0
        %vm3452 = vcmp.ge.f32.partialorder %v3403, 0.0
        %vm3453 = vcmp.ge.f32.partialorder %v3405, 0.0
        %vm3454 = vcmp.ge.f32.partialorder %v3408, 0.0
        %vm3455 = vcmp.ge.f32.partialorder %v3410, 0.0
        %vm3456 = vcmp.ge.f32.partialorder %v3413, 0.0
        %vm3457 = vcmp.ge.f32.partialorder %v3415, 0.0
        %vm3458 = vcmp.ge.f32.partialorder %v3418, 0.0
        %vm3459 = vcmp.ge.f32.partialorder %v3420, 0.0
        %vm3460 = vcmp.ge.f32.partialorder %v3423, 0.0
        %vm3461 = vcmp.ge.f32.partialorder %v3425, 0.0
        %vm3462 = vcmp.ge.f32.partialorder %v3428, 0.0
        %vm3463 = vcmp.ge.f32.partialorder %v3430, 0.0
        %v3464 = vmul.f32 %v3353, 0.01
        %v3465 = vmul.f32 %v3355, 0.01
        %v3466 = vmul.f32 %v3358, 0.01
        %v3467 = vmul.f32 %v3360, 0.01
        %v3468 = vmul.f32 %v3363, 0.01
        %v3469 = vmul.f32 %v3365, 0.01
        %v3470 = vmul.f32 %v3368, 0.01
        %v3471 = vmul.f32 %v3370, 0.01
        %v3472 = vmul.f32 %v3373, 0.01
        %v3473 = vmul.f32 %v3375, 0.01
        %v3474 = vmul.f32 %v3378, 0.01
        %v3475 = vmul.f32 %v3380, 0.01
        %v3476 = vmul.f32 %v3383, 0.01
        %v3477 = vmul.f32 %v3385, 0.01
        %v3478 = vmul.f32 %v3388, 0.01
        %v3479 = vmul.f32 %v3390, 0.01
        %v3480 = vmul.f32 %v3393, 0.01
        %v3481 = vmul.f32 %v3395, 0.01
        %v3482 = vmul.f32 %v3398, 0.01
        %v3483 = vmul.f32 %v3400, 0.01
        %v3484 = vmul.f32 %v3403, 0.01
        %v3485 = vmul.f32 %v3405, 0.01
        %v3486 = vmul.f32 %v3408, 0.01
        %v3487 = vmul.f32 %v3410, 0.01
        %v3488 = vmul.f32 %v3413, 0.01
        %v3489 = vmul.f32 %v3415, 0.01
        %v3490 = vmul.f32 %v3418, 0.01
        %v3491 = vmul.f32 %v3420, 0.01
        %v3492 = vmul.f32 %v3423, 0.01
        %v3493 = vmul.f32 %v3425, 0.01
        %v3494 = vmul.f32 %v3428, 0.01
        %v3495 = vmul.f32 %v3430, 0.01
        %v3496 = vsel %vm3432, %v3353, %v3464
        %v3497 = vsel %vm3433, %v3355, %v3465
        %v3498 = vsel %vm3434, %v3358, %v3466
        %v3499 = vsel %vm3435, %v3360, %v3467
        %v3500 = vsel %vm3436, %v3363, %v3468
        %v3501 = vsel %vm3437, %v3365, %v3469
        %v3502 = vsel %vm3438, %v3368, %v3470
        %v3503 = vsel %vm3439, %v3370, %v3471
        %v3504 = vsel %vm3440, %v3373, %v3472
        %v3505 = vsel %vm3441, %v3375, %v3473
        %v3506 = vsel %vm3442, %v3378, %v3474
        %v3507 = vsel %vm3443, %v3380, %v3475
        %v3508 = vsel %vm3444, %v3383, %v3476
        %v3509 = vsel %vm3445, %v3385, %v3477
        %v3510 = vsel %vm3446, %v3388, %v3478
        %v3511 = vsel %vm3447, %v3390, %v3479
        %v3512 = vsel %vm3448, %v3393, %v3480
        %v3513 = vsel %vm3449, %v3395, %v3481
        %v3514 = vsel %vm3450, %v3398, %v3482
        %v3515 = vsel %vm3451, %v3400, %v3483
        %v3516 = vsel %vm3452, %v3403, %v3484
        %v3517 = vsel %vm3453, %v3405, %v3485
        %v3518 = vsel %vm3454, %v3408, %v3486
        %v3519 = vsel %vm3455, %v3410, %v3487
        %v3520 = vsel %vm3456, %v3413, %v3488
        %v3521 = vsel %vm3457, %v3415, %v3489
        %v3522 = vsel %vm3458, %v3418, %v3490
        %v3523 = vsel %vm3459, %v3420, %v3491
        %v3524 = vsel %vm3460, %v3423, %v3492
        %v3525 = vsel %vm3461, %v3425, %v3493
        %v3526 = vsel %vm3462, %v3428, %v3494
        %v3527 = vsel %vm3463, %v3430, %v3495
        %3528 = vxpose.xlu0.b32.start [1/16] %v3496, 128
        %3529 = vxpose.xlu0.b32.cont [2/16] %v3497, 128
        %3530 = vxpose.xlu0.b32.cont [3/16] %v3498, 128
        %3531 = vxpose.xlu0.b32.cont [4/16] %v3499, 128
        %3532 = vxpose.xlu0.b32.cont [5/16] %v3500, 128
        %3533 = vxpose.xlu0.b32.cont [6/16] %v3501, 128
        %3534 = vxpose.xlu0.b32.cont [7/16] %v3502, 128
        %3535 = vxpose.xlu0.b32.cont [8/16] %v3503, 128
        %3536 = vxpose.xlu0.b32.cont [9/16] %v3504, 128
        %3537 = vxpose.xlu0.b32.cont [10/16] %v3505, 128
        %3538 = vxpose.xlu0.b32.cont [11/16] %v3506, 128
        %3539 = vxpose.xlu0.b32.cont [12/16] %v3507, 128
        %3540 = vxpose.xlu0.b32.cont [13/16] %v3508, 128
        %3541 = vxpose.xlu0.b32.cont [14/16] %v3509, 128
        %3542 = vxpose.xlu0.b32.cont [15/16] %v3510, 128
        %3543 = vxpose.xlu0.b32.end [16/16] %v3511, 128
        %v3544 = vpop.trf.xlu0
        %v3545 = vpop.trf.xlu0
        %v3546 = vpop.trf.xlu0
        %v3547 = vpop.trf.xlu0
        %v3548 = vpop.trf.xlu0
        %v3549 = vpop.trf.xlu0
        %v3550 = vpop.trf.xlu0
        %v3551 = vpop.trf.xlu0
        %v3552 = vpop.trf.xlu0
        %v3553 = vpop.trf.xlu0
        %v3554 = vpop.trf.xlu0
        %v3555 = vpop.trf.xlu0
        %v3556 = vpop.trf.xlu0
        %v3557 = vpop.trf.xlu0
        %v3558 = vpop.trf.xlu0
        %v3559 = vpop.trf.xlu0
        %3560 = vxpose.xlu0.b32.start [1/16] %v3512, 128
        %3561 = vxpose.xlu0.b32.cont [2/16] %v3513, 128
        %3562 = vxpose.xlu0.b32.cont [3/16] %v3514, 128
        %3563 = vxpose.xlu0.b32.cont [4/16] %v3515, 128
        %3564 = vxpose.xlu0.b32.cont [5/16] %v3516, 128
        %3565 = vxpose.xlu0.b32.cont [6/16] %v3517, 128
        %3566 = vxpose.xlu0.b32.cont [7/16] %v3518, 128
        %3567 = vxpose.xlu0.b32.cont [8/16] %v3519, 128
        %3568 = vxpose.xlu0.b32.cont [9/16] %v3520, 128
        %3569 = vxpose.xlu0.b32.cont [10/16] %v3521, 128
        %3570 = vxpose.xlu0.b32.cont [11/16] %v3522, 128
        %3571 = vxpose.xlu0.b32.cont [12/16] %v3523, 128
        %3572 = vxpose.xlu0.b32.cont [13/16] %v3524, 128
        %3573 = vxpose.xlu0.b32.cont [14/16] %v3525, 128
        %3574 = vxpose.xlu0.b32.cont [15/16] %v3526, 128
        %3575 = vxpose.xlu0.b32.end [16/16] %v3527, 128
        %v3576 = vpop.trf.xlu0
        %v3577 = vpop.trf.xlu0
        %v3578 = vpop.trf.xlu0
        %v3579 = vpop.trf.xlu0
        %v3580 = vpop.trf.xlu0
        %v3581 = vpop.trf.xlu0
        %v3582 = vpop.trf.xlu0
        %v3583 = vpop.trf.xlu0
        %v3584 = vpop.trf.xlu0
        %v3585 = vpop.trf.xlu0
        %v3586 = vpop.trf.xlu0
        %v3587 = vpop.trf.xlu0
        %v3588 = vpop.trf.xlu0
        %v3589 = vpop.trf.xlu0
        %v3590 = vpop.trf.xlu0
        %v3591 = vpop.trf.xlu0
        %3592 = vst [vmem:[%s269] sm:$0xff] %v3544
        %3593 = vst [vmem:[%s269 + $0x8] sm:$0xff] %v3576
        %s3594 = sand.u32 %s181, 1
        %s3595 = scalar_lea.sflag [#allocation4], %s3594
        %s3596 = sand.u32 %s181, 1
        %s3597 = smul.addr %s3596, 16
        %s3598 = scalar_lea.vmem [#allocation3], %s3597
        // Predicated region
        $region49: #{tpu_custom_call.1} parent=47 // pred_check
          %p3599 = pneg %p191
        $region50: #{tpu_custom_call.1} parent=47 // pred_check_branch
          %3601 = sbr.rel (%p3599) target = $region52
        $region51: #{tpu_custom_call.1} parent=47 // pred_region
          %3603 = vsyncadd %s3595, 0
          %s3604 = smul.addr %s21, 2
          %s3605 = smul.addr %s3604, 8
          %s3606 = scalar_lea.hbm %s7, %s3605
          %s3608 = sshll.u32 %s3598, 4
          %s3609 = int_to_ptr.vmem [resolvable:$true] %s3608
          %s3610 = sshll.u32 %s3606, 4
          %s3611 = int_to_ptr.hbm [resolvable:$true] %s3610
          %3613 = dma.vmem_to_hbm [thread:$0]  %s3609, 256, %s3611, %s3595
        $region52: #{tpu_custom_call.1} parent=47 // pred_fallthru
          _
      $region48: #{tpu_custom_call.1} parent=5 // pred_fallthru
        _
      %p3614 = scmp.le.s32.totalorder 2, %s16
      // Predicated region
      $region53: #{tpu_custom_call.1} parent=5 // pred_check
        %p3615 = pneg %p3614
      $region54: #{tpu_custom_call.1} parent=5 // pred_check_branch
        %3617 = sbr.rel (%p3615) target = $region56
      $region55: #{tpu_custom_call.1} parent=5 // pred_region
        %s3618 = ssub.s32 %s16, 2
        // Predicated region
        $region57: #{tpu_custom_call.1} parent=55 // pred_check
          %p3619 = pneg %p197
        $region58: #{tpu_custom_call.1} parent=55 // pred_check_branch
          %3621 = sbr.rel (%p3619) target = $region60
        $region59: #{tpu_custom_call.1} parent=55 // pred_region
          %s3622 = sand.u32 %s182, 1
          %s3623 = scalar_lea.sflag [#allocation4], %s3622
          %s3624 = sand.u32 %s182, 1
          %s3625 = smul.addr %s3624, 16
          %s3626 = scalar_lea.vmem [#allocation3], %s3625
          %3628 = dma.done %s3623, 256
        $region60: #{tpu_custom_call.1} parent=55 // pred_fallthru
          _
      $region56: #{tpu_custom_call.1} parent=5 // pred_fallthru
        _
    $region6: #{tpu_custom_call.1} parent=1 // loop_footer
      %s20 = sadd.s32 1, %s16
    $region7: #{tpu_custom_call.1} parent=1 // loop_footer_branch
      %15 = sbr.rel target = $region3
    $region8: #{tpu_custom_call.1} parent=1 // loop_exit
      _
    %3629 = vsyncpa [#allocation4], 1
    %s3630 = scalar_lea.sflag [#allocation4], 1
    %3631 = vsyncpa %s3630, 1

</llo_original>
